<compile_context>
chip_gen: v7x
topology: tpu7x:2x2x1
jax: 0.10.0
libtpu: 0.0.40
codegen_flags: <defaults>
</compile_context>

<pallas_src>
import functools

import jax
import jax.numpy as jnp
from jax import lax
from jax.experimental import pallas as pl
from jax.experimental.pallas import tpu as pltpu

VMEM_SPEC = pl.BlockSpec(memory_space=pltpu.MemorySpace.VMEM)
# Raise the scoped-VMEM cap so larger dst-row tiles fit; on v7x (64 MiB physical per TC)
# halve the tile target instead of raising this further.
VMEM_LIMIT_BYTES = 64 * 1024 * 1024


def _pick_tile(n, target=256):
    """Largest sublane-friendly dst-row tile <= target that divides n."""
    for t in (target, 256, 128, 64, 32, 16, 8):
        if t <= n and n % t == 0:
            return t
    return n


def _resident(shape):
    """Full-array block with a constant index map: kept resident across the grid."""
    nd = len(shape)
    return pl.BlockSpec(shape, lambda t: (0,) * nd)


# ------------------------------------------------------------------ GAT tile body
def _gat_tile(x_ref, adj_ref, projl_ref, projr_ref, watt_ref, batt_ref, *, num_heads, tm):
    """Mean-over-heads GATConv output for the current dst-row tile, f32 (tm, D)."""
    row0 = pl.multiple_of(pl.program_id(0) * tm, tm)
    x_all = x_ref[...]                                  # (N_src, F) bf16, resident
    x_dst = x_ref[pl.ds(row0, tm), :]                   # (tm, F) bf16, this tile's dst rows
    mask = adj_ref[...] > 0.5                           # hoisted out of the head loop
    neg = jnp.float32(-1e30)                            # softmax mask sentinel (f32 path)
    dn = (((1,), (1,)), ((), ()))                       # contract last dims: (m,k)x(n,k)->(m,n)

    # e_h[i, j] = er_h[i] + el_h[j]: both projections batched over heads (M = H).
    el_all = lax.dot_general(projl_ref[...], x_all, dn,
                             preferred_element_type=jnp.float32)         # (H, N_src)
    er_all = lax.dot_general(x_dst, projr_ref[...], dn,
                             preferred_element_type=jnp.float32)         # (tm, H)

    parts = []
    for h in range(num_heads):                          # static, tiny head count
        e = er_all[:, h:h + 1] + el_all[h:h + 1, :]     # free VPU broadcast add (tm, N_src)
        e = jnp.where(e > 0, e, 0.2 * e)                # LeakyReLU(negative_slope=0.2)
        s = jnp.where(mask, e, neg)
        m = jnp.max(s, axis=-1, keepdims=True)
        p = jnp.where(mask, jnp.exp(s - m), 0.0)
        denom = jnp.maximum(jnp.sum(p, axis=-1, keepdims=True), 1e-30)   # zero in-degree guard
        unnorm = jnp.dot(p.astype(jnp.bfloat16), x_all,
                         preferred_element_type=jnp.float32)             # (tm, F)
        # Normalise after the matmul: (tm, F) multiply instead of (tm, N_src).
        parts.append((unnorm * pl.reciprocal(denom, approx=True)).astype(jnp.bfloat16))

    # sum_h (alpha_h @ x) @ W_h  ==  [alpha_0@x | alpha_1@x | ...] @ [W_0; W_1; ...]
    slab = jnp.concatenate(parts, axis=-1)                               # (tm, H*F) lane-dense bf16
    out = jnp.dot(slab, watt_ref[...], preferred_element_type=jnp.float32)
    return out * (1.0 / num_heads) + batt_ref[...]      # mean over heads (+ mean per-head bias)


# ------------------------------------------------------------------ kernels
def _gat_kernel(x_ref, adj_ref, projl_ref, projr_ref, watt_ref, batt_ref, o_ref,
                *, num_heads, tm):
    y = _gat_tile(x_ref, adj_ref, projl_ref, projr_ref, watt_ref, batt_ref,
                  num_heads=num_heads, tm=tm)
    o_ref[...] = y.astype(o_ref.dtype)


def _gat_lstm_kernel(x_ref, adj_ref, projl_ref, projr_ref, watt_ref, batt_ref,
                     h_ref, c_ref, wl_ref, bl_ref, h_out_ref, c_out_ref,
                     *, num_heads, tm, hid):
    y = _gat_tile(x_ref, adj_ref, projl_ref, projr_ref, watt_ref, batt_ref,
                  num_heads=num_heads, tm=tm)                            # (tm, hid) f32
    # LSTM cell (seq_len = 1), single fused [x | h] @ [Wih; Whh] matmul (K = 2*hid)
    xin = jnp.concatenate([y.astype(jnp.bfloat16), h_ref[...].astype(jnp.bfloat16)], axis=-1)
    gates = jnp.dot(xin, wl_ref[...], preferred_element_type=jnp.float32) + bl_ref[...]
    i = jax.nn.sigmoid(gates[:, 0 * hid:1 * hid])       # PyTorch gate order: i, f, g, o
    f = jax.nn.sigmoid(gates[:, 1 * hid:2 * hid])
    g = jnp.tanh(gates[:, 2 * hid:3 * hid])
    o = jax.nn.sigmoid(gates[:, 3 * hid:4 * hid])
    c_new = f * c_ref[...] + i * g
    c_out_ref[...] = c_new
    h_out_ref[...] = o * jnp.tanh(c_new)


def _feat_kernel(x_ref, we_ref, be_ref, w1_ref, b1_ref, o_ref):
    e = jnp.dot(x_ref[...].astype(jnp.bfloat16), we_ref[...],
                preferred_element_type=jnp.float32) + be_ref[...]
    f = jnp.dot(e.astype(jnp.bfloat16), w1_ref[...],
                preferred_element_type=jnp.float32) + b1_ref[...]
    o_ref[...] = f.astype(o_ref.dtype)


def _predict_kernel(x_ref, w_ref, b_ref, o_ref):
    z = jnp.dot(x_ref[...].astype(jnp.bfloat16), w_ref[...],
                preferred_element_type=jnp.float32) + b_ref[...]
    o_ref[...] = jax.nn.sigmoid(z)


# ------------------------------------------------------------------ pallas_call wrappers
def _tiled_params():
    return pltpu.CompilerParams(dimension_semantics=("parallel",),
                                vmem_limit_bytes=VMEM_LIMIT_BYTES)


def _gat_in_specs(x, adj, layer, tm):
    n_src = adj.shape[1]
    return [
        _resident(x.shape),                              # src features: DMA'd once, resident
        pl.BlockSpec((tm, n_src), lambda t: (t, 0)),     # adjacency dst-row tile (bf16)
        _resident(layer['proj_l'].shape),
        _resident(layer['proj_r'].shape),
        _resident(layer['w_att'].shape),
        _resident(layer['b_att'].shape),
    ]


def gat_mean(x, adj, layer, *, num_heads, hid, tm):
    n_dst = adj.shape[0]
    kern = functools.partial(_gat_kernel, num_heads=num_heads, tm=tm)
    return pl.pallas_call(
        kern,
        out_shape=jax.ShapeDtypeStruct((n_dst, hid), jnp.bfloat16),
        grid_spec=pltpu.PrefetchScalarGridSpec(
            num_scalar_prefetch=0,
            grid=(n_dst // tm,),
            in_specs=_gat_in_specs(x, adj, layer, tm),
            out_specs=pl.BlockSpec((tm, hid), lambda t: (t, 0)),
        ),
        compiler_params=_tiled_params(),
    )(x, adj, layer['proj_l'], layer['proj_r'], layer['w_att'], layer['b_att'])


def gat_lstm(x, adj, layer, h, c, *, num_heads, hid, tm):
    n_dst = adj.shape[0]
    kern = functools.partial(_gat_lstm_kernel, num_heads=num_heads, tm=tm, hid=hid)
    in_specs = _gat_in_specs(x, adj, layer, tm) + [
        pl.BlockSpec((tm, hid), lambda t: (t, 0)),       # h tile
        pl.BlockSpec((tm, hid), lambda t: (t, 0)),       # c tile
        _resident(layer['w_lstm'].shape),
        _resident(layer['b_lstm'].shape),
    ]
    return pl.pallas_call(
        kern,
        out_shape=(jax.ShapeDtypeStruct((n_dst, hid), jnp.float32),
                   jax.ShapeDtypeStruct((n_dst, hid), jnp.float32)),
        grid_spec=pltpu.PrefetchScalarGridSpec(
            num_scalar_prefetch=0,
            grid=(n_dst // tm,),
            in_specs=in_specs,
            out_specs=(pl.BlockSpec((tm, hid), lambda t: (t, 0)),
                       pl.BlockSpec((tm, hid), lambda t: (t, 0))),
        ),
        compiler_params=_tiled_params(),
    )(x, adj, layer['proj_l'], layer['proj_r'], layer['w_att'], layer['b_att'],
      h, c, layer['w_lstm'], layer['b_lstm'])


def embed_linear1(x, we, be, w1, b1, *, hid, tm):
    n = x.shape[0]
    return pl.pallas_call(
        _feat_kernel,
        out_shape=jax.ShapeDtypeStruct((n, hid), jnp.bfloat16),
        grid_spec=pltpu.PrefetchScalarGridSpec(
            num_scalar_prefetch=0,
            grid=(n // tm,),
            in_specs=[pl.BlockSpec((tm, x.shape[1]), lambda t: (t, 0)),
                      _resident(we.shape), _resident(be.shape),
                      _resident(w1.shape), _resident(b1.shape)],
            out_specs=pl.BlockSpec((tm, hid), lambda t: (t, 0)),
        ),
        compiler_params=_tiled_params(),
    )(x, we, be, w1, b1)


def predict(x, w, b):
    n = x.shape[0]
    return pl.pallas_call(
        _predict_kernel,
        out_shape=jax.ShapeDtypeStruct((n, 1), jnp.float32),
        in_specs=[VMEM_SPEC] * 3,
        out_specs=VMEM_SPEC,
    )(x, w, b)


# ------------------------------------------------------------------ parameters & forward
def init_params(key, in_dim, hid_dim, num_layers, num_heads, embed_dim=32):
    keys = jax.random.split(key, 3 + num_layers)

    def dense(k, fan_in, fan_out):
        kw, kb = jax.random.split(k)
        w = jax.random.normal(kw, (fan_in, fan_out), jnp.float32) * 0.1
        b = jax.random.normal(kb, (1, fan_out), jnp.float32) * 0.1
        return w, b

    params = {}
    we, be = dense(keys[0], in_dim, embed_dim)
    w1, b1 = dense(keys[1], embed_dim, hid_dim)
    wp, bp = dense(keys[2], hid_dim, 1)
    params.update(embed_w=we.astype(jnp.bfloat16), embed_b=be,
                  lin1_w=w1.astype(jnp.bfloat16), lin1_b=b1,
                  pred_w=wp.astype(jnp.bfloat16), pred_b=bp)

    H, D = num_heads, hid_dim
    layers = []
    for i in range(num_layers):
        lk = jax.random.split(keys[3 + i], 6)
        gat_w = jax.random.normal(lk[0], (hid_dim, H * D), jnp.float32) * 0.1   # GAT fc (no bias)
        attn_l = jax.random.normal(lk[1], (H, D), jnp.float32) * 0.1
        attn_r = jax.random.normal(lk[2], (H, D), jnp.float32) * 0.1
        gat_b = jax.random.normal(lk[3], (H, D), jnp.float32) * 0.1             # per-head output bias
        wih = jax.random.normal(lk[4], (hid_dim, 4 * hid_dim), jnp.float32) * 0.1
        whh = jax.random.normal(lk[5], (hid_dim, 4 * hid_dim), jnp.float32) * 0.1
        lstm_b = jnp.zeros((1, 4 * hid_dim), jnp.float32)   # b_ih + b_hh combined

        # ---- pack into kernel-friendly, MXU(bf16)-ready tensors --------------
        w3 = gat_w.reshape(hid_dim, H, D)
        proj_l = jnp.einsum('fhd,hd->hf', w3, attn_l)        # el_h = x @ proj_l[h]
        proj_r = jnp.einsum('fhd,hd->hf', w3, attn_r)        # er_h = x @ proj_r[h]
        w_att = w3.transpose(1, 0, 2).reshape(H * hid_dim, D)  # [W_0; W_1; ...]
        b_att = jnp.mean(gat_b, axis=0, keepdims=True)        # mean-over-heads bias (1, D)
        w_lstm = jnp.concatenate([wih, whh], axis=0)          # [x | h] @ [Wih; Whh]
        layers.append(dict(
            proj_l=proj_l.astype(jnp.bfloat16),
            proj_r=proj_r.astype(jnp.bfloat16),
            w_att=w_att.astype(jnp.bfloat16),
            b_att=b_att,
            w_lstm=w_lstm.astype(jnp.bfloat16),
            b_lstm=lstm_b,
        ))
    params['layers'] = layers
    return params


def geniepath_forward(params, blocks, x, *, hid_dim, num_heads, tm=256):
    adj0, adj1 = blocks                                   # dense (N_dst, N_src) bf16 edge masks
    n = x.shape[0]
    tm = _pick_tile(n, tm)
    feats = embed_linear1(x, params['embed_w'], params['embed_b'],
                          params['lin1_w'], params['lin1_b'], hid=hid_dim, tm=tm)
    h = jnp.zeros((n, hid_dim), jnp.float32)
    c = jnp.zeros((n, hid_dim), jnp.float32)
    out = feats
    for lp in params['layers']:                           # every layer consumes `feats` (as in torch ref)
        y = gat_mean(feats, adj0, lp, num_heads=num_heads, hid=hid_dim, tm=tm)
        h, c = gat_lstm(y, adj1, lp, h, c, num_heads=num_heads, hid=hid_dim, tm=tm)
        out = h                                           # LSTM output (seq=1) == new hidden state
    return predict(out, params['pred_w'], params['pred_b'])


if __name__ == "__main__":
    # hid_dim = 128 keeps every stored slab lane-dense (multiple of 128 lanes).
    IN_DIM, HID, N_LAYERS, N_HEADS, N = 16, 128, 2, 2, 16

    key = jax.random.PRNGKey(0)
    kp, kx, ka0, ka1 = jax.random.split(key, 4)
    params = init_params(kp, IN_DIM, HID, N_LAYERS, N_HEADS)
    x = jax.random.normal(kx, (N, IN_DIM), jnp.float32)

    # synthetic DGL blocks as dense adjacency masks (bf16 stream dtype);
    # self-loops guarantee no zero in-degree dst nodes.
    eye = jnp.eye(N, dtype=jnp.float32)
    adj0 = jnp.maximum((jax.random.uniform(ka0, (N, N)) < 0.4).astype(jnp.float32), eye)
    adj1 = jnp.maximum((jax.random.uniform(ka1, (N, N)) < 0.4).astype(jnp.float32), eye)
    blocks = (adj0.astype(jnp.bfloat16), adj1.astype(jnp.bfloat16))

    # tm=8 forces a multi-step ("parallel") dst-row grid even at this toy N.
    fwd = jax.jit(functools.partial(geniepath_forward,
                                    hid_dim=HID, num_heads=N_HEADS, tm=8))
    out = jax.block_until_ready(fwd(params, blocks, x))
    assert out.shape == (N, 1) and bool(jnp.all(jnp.isfinite(out)))
    print("KERNEL_OK")
</pallas_src>

<mosaic_0001>
module attributes {stable_mosaic.version = 11 : i64} {
  func.func @_gat_lstm_kernel(%arg0: i32, %arg1: memref<16x128xbf16, #tpu.memory_space<vmem>>, %arg2: memref<8x16xbf16, #tpu.memory_space<vmem>>, %arg3: memref<2x128xbf16, #tpu.memory_space<vmem>>, %arg4: memref<2x128xbf16, #tpu.memory_space<vmem>>, %arg5: memref<256x128xbf16, #tpu.memory_space<vmem>>, %arg6: memref<1x128xf32, #tpu.memory_space<vmem>>, %arg7: memref<8x128xf32, #tpu.memory_space<vmem>>, %arg8: memref<8x128xf32, #tpu.memory_space<vmem>>, %arg9: memref<256x512xbf16, #tpu.memory_space<vmem>>, %arg10: memref<1x512xf32, #tpu.memory_space<vmem>>, %arg11: memref<8x128xf32, #tpu.memory_space<vmem>>, %arg12: memref<8x128xf32, #tpu.memory_space<vmem>>) attributes {dimension_semantics = [#tpu.dimension_semantics<parallel>], iteration_bounds = array<i64: 2>, scalar_prefetch = 0 : i64, scratch_operands = 0 : i64, tpu.core_type = #tpu.core_type<tc>, window_params = [{pipeline_mode = #tpu.pipeline_mode<synchronous>, transform_indices = @transform_0, window_bounds = array<i64: 16, 128>}, {transform_indices = @transform_1, window_bounds = array<i64: 8, 16>}, {pipeline_mode = #tpu.pipeline_mode<synchronous>, transform_indices = @transform_2, window_bounds = array<i64: 2, 128>}, {pipeline_mode = #tpu.pipeline_mode<synchronous>, transform_indices = @transform_3, window_bounds = array<i64: 2, 128>}, {pipeline_mode = #tpu.pipeline_mode<synchronous>, transform_indices = @transform_4, window_bounds = array<i64: 256, 128>}, {pipeline_mode = #tpu.pipeline_mode<synchronous>, transform_indices = @transform_5, window_bounds = array<i64: 1, 128>}, {transform_indices = @transform_6, window_bounds = array<i64: 8, 128>}, {transform_indices = @transform_7, window_bounds = array<i64: 8, 128>}, {pipeline_mode = #tpu.pipeline_mode<synchronous>, transform_indices = @transform_8, window_bounds = array<i64: 256, 512>}, {pipeline_mode = #tpu.pipeline_mode<synchronous>, transform_indices = @transform_9, window_bounds = array<i64: 1, 512>}, {transform_indices = @transform_10, window_bounds = array<i64: 8, 128>}, {transform_indices = @transform_11, window_bounds = array<i64: 8, 128>}]} {
    %c8_i32 = arith.constant 8 : i32
    %0 = arith.muli %arg0, %c8_i32 : i32
    %1 = tpu.assume_multiple %0, 8 : i32
    %c0 = arith.constant 0 : index
    %c0_0 = arith.constant 0 : index
    %2 = vector.load %arg1[%c0, %c0_0] : memref<16x128xbf16, #tpu.memory_space<vmem>>, vector<16x128xbf16>
    %3 = arith.index_cast %1 : i32 to index
    %c0_1 = arith.constant 0 : index
    %4 = vector.load %arg1[%3, %c0_1] : memref<16x128xbf16, #tpu.memory_space<vmem>>, vector<8x128xbf16>
    %c0_2 = arith.constant 0 : index
    %c0_3 = arith.constant 0 : index
    %5 = vector.load %arg2[%c0_2, %c0_3] : memref<8x16xbf16, #tpu.memory_space<vmem>>, vector<8x16xbf16>
    %cst = arith.constant 5.000000e-01 : bf16
    %6 = vector.broadcast %cst : bf16 to vector<8x16xbf16>
    %7 = arith.cmpf ogt, %5, %6 : vector<8x16xbf16>
    %c0_4 = arith.constant 0 : index
    %c0_5 = arith.constant 0 : index
    %8 = vector.load %arg3[%c0_4, %c0_5] : memref<2x128xbf16, #tpu.memory_space<vmem>>, vector<2x128xbf16>
    %cst_6 = arith.constant dense<0.000000e+00> : vector<2x16xf32>
    %9 = tpu.matmul %8, %2, %cst_6 {dimension_numbers = #tpu.dot_dimension_numbers<[1], [1], [0], [0], [0, 0, 1, 0], [], []>} : vector<2x128xbf16>, vector<16x128xbf16>, vector<2x16xf32> -> vector<2x16xf32>
    %c0_7 = arith.constant 0 : index
    %c0_8 = arith.constant 0 : index
    %10 = vector.load %arg4[%c0_7, %c0_8] : memref<2x128xbf16, #tpu.memory_space<vmem>>, vector<2x128xbf16>
    %cst_9 = arith.constant dense<0.000000e+00> : vector<8x2xf32>
    %11 = tpu.matmul %4, %10, %cst_9 {dimension_numbers = #tpu.dot_dimension_numbers<[1], [1], [0], [0], [0, 0, 1, 0], [], []>} : vector<8x128xbf16>, vector<2x128xbf16>, vector<8x2xf32> -> vector<8x2xf32>
    %12 = vector.extract_strided_slice %11 {offsets = [0, 0], sizes = [8, 1], strides = [1, 1]} : vector<8x2xf32> to vector<8x1xf32>
    %13 = vector.extract_strided_slice %9 {offsets = [0, 0], sizes = [1, 16], strides = [1, 1]} : vector<2x16xf32> to vector<1x16xf32>
    %14 = vector.broadcast %12 : vector<8x1xf32> to vector<8x16xf32>
    %15 = vector.broadcast %13 : vector<1x16xf32> to vector<8x16xf32>
    %16 = arith.addf %14, %15 : vector<8x16xf32>
    %cst_10 = arith.constant 0.000000e+00 : f32
    %17 = vector.broadcast %cst_10 : f32 to vector<8x16xf32>
    %18 = arith.cmpf ogt, %16, %17 : vector<8x16xf32>
    %cst_11 = arith.constant 2.000000e-01 : f32
    %19 = vector.broadcast %cst_11 : f32 to vector<8x16xf32>
    %20 = arith.mulf %19, %16 : vector<8x16xf32>
    %21 = arith.select %18, %16, %20 : vector<8x16xi1>, vector<8x16xf32>
    %cst_12 = arith.constant -1.000000e+30 : f32
    %22 = vector.broadcast %cst_12 : f32 to vector<8x16xf32>
    %23 = arith.select %7, %21, %22 : vector<8x16xi1>, vector<8x16xf32>
    %cst_13 = arith.constant dense<0xFF800000> : vector<8xf32>
    %24 = vector.multi_reduction <maximumf>, %23, %cst_13 [1] : vector<8x16xf32> to vector<8xf32>
    %25 = vector.shape_cast %24 : vector<8xf32> to vector<8x1xf32>
    %26 = vector.broadcast %25 : vector<8x1xf32> to vector<8x16xf32>
    %27 = arith.subf %23, %26 : vector<8x16xf32>
    %28 = math.exp %27 : vector<8x16xf32>
    %cst_14 = arith.constant 0.000000e+00 : f32
    %29 = vector.broadcast %cst_14 : f32 to vector<8x16xf32>
    %30 = arith.select %7, %28, %29 : vector<8x16xi1>, vector<8x16xf32>
    %cst_15 = arith.constant dense<0.000000e+00> : vector<8xf32>
    %31 = vector.multi_reduction <add>, %30, %cst_15 [1] : vector<8x16xf32> to vector<8xf32>
    %32 = vector.shape_cast %31 : vector<8xf32> to vector<8x1xf32>
    %cst_16 = arith.constant 1.000000e-30 : f32
    %33 = vector.broadcast %cst_16 : f32 to vector<8x1xf32>
    %34 = arith.maximumf %32, %33 : vector<8x1xf32>
    %35 = arith.truncf %30 : vector<8x16xf32> to vector<8x16xbf16>
    %cst_17 = arith.constant dense<0.000000e+00> : vector<8x128xf32>
    %36 = tpu.matmul %35, %2, %cst_17 {dimension_numbers = #tpu.dot_dimension_numbers<[1], [0], [0], [1], [0, 0, 1, 1], [], []>} : vector<8x16xbf16>, vector<16x128xbf16>, vector<8x128xf32> -> vector<8x128xf32>
    %37 = tpu.reciprocal %34 {approx = true} : vector<8x1xf32> -> vector<8x1xf32>
    %38 = vector.broadcast %37 : vector<8x1xf32> to vector<8x128xf32>
    %39 = arith.mulf %36, %38 : vector<8x128xf32>
    %40 = arith.truncf %39 : vector<8x128xf32> to vector<8x128xbf16>
    %41 = vector.extract_strided_slice %11 {offsets = [0, 1], sizes = [8, 1], strides = [1, 1]} : vector<8x2xf32> to vector<8x1xf32>
    %42 = vector.extract_strided_slice %9 {offsets = [1, 0], sizes = [1, 16], strides = [1, 1]} : vector<2x16xf32> to vector<1x16xf32>
    %43 = vector.broadcast %41 : vector<8x1xf32> to vector<8x16xf32>
    %44 = vector.broadcast %42 : vector<1x16xf32> to vector<8x16xf32>
    %45 = arith.addf %43, %44 : vector<8x16xf32>
    %cst_18 = arith.constant 0.000000e+00 : f32
    %46 = vector.broadcast %cst_18 : f32 to vector<8x16xf32>
    %47 = arith.cmpf ogt, %45, %46 : vector<8x16xf32>
    %cst_19 = arith.constant 2.000000e-01 : f32
    %48 = vector.broadcast %cst_19 : f32 to vector<8x16xf32>
    %49 = arith.mulf %48, %45 : vector<8x16xf32>
    %50 = arith.select %47, %45, %49 : vector<8x16xi1>, vector<8x16xf32>
    %cst_20 = arith.constant -1.000000e+30 : f32
    %51 = vector.broadcast %cst_20 : f32 to vector<8x16xf32>
    %52 = arith.select %7, %50, %51 : vector<8x16xi1>, vector<8x16xf32>
    %cst_21 = arith.constant dense<0xFF800000> : vector<8xf32>
    %53 = vector.multi_reduction <maximumf>, %52, %cst_21 [1] : vector<8x16xf32> to vector<8xf32>
    %54 = vector.shape_cast %53 : vector<8xf32> to vector<8x1xf32>
    %55 = vector.broadcast %54 : vector<8x1xf32> to vector<8x16xf32>
    %56 = arith.subf %52, %55 : vector<8x16xf32>
    %57 = math.exp %56 : vector<8x16xf32>
    %cst_22 = arith.constant 0.000000e+00 : f32
    %58 = vector.broadcast %cst_22 : f32 to vector<8x16xf32>
    %59 = arith.select %7, %57, %58 : vector<8x16xi1>, vector<8x16xf32>
    %cst_23 = arith.constant dense<0.000000e+00> : vector<8xf32>
    %60 = vector.multi_reduction <add>, %59, %cst_23 [1] : vector<8x16xf32> to vector<8xf32>
    %61 = vector.shape_cast %60 : vector<8xf32> to vector<8x1xf32>
    %cst_24 = arith.constant 1.000000e-30 : f32
    %62 = vector.broadcast %cst_24 : f32 to vector<8x1xf32>
    %63 = arith.maximumf %61, %62 : vector<8x1xf32>
    %64 = arith.truncf %59 : vector<8x16xf32> to vector<8x16xbf16>
    %cst_25 = arith.constant dense<0.000000e+00> : vector<8x128xf32>
    %65 = tpu.matmul %64, %2, %cst_25 {dimension_numbers = #tpu.dot_dimension_numbers<[1], [0], [0], [1], [0, 0, 1, 1], [], []>} : vector<8x16xbf16>, vector<16x128xbf16>, vector<8x128xf32> -> vector<8x128xf32>
    %66 = tpu.reciprocal %63 {approx = true} : vector<8x1xf32> -> vector<8x1xf32>
    %67 = vector.broadcast %66 : vector<8x1xf32> to vector<8x128xf32>
    %68 = arith.mulf %65, %67 : vector<8x128xf32>
    %69 = arith.truncf %68 : vector<8x128xf32> to vector<8x128xbf16>
    %70 = tpu.concatenate %40, %69 in 1 : vector<8x128xbf16>, vector<8x128xbf16> -> vector<8x256xbf16>
    %c0_26 = arith.constant 0 : index
    %c0_27 = arith.constant 0 : index
    %71 = vector.load %arg5[%c0_26, %c0_27] : memref<256x128xbf16, #tpu.memory_space<vmem>>, vector<256x128xbf16>
    %cst_28 = arith.constant dense<0.000000e+00> : vector<8x128xf32>
    %72 = tpu.matmul %70, %71, %cst_28 {dimension_numbers = #tpu.dot_dimension_numbers<[1], [0], [0], [1], [0, 0, 1, 1], [], []>} : vector<8x256xbf16>, vector<256x128xbf16>, vector<8x128xf32> -> vector<8x128xf32>
    %cst_29 = arith.constant 5.000000e-01 : f32
    %73 = vector.broadcast %cst_29 : f32 to vector<8x128xf32>
    %74 = arith.mulf %72, %73 : vector<8x128xf32>
    %c0_30 = arith.constant 0 : index
    %c0_31 = arith.constant 0 : index
    %75 = vector.load %arg6[%c0_30, %c0_31] : memref<1x128xf32, #tpu.memory_space<vmem>>, vector<1x128xf32>
    %76 = vector.broadcast %75 : vector<1x128xf32> to vector<8x128xf32>
    %77 = arith.addf %74, %76 : vector<8x128xf32>
    %78 = arith.truncf %77 : vector<8x128xf32> to vector<8x128xbf16>
    %c0_32 = arith.constant 0 : index
    %c0_33 = arith.constant 0 : index
    %79 = vector.load %arg7[%c0_32, %c0_33] : memref<8x128xf32, #tpu.memory_space<vmem>>, vector<8x128xf32>
    %80 = arith.truncf %79 : vector<8x128xf32> to vector<8x128xbf16>
    %81 = tpu.concatenate %78, %80 in 1 : vector<8x128xbf16>, vector<8x128xbf16> -> vector<8x256xbf16>
    %c0_34 = arith.constant 0 : index
    %c0_35 = arith.constant 0 : index
    %82 = vector.load %arg9[%c0_34, %c0_35] : memref<256x512xbf16, #tpu.memory_space<vmem>>, vector<256x512xbf16>
    %cst_36 = arith.constant dense<0.000000e+00> : vector<8x512xf32>
    %83 = tpu.matmul %81, %82, %cst_36 {dimension_numbers = #tpu.dot_dimension_numbers<[1], [0], [0], [1], [0, 0, 1, 1], [], []>} : vector<8x256xbf16>, vector<256x512xbf16>, vector<8x512xf32> -> vector<8x512xf32>
    %c0_37 = arith.constant 0 : index
    %c0_38 = arith.constant 0 : index
    %84 = vector.load %arg10[%c0_37, %c0_38] : memref<1x512xf32, #tpu.memory_space<vmem>>, vector<1x512xf32>
    %85 = vector.broadcast %84 : vector<1x512xf32> to vector<8x512xf32>
    %86 = arith.addf %83, %85 : vector<8x512xf32>
    %87 = vector.extract_strided_slice %86 {offsets = [0, 0], sizes = [8, 128], strides = [1, 1]} : vector<8x512xf32> to vector<8x128xf32>
    %88 = arith.negf %87 : vector<8x128xf32>
    %89 = math.exp %88 : vector<8x128xf32>
    %cst_39 = arith.constant 1.000000e+00 : f32
    %90 = vector.broadcast %cst_39 : f32 to vector<8x128xf32>
    %91 = arith.addf %90, %89 : vector<8x128xf32>
    %92 = arith.divf %90, %91 : vector<8x128xf32>
    %93 = vector.extract_strided_slice %86 {offsets = [0, 128], sizes = [8, 128], strides = [1, 1]} : vector<8x512xf32> to vector<8x128xf32>
    %94 = arith.negf %93 : vector<8x128xf32>
    %95 = math.exp %94 : vector<8x128xf32>
    %cst_40 = arith.constant 1.000000e+00 : f32
    %96 = vector.broadcast %cst_40 : f32 to vector<8x128xf32>
    %97 = arith.addf %96, %95 : vector<8x128xf32>
    %98 = arith.divf %96, %97 : vector<8x128xf32>
    %99 = vector.extract_strided_slice %86 {offsets = [0, 256], sizes = [8, 128], strides = [1, 1]} : vector<8x512xf32> to vector<8x128xf32>
    %100 = math.tanh %99 : vector<8x128xf32>
    %101 = vector.extract_strided_slice %86 {offsets = [0, 384], sizes = [8, 128], strides = [1, 1]} : vector<8x512xf32> to vector<8x128xf32>
    %102 = arith.negf %101 : vector<8x128xf32>
    %103 = math.exp %102 : vector<8x128xf32>
    %cst_41 = arith.constant 1.000000e+00 : f32
    %104 = vector.broadcast %cst_41 : f32 to vector<8x128xf32>
    %105 = arith.addf %104, %103 : vector<8x128xf32>
    %106 = arith.divf %104, %105 : vector<8x128xf32>
    %c0_42 = arith.constant 0 : index
    %c0_43 = arith.constant 0 : index
    %107 = vector.load %arg8[%c0_42, %c0_43] : memref<8x128xf32, #tpu.memory_space<vmem>>, vector<8x128xf32>
    %108 = arith.mulf %98, %107 : vector<8x128xf32>
    %109 = arith.mulf %92, %100 : vector<8x128xf32>
    %110 = arith.addf %108, %109 : vector<8x128xf32>
    %c0_44 = arith.constant 0 : index
    %c0_45 = arith.constant 0 : index
    %111 = vector.load %arg12[%c0_44, %c0_45] : memref<8x128xf32, #tpu.memory_space<vmem>>, vector<8x128xf32>
    tpu.vector_store %arg12[%c0_44, %c0_45], %110 {strides = array<i32>} : memref<8x128xf32, #tpu.memory_space<vmem>>, vector<8x128xf32>,
    %112 = math.tanh %110 : vector<8x128xf32>
    %113 = arith.mulf %106, %112 : vector<8x128xf32>
    %c0_46 = arith.constant 0 : index
    %c0_47 = arith.constant 0 : index
    %114 = vector.load %arg11[%c0_46, %c0_47] : memref<8x128xf32, #tpu.memory_space<vmem>>, vector<8x128xf32>
    tpu.vector_store %arg11[%c0_46, %c0_47], %113 {strides = array<i32>} : memref<8x128xf32, #tpu.memory_space<vmem>>, vector<8x128xf32>,
    return
  }
  func.func @transform_0(%arg0: i32) -> (i32, i32) {
    %c0_i32 = arith.constant 0 : i32
    %c0_i32_0 = arith.constant 0 : i32
    %c0_i32_1 = arith.constant 0 : i32
    return %c0_i32, %c0_i32_0 : i32, i32
  }
  func.func @transform_1(%arg0: i32) -> (i32, i32) {
    %c0_i32 = arith.constant 0 : i32
    %c0_i32_0 = arith.constant 0 : i32
    return %arg0, %c0_i32 : i32, i32
  }
  func.func @transform_2(%arg0: i32) -> (i32, i32) {
    %c0_i32 = arith.constant 0 : i32
    %c0_i32_0 = arith.constant 0 : i32
    %c0_i32_1 = arith.constant 0 : i32
    return %c0_i32, %c0_i32_0 : i32, i32
  }
  func.func @transform_3(%arg0: i32) -> (i32, i32) {
    %c0_i32 = arith.constant 0 : i32
    %c0_i32_0 = arith.constant 0 : i32
    %c0_i32_1 = arith.constant 0 : i32
    return %c0_i32, %c0_i32_0 : i32, i32
  }
  func.func @transform_4(%arg0: i32) -> (i32, i32) {
    %c0_i32 = arith.constant 0 : i32
    %c0_i32_0 = arith.constant 0 : i32
    %c0_i32_1 = arith.constant 0 : i32
    return %c0_i32, %c0_i32_0 : i32, i32
  }
  func.func @transform_5(%arg0: i32) -> (i32, i32) {
    %c0_i32 = arith.constant 0 : i32
    %c0_i32_0 = arith.constant 0 : i32
    %c0_i32_1 = arith.constant 0 : i32
    return %c0_i32, %c0_i32_0 : i32, i32
  }
  func.func @transform_6(%arg0: i32) -> (i32, i32) {
    %c0_i32 = arith.constant 0 : i32
    %c0_i32_0 = arith.constant 0 : i32
    return %arg0, %c0_i32 : i32, i32
  }
  func.func @transform_7(%arg0: i32) -> (i32, i32) {
    %c0_i32 = arith.constant 0 : i32
    %c0_i32_0 = arith.constant 0 : i32
    return %arg0, %c0_i32 : i32, i32
  }
  func.func @transform_8(%arg0: i32) -> (i32, i32) {
    %c0_i32 = arith.constant 0 : i32
    %c0_i32_0 = arith.constant 0 : i32
    %c0_i32_1 = arith.constant 0 : i32
    return %c0_i32, %c0_i32_0 : i32, i32
  }
  func.func @transform_9(%arg0: i32) -> (i32, i32) {
    %c0_i32 = arith.constant 0 : i32
    %c0_i32_0 = arith.constant 0 : i32
    %c0_i32_1 = arith.constant 0 : i32
    return %c0_i32, %c0_i32_0 : i32, i32
  }
  func.func @transform_10(%arg0: i32) -> (i32, i32) {
    %c0_i32 = arith.constant 0 : i32
    %c0_i32_0 = arith.constant 0 : i32
    return %arg0, %c0_i32 : i32, i32
  }
  func.func @transform_11(%arg0: i32) -> (i32, i32) {
    %c0_i32 = arith.constant 0 : i32
    %c0_i32_0 = arith.constant 0 : i32
    return %arg0, %c0_i32 : i32, i32
  }
}

module attributes {stable_mosaic.version = 11 : i64} {
  func.func @_feat_kernel(%arg0: i32, %arg1: memref<8x16xf32, #tpu.memory_space<vmem>>, %arg2: memref<16x32xbf16, #tpu.memory_space<vmem>>, %arg3: memref<1x32xf32, #tpu.memory_space<vmem>>, %arg4: memref<32x128xbf16, #tpu.memory_space<vmem>>, %arg5: memref<1x128xf32, #tpu.memory_space<vmem>>, %arg6: memref<8x128xbf16, #tpu.memory_space<vmem>>) attributes {dimension_semantics = [#tpu.dimension_semantics<parallel>], iteration_bounds = array<i64: 2>, scalar_prefetch = 0 : i64, scratch_operands = 0 : i64, tpu.core_type = #tpu.core_type<tc>, window_params = [{transform_indices = @transform_0, window_bounds = array<i64: 8, 16>}, {pipeline_mode = #tpu.pipeline_mode<synchronous>, transform_indices = @transform_1, window_bounds = array<i64: 16, 32>}, {pipeline_mode = #tpu.pipeline_mode<synchronous>, transform_indices = @transform_2, window_bounds = array<i64: 1, 32>}, {pipeline_mode = #tpu.pipeline_mode<synchronous>, transform_indices = @transform_3, window_bounds = array<i64: 32, 128>}, {pipeline_mode = #tpu.pipeline_mode<synchronous>, transform_indices = @transform_4, window_bounds = array<i64: 1, 128>}, {transform_indices = @transform_5, window_bounds = array<i64: 8, 128>}]} {
    %c0 = arith.constant 0 : index
    %c0_0 = arith.constant 0 : index
    %0 = vector.load %arg1[%c0, %c0_0] : memref<8x16xf32, #tpu.memory_space<vmem>>, vector<8x16xf32>
    %1 = arith.truncf %0 : vector<8x16xf32> to vector<8x16xbf16>
    %c0_1 = arith.constant 0 : index
    %c0_2 = arith.constant 0 : index
    %2 = vector.load %arg2[%c0_1, %c0_2] : memref<16x32xbf16, #tpu.memory_space<vmem>>, vector<16x32xbf16>
    %cst = arith.constant dense<0.000000e+00> : vector<8x32xf32>
    %3 = tpu.matmul %1, %2, %cst {dimension_numbers = #tpu.dot_dimension_numbers<[1], [0], [0], [1], [0, 0, 1, 1], [], []>} : vector<8x16xbf16>, vector<16x32xbf16>, vector<8x32xf32> -> vector<8x32xf32>
    %c0_3 = arith.constant 0 : index
    %c0_4 = arith.constant 0 : index
    %4 = vector.load %arg3[%c0_3, %c0_4] : memref<1x32xf32, #tpu.memory_space<vmem>>, vector<1x32xf32>
    %5 = vector.broadcast %4 : vector<1x32xf32> to vector<8x32xf32>
    %6 = arith.addf %3, %5 : vector<8x32xf32>
    %7 = arith.truncf %6 : vector<8x32xf32> to vector<8x32xbf16>
    %c0_5 = arith.constant 0 : index
    %c0_6 = arith.constant 0 : index
    %8 = vector.load %arg4[%c0_5, %c0_6] : memref<32x128xbf16, #tpu.memory_space<vmem>>, vector<32x128xbf16>
    %cst_7 = arith.constant dense<0.000000e+00> : vector<8x128xf32>
    %9 = tpu.matmul %7, %8, %cst_7 {dimension_numbers = #tpu.dot_dimension_numbers<[1], [0], [0], [1], [0, 0, 1, 1], [], []>} : vector<8x32xbf16>, vector<32x128xbf16>, vector<8x128xf32> -> vector<8x128xf32>
    %c0_8 = arith.constant 0 : index
    %c0_9 = arith.constant 0 : index
    %10 = vector.load %arg5[%c0_8, %c0_9] : memref<1x128xf32, #tpu.memory_space<vmem>>, vector<1x128xf32>
    %11 = vector.broadcast %10 : vector<1x128xf32> to vector<8x128xf32>
    %12 = arith.addf %9, %11 : vector<8x128xf32>
    %13 = arith.truncf %12 : vector<8x128xf32> to vector<8x128xbf16>
    %c0_10 = arith.constant 0 : index
    %c0_11 = arith.constant 0 : index
    %14 = vector.load %arg6[%c0_10, %c0_11] : memref<8x128xbf16, #tpu.memory_space<vmem>>, vector<8x128xbf16>
    tpu.vector_store %arg6[%c0_10, %c0_11], %13 {strides = array<i32>} : memref<8x128xbf16, #tpu.memory_space<vmem>>, vector<8x128xbf16>,
    return
  }
  func.func @transform_0(%arg0: i32) -> (i32, i32) {
    %c0_i32 = arith.constant 0 : i32
    %c0_i32_0 = arith.constant 0 : i32
    return %arg0, %c0_i32 : i32, i32
  }
  func.func @transform_1(%arg0: i32) -> (i32, i32) {
    %c0_i32 = arith.constant 0 : i32
    %c0_i32_0 = arith.constant 0 : i32
    %c0_i32_1 = arith.constant 0 : i32
    return %c0_i32, %c0_i32_0 : i32, i32
  }
  func.func @transform_2(%arg0: i32) -> (i32, i32) {
    %c0_i32 = arith.constant 0 : i32
    %c0_i32_0 = arith.constant 0 : i32
    %c0_i32_1 = arith.constant 0 : i32
    return %c0_i32, %c0_i32_0 : i32, i32
  }
  func.func @transform_3(%arg0: i32) -> (i32, i32) {
    %c0_i32 = arith.constant 0 : i32
    %c0_i32_0 = arith.constant 0 : i32
    %c0_i32_1 = arith.constant 0 : i32
    return %c0_i32, %c0_i32_0 : i32, i32
  }
  func.func @transform_4(%arg0: i32) -> (i32, i32) {
    %c0_i32 = arith.constant 0 : i32
    %c0_i32_0 = arith.constant 0 : i32
    %c0_i32_1 = arith.constant 0 : i32
    return %c0_i32, %c0_i32_0 : i32, i32
  }
  func.func @transform_5(%arg0: i32) -> (i32, i32) {
    %c0_i32 = arith.constant 0 : i32
    %c0_i32_0 = arith.constant 0 : i32
    return %arg0, %c0_i32 : i32, i32
  }
}

module attributes {stable_mosaic.version = 11 : i64} {
  func.func @_gat_kernel(%arg0: i32, %arg1: memref<16x128xbf16, #tpu.memory_space<vmem>>, %arg2: memref<8x16xbf16, #tpu.memory_space<vmem>>, %arg3: memref<2x128xbf16, #tpu.memory_space<vmem>>, %arg4: memref<2x128xbf16, #tpu.memory_space<vmem>>, %arg5: memref<256x128xbf16, #tpu.memory_space<vmem>>, %arg6: memref<1x128xf32, #tpu.memory_space<vmem>>, %arg7: memref<8x128xbf16, #tpu.memory_space<vmem>>) attributes {dimension_semantics = [#tpu.dimension_semantics<parallel>], iteration_bounds = array<i64: 2>, scalar_prefetch = 0 : i64, scratch_operands = 0 : i64, tpu.core_type = #tpu.core_type<tc>, window_params = [{pipeline_mode = #tpu.pipeline_mode<synchronous>, transform_indices = @transform_0, window_bounds = array<i64: 16, 128>}, {transform_indices = @transform_1, window_bounds = array<i64: 8, 16>}, {pipeline_mode = #tpu.pipeline_mode<synchronous>, transform_indices = @transform_2, window_bounds = array<i64: 2, 128>}, {pipeline_mode = #tpu.pipeline_mode<synchronous>, transform_indices = @transform_3, window_bounds = array<i64: 2, 128>}, {pipeline_mode = #tpu.pipeline_mode<synchronous>, transform_indices = @transform_4, window_bounds = array<i64: 256, 128>}, {pipeline_mode = #tpu.pipeline_mode<synchronous>, transform_indices = @transform_5, window_bounds = array<i64: 1, 128>}, {transform_indices = @transform_6, window_bounds = array<i64: 8, 128>}]} {
    %c8_i32 = arith.constant 8 : i32
    %0 = arith.muli %arg0, %c8_i32 : i32
    %1 = tpu.assume_multiple %0, 8 : i32
    %c0 = arith.constant 0 : index
    %c0_0 = arith.constant 0 : index
    %2 = vector.load %arg1[%c0, %c0_0] : memref<16x128xbf16, #tpu.memory_space<vmem>>, vector<16x128xbf16>
    %3 = arith.index_cast %1 : i32 to index
    %c0_1 = arith.constant 0 : index
    %4 = vector.load %arg1[%3, %c0_1] : memref<16x128xbf16, #tpu.memory_space<vmem>>, vector<8x128xbf16>
    %c0_2 = arith.constant 0 : index
    %c0_3 = arith.constant 0 : index
    %5 = vector.load %arg2[%c0_2, %c0_3] : memref<8x16xbf16, #tpu.memory_space<vmem>>, vector<8x16xbf16>
    %cst = arith.constant 5.000000e-01 : bf16
    %6 = vector.broadcast %cst : bf16 to vector<8x16xbf16>
    %7 = arith.cmpf ogt, %5, %6 : vector<8x16xbf16>
    %c0_4 = arith.constant 0 : index
    %c0_5 = arith.constant 0 : index
    %8 = vector.load %arg3[%c0_4, %c0_5] : memref<2x128xbf16, #tpu.memory_space<vmem>>, vector<2x128xbf16>
    %cst_6 = arith.constant dense<0.000000e+00> : vector<2x16xf32>
    %9 = tpu.matmul %8, %2, %cst_6 {dimension_numbers = #tpu.dot_dimension_numbers<[1], [1], [0], [0], [0, 0, 1, 0], [], []>} : vector<2x128xbf16>, vector<16x128xbf16>, vector<2x16xf32> -> vector<2x16xf32>
    %c0_7 = arith.constant 0 : index
    %c0_8 = arith.constant 0 : index
    %10 = vector.load %arg4[%c0_7, %c0_8] : memref<2x128xbf16, #tpu.memory_space<vmem>>, vector<2x128xbf16>
    %cst_9 = arith.constant dense<0.000000e+00> : vector<8x2xf32>
    %11 = tpu.matmul %4, %10, %cst_9 {dimension_numbers = #tpu.dot_dimension_numbers<[1], [1], [0], [0], [0, 0, 1, 0], [], []>} : vector<8x128xbf16>, vector<2x128xbf16>, vector<8x2xf32> -> vector<8x2xf32>
    %12 = vector.extract_strided_slice %11 {offsets = [0, 0], sizes = [8, 1], strides = [1, 1]} : vector<8x2xf32> to vector<8x1xf32>
    %13 = vector.extract_strided_slice %9 {offsets = [0, 0], sizes = [1, 16], strides = [1, 1]} : vector<2x16xf32> to vector<1x16xf32>
    %14 = vector.broadcast %12 : vector<8x1xf32> to vector<8x16xf32>
    %15 = vector.broadcast %13 : vector<1x16xf32> to vector<8x16xf32>
    %16 = arith.addf %14, %15 : vector<8x16xf32>
    %cst_10 = arith.constant 0.000000e+00 : f32
    %17 = vector.broadcast %cst_10 : f32 to vector<8x16xf32>
    %18 = arith.cmpf ogt, %16, %17 : vector<8x16xf32>
    %cst_11 = arith.constant 2.000000e-01 : f32
    %19 = vector.broadcast %cst_11 : f32 to vector<8x16xf32>
    %20 = arith.mulf %19, %16 : vector<8x16xf32>
    %21 = arith.select %18, %16, %20 : vector<8x16xi1>, vector<8x16xf32>
    %cst_12 = arith.constant -1.000000e+30 : f32
    %22 = vector.broadcast %cst_12 : f32 to vector<8x16xf32>
    %23 = arith.select %7, %21, %22 : vector<8x16xi1>, vector<8x16xf32>
    %cst_13 = arith.constant dense<0xFF800000> : vector<8xf32>
    %24 = vector.multi_reduction <maximumf>, %23, %cst_13 [1] : vector<8x16xf32> to vector<8xf32>
    %25 = vector.shape_cast %24 : vector<8xf32> to vector<8x1xf32>
    %26 = vector.broadcast %25 : vector<8x1xf32> to vector<8x16xf32>
    %27 = arith.subf %23, %26 : vector<8x16xf32>
    %28 = math.exp %27 : vector<8x16xf32>
    %cst_14 = arith.constant 0.000000e+00 : f32
    %29 = vector.broadcast %cst_14 : f32 to vector<8x16xf32>
    %30 = arith.select %7, %28, %29 : vector<8x16xi1>, vector<8x16xf32>
    %cst_15 = arith.constant dense<0.000000e+00> : vector<8xf32>
    %31 = vector.multi_reduction <add>, %30, %cst_15 [1] : vector<8x16xf32> to vector<8xf32>
    %32 = vector.shape_cast %31 : vector<8xf32> to vector<8x1xf32>
    %cst_16 = arith.constant 1.000000e-30 : f32
    %33 = vector.broadcast %cst_16 : f32 to vector<8x1xf32>
    %34 = arith.maximumf %32, %33 : vector<8x1xf32>
    %35 = arith.truncf %30 : vector<8x16xf32> to vector<8x16xbf16>
    %cst_17 = arith.constant dense<0.000000e+00> : vector<8x128xf32>
    %36 = tpu.matmul %35, %2, %cst_17 {dimension_numbers = #tpu.dot_dimension_numbers<[1], [0], [0], [1], [0, 0, 1, 1], [], []>} : vector<8x16xbf16>, vector<16x128xbf16>, vector<8x128xf32> -> vector<8x128xf32>
    %37 = tpu.reciprocal %34 {approx = true} : vector<8x1xf32> -> vector<8x1xf32>
    %38 = vector.broadcast %37 : vector<8x1xf32> to vector<8x128xf32>
    %39 = arith.mulf %36, %38 : vector<8x128xf32>
    %40 = arith.truncf %39 : vector<8x128xf32> to vector<8x128xbf16>
    %41 = vector.extract_strided_slice %11 {offsets = [0, 1], sizes = [8, 1], strides = [1, 1]} : vector<8x2xf32> to vector<8x1xf32>
    %42 = vector.extract_strided_slice %9 {offsets = [1, 0], sizes = [1, 16], strides = [1, 1]} : vector<2x16xf32> to vector<1x16xf32>
    %43 = vector.broadcast %41 : vector<8x1xf32> to vector<8x16xf32>
    %44 = vector.broadcast %42 : vector<1x16xf32> to vector<8x16xf32>
    %45 = arith.addf %43, %44 : vector<8x16xf32>
    %cst_18 = arith.constant 0.000000e+00 : f32
    %46 = vector.broadcast %cst_18 : f32 to vector<8x16xf32>
    %47 = arith.cmpf ogt, %45, %46 : vector<8x16xf32>
    %cst_19 = arith.constant 2.000000e-01 : f32
    %48 = vector.broadcast %cst_19 : f32 to vector<8x16xf32>
    %49 = arith.mulf %48, %45 : vector<8x16xf32>
    %50 = arith.select %47, %45, %49 : vector<8x16xi1>, vector<8x16xf32>
    %cst_20 = arith.constant -1.000000e+30 : f32
    %51 = vector.broadcast %cst_20 : f32 to vector<8x16xf32>
    %52 = arith.select %7, %50, %51 : vector<8x16xi1>, vector<8x16xf32>
    %cst_21 = arith.constant dense<0xFF800000> : vector<8xf32>
    %53 = vector.multi_reduction <maximumf>, %52, %cst_21 [1] : vector<8x16xf32> to vector<8xf32>
    %54 = vector.shape_cast %53 : vector<8xf32> to vector<8x1xf32>
    %55 = vector.broadcast %54 : vector<8x1xf32> to vector<8x16xf32>
    %56 = arith.subf %52, %55 : vector<8x16xf32>
    %57 = math.exp %56 : vector<8x16xf32>
    %cst_22 = arith.constant 0.000000e+00 : f32
    %58 = vector.broadcast %cst_22 : f32 to vector<8x16xf32>
    %59 = arith.select %7, %57, %58 : vector<8x16xi1>, vector<8x16xf32>
    %cst_23 = arith.constant dense<0.000000e+00> : vector<8xf32>
    %60 = vector.multi_reduction <add>, %59, %cst_23 [1] : vector<8x16xf32> to vector<8xf32>
    %61 = vector.shape_cast %60 : vector<8xf32> to vector<8x1xf32>
    %cst_24 = arith.constant 1.000000e-30 : f32
    %62 = vector.broadcast %cst_24 : f32 to vector<8x1xf32>
    %63 = arith.maximumf %61, %62 : vector<8x1xf32>
    %64 = arith.truncf %59 : vector<8x16xf32> to vector<8x16xbf16>
    %cst_25 = arith.constant dense<0.000000e+00> : vector<8x128xf32>
    %65 = tpu.matmul %64, %2, %cst_25 {dimension_numbers = #tpu.dot_dimension_numbers<[1], [0], [0], [1], [0, 0, 1, 1], [], []>} : vector<8x16xbf16>, vector<16x128xbf16>, vector<8x128xf32> -> vector<8x128xf32>
    %66 = tpu.reciprocal %63 {approx = true} : vector<8x1xf32> -> vector<8x1xf32>
    %67 = vector.broadcast %66 : vector<8x1xf32> to vector<8x128xf32>
    %68 = arith.mulf %65, %67 : vector<8x128xf32>
    %69 = arith.truncf %68 : vector<8x128xf32> to vector<8x128xbf16>
    %70 = tpu.concatenate %40, %69 in 1 : vector<8x128xbf16>, vector<8x128xbf16> -> vector<8x256xbf16>
    %c0_26 = arith.constant 0 : index
    %c0_27 = arith.constant 0 : index
    %71 = vector.load %arg5[%c0_26, %c0_27] : memref<256x128xbf16, #tpu.memory_space<vmem>>, vector<256x128xbf16>
    %cst_28 = arith.constant dense<0.000000e+00> : vector<8x128xf32>
    %72 = tpu.matmul %70, %71, %cst_28 {dimension_numbers = #tpu.dot_dimension_numbers<[1], [0], [0], [1], [0, 0, 1, 1], [], []>} : vector<8x256xbf16>, vector<256x128xbf16>, vector<8x128xf32> -> vector<8x128xf32>
    %cst_29 = arith.constant 5.000000e-01 : f32
    %73 = vector.broadcast %cst_29 : f32 to vector<8x128xf32>
    %74 = arith.mulf %72, %73 : vector<8x128xf32>
    %c0_30 = arith.constant 0 : index
    %c0_31 = arith.constant 0 : index
    %75 = vector.load %arg6[%c0_30, %c0_31] : memref<1x128xf32, #tpu.memory_space<vmem>>, vector<1x128xf32>
    %76 = vector.broadcast %75 : vector<1x128xf32> to vector<8x128xf32>
    %77 = arith.addf %74, %76 : vector<8x128xf32>
    %78 = arith.truncf %77 : vector<8x128xf32> to vector<8x128xbf16>
    %c0_32 = arith.constant 0 : index
    %c0_33 = arith.constant 0 : index
    %79 = vector.load %arg7[%c0_32, %c0_33] : memref<8x128xbf16, #tpu.memory_space<vmem>>, vector<8x128xbf16>
    tpu.vector_store %arg7[%c0_32, %c0_33], %78 {strides = array<i32>} : memref<8x128xbf16, #tpu.memory_space<vmem>>, vector<8x128xbf16>,
    return
  }
  func.func @transform_0(%arg0: i32) -> (i32, i32) {
    %c0_i32 = arith.constant 0 : i32
    %c0_i32_0 = arith.constant 0 : i32
    %c0_i32_1 = arith.constant 0 : i32
    return %c0_i32, %c0_i32_0 : i32, i32
  }
  func.func @transform_1(%arg0: i32) -> (i32, i32) {
    %c0_i32 = arith.constant 0 : i32
    %c0_i32_0 = arith.constant 0 : i32
    return %arg0, %c0_i32 : i32, i32
  }
  func.func @transform_2(%arg0: i32) -> (i32, i32) {
    %c0_i32 = arith.constant 0 : i32
    %c0_i32_0 = arith.constant 0 : i32
    %c0_i32_1 = arith.constant 0 : i32
    return %c0_i32, %c0_i32_0 : i32, i32
  }
  func.func @transform_3(%arg0: i32) -> (i32, i32) {
    %c0_i32 = arith.constant 0 : i32
    %c0_i32_0 = arith.constant 0 : i32
    %c0_i32_1 = arith.constant 0 : i32
    return %c0_i32, %c0_i32_0 : i32, i32
  }
  func.func @transform_4(%arg0: i32) -> (i32, i32) {
    %c0_i32 = arith.constant 0 : i32
    %c0_i32_0 = arith.constant 0 : i32
    %c0_i32_1 = arith.constant 0 : i32
    return %c0_i32, %c0_i32_0 : i32, i32
  }
  func.func @transform_5(%arg0: i32) -> (i32, i32) {
    %c0_i32 = arith.constant 0 : i32
    %c0_i32_0 = arith.constant 0 : i32
    %c0_i32_1 = arith.constant 0 : i32
    return %c0_i32, %c0_i32_0 : i32, i32
  }
  func.func @transform_6(%arg0: i32) -> (i32, i32) {
    %c0_i32 = arith.constant 0 : i32
    %c0_i32_0 = arith.constant 0 : i32
    return %arg0, %c0_i32 : i32, i32
  }
}

module attributes {stable_mosaic.version = 11 : i64} {
  func.func @_predict_kernel(%arg0: memref<16x128xf32, #tpu.memory_space<vmem>>, %arg1: memref<128x1xbf16, #tpu.memory_space<vmem>>, %arg2: memref<1x1xf32, #tpu.memory_space<vmem>>, %arg3: memref<16x1xf32, #tpu.memory_space<vmem>>) attributes {dimension_semantics = [], scalar_prefetch = 0 : i64, scratch_operands = 0 : i64, tpu.core_type = #tpu.core_type<tc>} {
    %c0 = arith.constant 0 : index
    %c0_0 = arith.constant 0 : index
    %0 = vector.load %arg0[%c0, %c0_0] : memref<16x128xf32, #tpu.memory_space<vmem>>, vector<16x128xf32>
    %1 = arith.truncf %0 : vector<16x128xf32> to vector<16x128xbf16>
    %c0_1 = arith.constant 0 : index
    %c0_2 = arith.constant 0 : index
    %2 = vector.load %arg1[%c0_1, %c0_2] : memref<128x1xbf16, #tpu.memory_space<vmem>>, vector<128x1xbf16>
    %cst = arith.constant dense<0.000000e+00> : vector<16x1xf32>
    %3 = tpu.matmul %1, %2, %cst {dimension_numbers = #tpu.dot_dimension_numbers<[1], [0], [0], [1], [0, 0, 1, 1], [], []>} : vector<16x128xbf16>, vector<128x1xbf16>, vector<16x1xf32> -> vector<16x1xf32>
    %c0_3 = arith.constant 0 : index
    %c0_4 = arith.constant 0 : index
    %4 = vector.load %arg2[%c0_3, %c0_4] : memref<1x1xf32, #tpu.memory_space<vmem>>, vector<1x1xf32>
    %5 = vector.broadcast %4 : vector<1x1xf32> to vector<16x1xf32>
    %6 = arith.addf %3, %5 : vector<16x1xf32>
    %7 = arith.negf %6 : vector<16x1xf32>
    %8 = math.exp %7 : vector<16x1xf32>
    %cst_5 = arith.constant 1.000000e+00 : f32
    %9 = vector.broadcast %cst_5 : f32 to vector<16x1xf32>
    %10 = arith.addf %9, %8 : vector<16x1xf32>
    %11 = arith.divf %9, %10 : vector<16x1xf32>
    %c0_6 = arith.constant 0 : index
    %c0_7 = arith.constant 0 : index
    %12 = vector.load %arg3[%c0_6, %c0_7] : memref<16x1xf32, #tpu.memory_space<vmem>>, vector<16x1xf32>
    tpu.vector_store %arg3[%c0_6, %c0_7], %11 {strides = array<i32>} : memref<16x1xf32, #tpu.memory_space<vmem>>, vector<16x1xf32>,
    return
  }
}

</mosaic_0001>

<llo_original>
// kernel: geniepath_forward.6
$region0: #{geniepath_forward.6}
  #allocation0 [shape = 'u32[]', space=smem, size = 0x4, offset = 0x4, fixed_abs, tag = 'smem constant byte address 0x4 - core index']
  #allocation1 [shape = 'u32[144,128]{1,0:T(1,128)}', space=vmem, size = 0x12000, scoped, tag = 'internal scratch']
  %s0 = inlined_call_operand.hbm [shape: f32[16,16], index: 0, kind: input, shape index: {}]
  %s1 = inlined_call_operand.hbm [shape: bf16[16,32], index: 1, kind: input, shape index: {}]
  %s2 = inlined_call_operand.hbm [shape: f32[1,32], index: 2, kind: input, shape index: {}]
  %s3 = inlined_call_operand.hbm [shape: bf16[32,128], index: 3, kind: input, shape index: {}]
  %s4 = inlined_call_operand.hbm [shape: f32[1,128], index: 4, kind: input, shape index: {}]
  %s5 = inlined_call_operand.hbm [shape: bf16[16,128], index: 5, kind: output, shape index: {}]
  %s6 = sld [smem:[#allocation0]]
  $region73: #{geniepath_forward.6} parent=0
    _
  %s8 = ssub.s32 1, %s6
  %s9 = scalar_select 0, %s8, %s6
  $region1: #{geniepath_forward.6} parent=0
    #allocation2 [shape = 'u8[8192]{0}', space=vmem, size = 0x2000, scoped, tag = 'input window, operand 0']
    #allocation3 [shape = 's32[2]{0}', space=sflag, size = 0x8, scoped, tag = 'scoped memory for geniepath_forward.6']
    #allocation4 [shape = 's32[2]{0}', space=sflag, size = 0x8, scoped, tag = 'scoped memory for geniepath_forward.6']
    #allocation5 [shape = 'u8[4096]{0}', space=vmem, size = 0x1000, scoped, tag = 'input window, operand 1, single buffered']
    #allocation6 [shape = 's32[1]{0}', space=sflag, size = 0x4, scoped, tag = 'scoped memory for geniepath_forward.6']
    #allocation7 [shape = 'u8[512]{0}', space=vmem, size = 0x400, scoped, tag = 'input window, operand 2, single buffered']
    #allocation8 [shape = 'u8[8192]{0}', space=vmem, size = 0x2000, scoped, tag = 'input window, operand 3, single buffered']
    #allocation9 [shape = 's32[1]{0}', space=sflag, size = 0x4, scoped, tag = 'scoped memory for geniepath_forward.6']
    #allocation10 [shape = 'u8[512]{0}', space=vmem, size = 0x400, scoped, tag = 'input window, operand 4, single buffered']
    #allocation11 [shape = 'u8[4096]{0}', space=vmem, size = 0x1000, scoped, tag = 'output window, operand 0']
    %10 = vsyncpa [#allocation3], 0
    %s11 = scalar_lea.sflag [#allocation3], 1
    %12 = vsyncpa %s11, 0
    %13 = vsyncpa [#allocation6], 0
    %14 = vsyncpa [#allocation9], 0
    %15 = vsyncpa [#allocation4], 0
    %s16 = scalar_lea.sflag [#allocation4], 1
    %17 = vsyncpa %s16, 0
    loop: start=0, step=1, limit=4
    $region2: #{geniepath_forward.6} parent=1 // loop_pre_header
      _
    $region3: #{geniepath_forward.6} parent=1 // loop_header
      %s19 = sphi 0, %s23
      %p20 = scmp.ge.s32.totalorder %s19, 4
      %s29 = sphi 0, %s31
      %s32 = sphi 0, %s29
      %s33 = sphi 0, %s32
      %s49 = sphi 0, %s33
      %s53 = sphi 0, %s53
      %s55 = sphi 0, %s53
      %s56 = sphi 0, %s55
      %s70 = sphi 0, %s56
      %s74 = sphi 0, %s74
      %s76 = sphi 0, %s74
      %s77 = sphi 0, %s76
      %s91 = sphi 0, %s77
      %s95 = sphi 0, %s95
      %s97 = sphi 0, %s95
      %s98 = sphi 0, %s97
      %s112 = sphi 0, %s98
      %s116 = sphi 0, %s116
      %s118 = sphi 0, %s116
      %s119 = sphi 0, %s118
      %s133 = sphi 0, %s119
      %s139 = sphi 0, %s141
      %s142 = sphi 0, %s139
      %s143 = sphi 0, %s142
      %s159 = sphi 0, %s143
    $region4: #{geniepath_forward.6} parent=1 // loop_header_branch
      %22 = sbr.rel (%p20) target = $region8
    $region5: #{geniepath_forward.6} parent=1 // loop_body
      %s24 = ssub.s32 %s19, 1
      %s25 = ssub.s32 %s19, 2
      %s26 = sadd.s32 %s19, 1
      %s27 = ssub.s32 %s19, %s26
      %p28 = scmp.eq.s32.totalorder %s27, 0
      %s30 = sadd.s32 %s29, 1
      %s31 = scalar_select %p28, %s29, %s30
      %p34 = pneg %p28
      %p35 = scmp.eq.s32.totalorder %s19, 1
      %p36 = por %p34, %p35
      %p37 = scmp.ne.s32.totalorder %s29, %s32
      %p38 = scmp.eq.s32.totalorder %s19, 0
      %p39 = por %p37, %p38
      %p40 = scmp.ne.s32.totalorder %s29, %s32
      %p41 = scmp.eq.s32.totalorder %s24, 1
      %p42 = por %p40, %p41
      %p43 = scmp.ne.s32.totalorder %s32, %s33
      %p44 = scmp.eq.s32.totalorder %s24, 0
      %p45 = por %p43, %p44
      %p46 = scmp.ne.s32.totalorder %s32, %s33
      %p47 = scmp.eq.s32.totalorder %s25, 1
      %p48 = por %p46, %p47
      %p50 = scmp.ne.s32.totalorder %s33, %s49
      %p51 = scmp.eq.s32.totalorder %s25, 0
      %p52 = por %p50, %p51
      %s54 = sadd.s32 %s53, 1
      %p57 = scmp.eq.s32.totalorder %s19, 1
      %p58 = scmp.ne.s32.totalorder %s53, %s55
      %p59 = scmp.eq.s32.totalorder %s19, 0
      %p60 = por %p58, %p59
      %p61 = scmp.ne.s32.totalorder %s53, %s55
      %p62 = scmp.eq.s32.totalorder %s24, 1
      %p63 = por %p61, %p62
      %p64 = scmp.ne.s32.totalorder %s55, %s56
      %p65 = scmp.eq.s32.totalorder %s24, 0
      %p66 = por %p64, %p65
      %p67 = scmp.ne.s32.totalorder %s55, %s56
      %p68 = scmp.eq.s32.totalorder %s25, 1
      %p69 = por %p67, %p68
      %p71 = scmp.ne.s32.totalorder %s56, %s70
      %p72 = scmp.eq.s32.totalorder %s25, 0
      %p73 = por %p71, %p72
      %s75 = sadd.s32 %s74, 1
      %p78 = scmp.eq.s32.totalorder %s19, 1
      %p79 = scmp.ne.s32.totalorder %s74, %s76
      %p80 = scmp.eq.s32.totalorder %s19, 0
      %p81 = por %p79, %p80
      %p82 = scmp.ne.s32.totalorder %s74, %s76
      %p83 = scmp.eq.s32.totalorder %s24, 1
      %p84 = por %p82, %p83
      %p85 = scmp.ne.s32.totalorder %s76, %s77
      %p86 = scmp.eq.s32.totalorder %s24, 0
      %p87 = por %p85, %p86
      %p88 = scmp.ne.s32.totalorder %s76, %s77
      %p89 = scmp.eq.s32.totalorder %s25, 1
      %p90 = por %p88, %p89
      %p92 = scmp.ne.s32.totalorder %s77, %s91
      %p93 = scmp.eq.s32.totalorder %s25, 0
      %p94 = por %p92, %p93
      %s96 = sadd.s32 %s95, 1
      %p99 = scmp.eq.s32.totalorder %s19, 1
      %p100 = scmp.ne.s32.totalorder %s95, %s97
      %p101 = scmp.eq.s32.totalorder %s19, 0
      %p102 = por %p100, %p101
      %p103 = scmp.ne.s32.totalorder %s95, %s97
      %p104 = scmp.eq.s32.totalorder %s24, 1
      %p105 = por %p103, %p104
      %p106 = scmp.ne.s32.totalorder %s97, %s98
      %p107 = scmp.eq.s32.totalorder %s24, 0
      %p108 = por %p106, %p107
      %p109 = scmp.ne.s32.totalorder %s97, %s98
      %p110 = scmp.eq.s32.totalorder %s25, 1
      %p111 = por %p109, %p110
      %p113 = scmp.ne.s32.totalorder %s98, %s112
      %p114 = scmp.eq.s32.totalorder %s25, 0
      %p115 = por %p113, %p114
      %s117 = sadd.s32 %s116, 1
      %p120 = scmp.eq.s32.totalorder %s19, 1
      %p121 = scmp.ne.s32.totalorder %s116, %s118
      %p122 = scmp.eq.s32.totalorder %s19, 0
      %p123 = por %p121, %p122
      %p124 = scmp.ne.s32.totalorder %s116, %s118
      %p125 = scmp.eq.s32.totalorder %s24, 1
      %p126 = por %p124, %p125
      %p127 = scmp.ne.s32.totalorder %s118, %s119
      %p128 = scmp.eq.s32.totalorder %s24, 0
      %p129 = por %p127, %p128
      %p130 = scmp.ne.s32.totalorder %s118, %s119
      %p131 = scmp.eq.s32.totalorder %s25, 1
      %p132 = por %p130, %p131
      %p134 = scmp.ne.s32.totalorder %s119, %s133
      %p135 = scmp.eq.s32.totalorder %s25, 0
      %p136 = por %p134, %p135
      %s137 = ssub.s32 %s19, %s26
      %p138 = scmp.eq.s32.totalorder %s137, 0
      %s140 = sadd.s32 %s139, 1
      %s141 = scalar_select %p138, %s139, %s140
      %p144 = pneg %p138
      %p145 = scmp.eq.s32.totalorder %s19, 1
      %p146 = por %p144, %p145
      %p147 = scmp.ne.s32.totalorder %s139, %s142
      %p148 = scmp.eq.s32.totalorder %s19, 0
      %p149 = por %p147, %p148
      %p150 = scmp.ne.s32.totalorder %s139, %s142
      %p151 = scmp.eq.s32.totalorder %s24, 1
      %p152 = por %p150, %p151
      %p153 = scmp.ne.s32.totalorder %s142, %s143
      %p154 = scmp.eq.s32.totalorder %s24, 0
      %p155 = por %p153, %p154
      %p156 = scmp.ne.s32.totalorder %s142, %s143
      %p157 = scmp.eq.s32.totalorder %s25, 1
      %p158 = por %p156, %p157
      %p160 = scmp.ne.s32.totalorder %s143, %s159
      %p161 = scmp.eq.s32.totalorder %s25, 0
      %p162 = por %p160, %p161
      %p163 = scmp.le.s32.totalorder 1, %s19
      %p164 = scmp.lt.s32.totalorder %s19, 3
      %p165 = pnand %p163, %p164
      %p166 = pneg %p165
      // Predicated region
      $region9: #{geniepath_forward.6} parent=5 // pred_check
        _
      $region10: #{geniepath_forward.6} parent=5 // pred_check_branch
        %168 = sbr.rel (%p165) target = $region12
      $region11: #{geniepath_forward.6} parent=5 // pred_region
        %s169 = ssub.s32 %s19, 1
        // Predicated region
        $region13: #{geniepath_forward.6} parent=11 // pred_check
          %p170 = pneg %p66
        $region14: #{geniepath_forward.6} parent=11 // pred_check_branch
          %172 = sbr.rel (%p170) target = $region16
        $region15: #{geniepath_forward.6} parent=11 // pred_region
          %s174 = ssub.s32 128, 128
          %175 = vsyncadd [#allocation6], %s174
          %s176 = sshll.u32 [#allocation5], 4
          %s177 = int_to_ptr.vmem [resolvable:$true] %s176
          %182 = dma.hbm_to_vmem [thread:$0]  %s1, 128, %s177, [#allocation6], 64, 64, 4
        $region16: #{geniepath_forward.6} parent=11 // pred_fallthru
          _
        // Predicated region
        $region17: #{geniepath_forward.6} parent=11 // pred_check
          %p183 = pneg %p87
        $region18: #{geniepath_forward.6} parent=11 // pred_check_branch
          %185 = sbr.rel (%p183) target = $region20
        $region19: #{geniepath_forward.6} parent=11 // pred_region
          %s187 = ssub.s32 16, 16
          %188 = vsyncadd [#allocation6], %s187
          %s190 = sshll.u32 [#allocation7], 4
          %s191 = int_to_ptr.vmem [resolvable:$true] %s190
          %193 = dma.hbm_to_vmem [thread:$0]  %s2, 16, %s191, [#allocation6]
        $region20: #{geniepath_forward.6} parent=11 // pred_fallthru
          _
        // Predicated region
        $region21: #{geniepath_forward.6} parent=11 // pred_check
          %p194 = pneg %p108
        $region22: #{geniepath_forward.6} parent=11 // pred_check_branch
          %196 = sbr.rel (%p194) target = $region24
        $region23: #{geniepath_forward.6} parent=11 // pred_region
          %s198 = ssub.s32 256, 256
          %199 = vsyncadd [#allocation9], %s198
          %s200 = sshll.u32 [#allocation8], 4
          %s201 = int_to_ptr.vmem [resolvable:$true] %s200
          %206 = dma.hbm_to_vmem [thread:$0]  %s3, 256, %s201, [#allocation9], 64, 64, 4
        $region24: #{geniepath_forward.6} parent=11 // pred_fallthru
          _
        // Predicated region
        $region25: #{geniepath_forward.6} parent=11 // pred_check
          %p207 = pneg %p129
        $region26: #{geniepath_forward.6} parent=11 // pred_check_branch
          %209 = sbr.rel (%p207) target = $region28
        $region27: #{geniepath_forward.6} parent=11 // pred_region
          %s211 = ssub.s32 16, 16
          %212 = vsyncadd [#allocation9], %s211
          %s214 = sshll.u32 [#allocation10], 4
          %s215 = int_to_ptr.vmem [resolvable:$true] %s214
          %217 = dma.hbm_to_vmem [thread:$0]  %s4, 16, %s215, [#allocation9]
        $region28: #{geniepath_forward.6} parent=11 // pred_fallthru
          _
      $region12: #{geniepath_forward.6} parent=5 // pred_fallthru
        _
      %p218 = scmp.lt.s32.totalorder %s19, 2
      // Predicated region
      $region29: #{geniepath_forward.6} parent=5 // pred_check
        %p219 = pneg %p218
      $region30: #{geniepath_forward.6} parent=5 // pred_check_branch
        %221 = sbr.rel (%p219) target = $region32
      $region31: #{geniepath_forward.6} parent=5 // pred_region
        // Predicated region
        $region33: #{geniepath_forward.6} parent=31 // pred_check
          %p222 = pneg %p39
        $region34: #{geniepath_forward.6} parent=31 // pred_check_branch
          %224 = sbr.rel (%p222) target = $region36
        $region35: #{geniepath_forward.6} parent=31 // pred_region
          %s225 = sand.u32 %s29, 1
          %s226 = scalar_lea.sflag [#allocation3], %s225
          %s227 = sand.u32 %s29, 1
          %s228 = smul.addr %s227, 8
          %s229 = scalar_lea.vmem [#allocation2], %s228
          %s231 = ssub.s32 128, 128
          %232 = vsyncadd %s226, %s231
          %s233 = smul.addr %s19, 128
          %s234 = scalar_lea.hbm %s0, %s233
          %s236 = sshll.u32 %s229, 4
          %s237 = int_to_ptr.vmem [resolvable:$true] %s236
          %239 = dma.hbm_to_vmem [thread:$0]  %s234, 128, %s237, %s226
        $region36: #{geniepath_forward.6} parent=31 // pred_fallthru
          _
      $region32: #{geniepath_forward.6} parent=5 // pred_fallthru
        _
      %p240 = scmp.le.s32.totalorder 1, %s19
      %p241 = scmp.lt.s32.totalorder %s19, 3
      %p242 = pnand %p240, %p241
      %p243 = pneg %p242
      // Predicated region
      $region37: #{geniepath_forward.6} parent=5 // pred_check
        _
      $region38: #{geniepath_forward.6} parent=5 // pred_check_branch
        %245 = sbr.rel (%p242) target = $region40
      $region39: #{geniepath_forward.6} parent=5 // pred_region
        %s246 = ssub.s32 %s19, 1
        %s247 = sand.u32 %s32, 1
        %s248 = scalar_lea.sflag [#allocation3], %s247
        %s249 = sand.u32 %s32, 1
        %s250 = smul.addr %s249, 8
        %s251 = scalar_lea.vmem [#allocation2], %s250
        // Predicated region
        $region41: #{geniepath_forward.6} parent=39 // pred_check
          %p252 = pneg %p45
        $region42: #{geniepath_forward.6} parent=39 // pred_check_branch
          %254 = sbr.rel (%p252) target = $region44
        $region43: #{geniepath_forward.6} parent=39 // pred_region
          %255 = dma.done %s248, 128
        $region44: #{geniepath_forward.6} parent=39 // pred_fallthru
          _
        // Predicated region
        $region45: #{geniepath_forward.6} parent=39 // pred_check
          %p256 = pneg %p66
        $region46: #{geniepath_forward.6} parent=39 // pred_check_branch
          %258 = sbr.rel (%p256) target = $region48
        $region47: #{geniepath_forward.6} parent=39 // pred_region
          %259 = dma.done [#allocation6], 128
        $region48: #{geniepath_forward.6} parent=39 // pred_fallthru
          _
        // Predicated region
        $region49: #{geniepath_forward.6} parent=39 // pred_check
          %p260 = pneg %p87
        $region50: #{geniepath_forward.6} parent=39 // pred_check_branch
          %262 = sbr.rel (%p260) target = $region52
        $region51: #{geniepath_forward.6} parent=39 // pred_region
          %263 = dma.done [#allocation6], 16
        $region52: #{geniepath_forward.6} parent=39 // pred_fallthru
          _
        // Predicated region
        $region53: #{geniepath_forward.6} parent=39 // pred_check
          %p264 = pneg %p108
        $region54: #{geniepath_forward.6} parent=39 // pred_check_branch
          %266 = sbr.rel (%p264) target = $region56
        $region55: #{geniepath_forward.6} parent=39 // pred_region
          %267 = dma.done [#allocation9], 256
        $region56: #{geniepath_forward.6} parent=39 // pred_fallthru
          _
        // Predicated region
        $region57: #{geniepath_forward.6} parent=39 // pred_check
          %p268 = pneg %p129
        $region58: #{geniepath_forward.6} parent=39 // pred_check_branch
          %270 = sbr.rel (%p268) target = $region60
        $region59: #{geniepath_forward.6} parent=39 // pred_region
          %271 = dma.done [#allocation9], 16
        $region60: #{geniepath_forward.6} parent=39 // pred_fallthru
          _
        %s272 = sand.u32 %s32, 1
        %s273 = scalar_lea.sflag [#allocation3], %s272
        %s274 = sand.u32 %s32, 1
        %s275 = smul.addr %s274, 8
        %s276 = scalar_lea.vmem [#allocation2], %s275
        %p277 = pneg %p45
        %p278 = pneg %p42
        %p279 = pneg %p66
        %p280 = pneg %p63
        %p281 = pneg %p87
        %p282 = pneg %p84
        %p283 = pneg %p108
        %p284 = pneg %p105
        %p285 = pneg %p129
        %p286 = pneg %p126
        %p287 = pneg %p155
        %p288 = pneg %p152
        %s289 = sand.u32 %s142, 1
        %s290 = scalar_lea.sflag [#allocation4], %s289
        %s291 = sand.u32 %s142, 1
        %s292 = smul.addr %s291, 4
        %s293 = scalar_lea.vmem [#allocation11], %s292
        %v295 = vld [vmem:[%s251] sm:$0xff]
        %v296 = vpack.c.bf16 %v295, %v295
        %v297 = vld [vmem:[#allocation5] sm:$0xf]
        %v298 = vld [vmem:[#allocation5 + $0x4] sm:$0xf]
        %v299 = vld [vmem:[#allocation7] sm:$0x1]
        %v301 = vlaneseq
        %v302 = vshrl.u32 %v301, 7
        %v303 = vsub.s32 0, %v302
        %v304 = vrot.slane %v299, %v303
        %v308 = vunpack.c.l.b16 %v297
        %v309 = vunpack.c.l.b16 %v298
        %v310 = vpack.c.b16 %v309, %v308
        %vm312 = vcmask 130048
        %v314 = vsel %vm312, %v296, 0
        %316 = vmatprep.subr.bf16.mxu0 0
        %317 = vmatpush1.bf16.msra.mxu0 %v310
        %318 = vmatprep.subr.bf16.mxu0 0
        %319 = vmatpush1.bf16.msra.mxu0 0
        %320 = vmatprep.subr.bf16.mxu0 0
        %321 = vmatpush1.bf16.msra.mxu0 0
        %322 = vmatprep.subr.bf16.mxu0 0
        %323 = vmatpush1.bf16.msra.mxu0 0
        %324 = vmatprep.subr.bf16.mxu0 0
        %325 = vmatpush1.bf16.msra.mxu0 0
        %326 = vmatprep.subr.bf16.mxu0 0
        %327 = vmatpush1.bf16.msra.mxu0 0
        %328 = vmatprep.subr.bf16.mxu0 0
        %329 = vmatpush1.bf16.msra.mxu0 0
        %330 = vmatprep.subr.bf16.mxu0 0
        %331 = vmatpush1.bf16.msra.mxu0 0
        %332 = vmatprep.subr.bf16.mxu0 0
        %333 = vmatpush1.bf16.msra.mxu0 0
        %334 = vmatprep.subr.bf16.mxu0 0
        %335 = vmatpush1.bf16.msra.mxu0 0
        %336 = vmatprep.subr.bf16.mxu0 0
        %337 = vmatpush1.bf16.msra.mxu0 0
        %338 = vmatprep.subr.bf16.mxu0 0
        %339 = vmatpush1.bf16.msra.mxu0 0
        %340 = vmatprep.subr.bf16.mxu0 0
        %341 = vmatpush1.bf16.msra.mxu0 0
        %342 = vmatprep.subr.bf16.mxu0 0
        %343 = vmatpush1.bf16.msra.mxu0 0
        %344 = vmatprep.subr.bf16.mxu0 0
        %345 = vmatpush1.bf16.msra.mxu0 0
        %346 = vmatprep.subr.bf16.mxu0 0
        %347 = vmatpush1.bf16.msra.mxu0 0
        %348 = vmatprep.mubr.bf16.mxu0 0
        %349 = vmatmul.mubr.bf16.gmra.mrb[0].mxu0 %v314
        %v350 = vpop.f32.mrb[0].mxu0
        %v351 = vadd.f32 %v304, %v350
        %v352 = vpop.f32.mrb[0].mxu0
        %v353 = vpop.f32.mrb[0].mxu0
        %v354 = vpop.f32.mrb[0].mxu0
        %355 = vdwg.mxu0
        %v356 = vpack.c.bf16 %v351, %v351
        %v357 = vld [vmem:[#allocation8] sm:$0xf]
        %v358 = vld [vmem:[#allocation8 + $0x4] sm:$0xf]
        %v359 = vld [vmem:[#allocation8 + $0x8] sm:$0xf]
        %v360 = vld [vmem:[#allocation8 + $0xc] sm:$0xf]
        %v361 = vld [vmem:[#allocation10] sm:$0x1]
        %v363 = vlaneseq
        %v364 = vshrl.u32 %v363, 7
        %v365 = vsub.s32 0, %v364
        %v366 = vrot.slane %v361, %v365
        %v372 = vunpack.c.l.b16 %v357
        %v373 = vunpack.c.l.b16 %v358
        %v374 = vunpack.c.l.b16 %v359
        %v375 = vunpack.c.l.b16 %v360
        %v376 = vpack.c.b16 %v373, %v372
        %v377 = vpack.c.b16 %v375, %v374
        %vm380 = vcmask 261120
        %v382 = vsel %vm380, %v356, 0
        %384 = vmatprep.subr.bf16.mxu0 0
        %385 = vmatpush1.bf16.msra.mxu0 %v376
        %386 = vmatprep.subr.bf16.mxu0 0
        %387 = vmatpush1.bf16.msra.mxu0 %v377
        %388 = vmatprep.subr.bf16.mxu0 0
        %389 = vmatpush1.bf16.msra.mxu0 0
        %390 = vmatprep.subr.bf16.mxu0 0
        %391 = vmatpush1.bf16.msra.mxu0 0
        %392 = vmatprep.subr.bf16.mxu0 0
        %393 = vmatpush1.bf16.msra.mxu0 0
        %394 = vmatprep.subr.bf16.mxu0 0
        %395 = vmatpush1.bf16.msra.mxu0 0
        %396 = vmatprep.subr.bf16.mxu0 0
        %397 = vmatpush1.bf16.msra.mxu0 0
        %398 = vmatprep.subr.bf16.mxu0 0
        %399 = vmatpush1.bf16.msra.mxu0 0
        %400 = vmatprep.subr.bf16.mxu0 0
        %401 = vmatpush1.bf16.msra.mxu0 0
        %402 = vmatprep.subr.bf16.mxu0 0
        %403 = vmatpush1.bf16.msra.mxu0 0
        %404 = vmatprep.subr.bf16.mxu0 0
        %405 = vmatpush1.bf16.msra.mxu0 0
        %406 = vmatprep.subr.bf16.mxu0 0
        %407 = vmatpush1.bf16.msra.mxu0 0
        %408 = vmatprep.subr.bf16.mxu0 0
        %409 = vmatpush1.bf16.msra.mxu0 0
        %410 = vmatprep.subr.bf16.mxu0 0
        %411 = vmatpush1.bf16.msra.mxu0 0
        %412 = vmatprep.subr.bf16.mxu0 0
        %413 = vmatpush1.bf16.msra.mxu0 0
        %414 = vmatprep.subr.bf16.mxu0 0
        %415 = vmatpush1.bf16.msra.mxu0 0
        %416 = vmatprep.mubr.bf16.mxu0 0
        %417 = vmatmul.mubr.bf16.gmra.mrb[0].mxu0 %v382
        %v418 = vpop.f32.mrb[0].mxu0
        %v419 = vadd.f32 %v366, %v418
        %v420 = vpop.f32.mrb[0].mxu0
        %v421 = vpop.f32.mrb[0].mxu0
        %v422 = vpop.f32.mrb[0].mxu0
        %423 = vdwg.mxu0
        %v424 = vpack.c.bf16 %v419, %v419
        %425 = vst [vmem:[%s293] sm:$0xf] %v424
        %s426 = sand.u32 %s142, 1
        %s427 = scalar_lea.sflag [#allocation4], %s426
        %s428 = sand.u32 %s142, 1
        %s429 = smul.addr %s428, 4
        %s430 = scalar_lea.vmem [#allocation11], %s429
        // Predicated region
        $region61: #{geniepath_forward.6} parent=39 // pred_check
          %p431 = pneg %p152
        $region62: #{geniepath_forward.6} parent=39 // pred_check_branch
          %433 = sbr.rel (%p431) target = $region64
        $region63: #{geniepath_forward.6} parent=39 // pred_region
          %s435 = ssub.s32 64, 64
          %436 = vsyncadd %s427, %s435
          %s437 = smul.addr %s24, 64
          %s438 = scalar_lea.hbm %s5, %s437
          %s440 = sshll.u32 %s430, 4
          %s441 = int_to_ptr.vmem [resolvable:$true] %s440
          %443 = dma.vmem_to_hbm [thread:$0]  %s441, 64, %s438, %s427
        $region64: #{geniepath_forward.6} parent=39 // pred_fallthru
          _
      $region40: #{geniepath_forward.6} parent=5 // pred_fallthru
        _
      %p444 = scmp.le.s32.totalorder 2, %s19
      // Predicated region
      $region65: #{geniepath_forward.6} parent=5 // pred_check
        %p445 = pneg %p444
      $region66: #{geniepath_forward.6} parent=5 // pred_check_branch
        %447 = sbr.rel (%p445) target = $region68
      $region67: #{geniepath_forward.6} parent=5 // pred_region
        %s448 = ssub.s32 %s19, 2
        // Predicated region
        $region69: #{geniepath_forward.6} parent=67 // pred_check
          %p449 = pneg %p158
        $region70: #{geniepath_forward.6} parent=67 // pred_check_branch
          %451 = sbr.rel (%p449) target = $region72
        $region71: #{geniepath_forward.6} parent=67 // pred_region
          %s452 = sand.u32 %s143, 1
          %s453 = scalar_lea.sflag [#allocation4], %s452
          %s454 = sand.u32 %s143, 1
          %s455 = smul.addr %s454, 4
          %s456 = scalar_lea.vmem [#allocation11], %s455
          %457 = dma.done %s453, 64
        $region72: #{geniepath_forward.6} parent=67 // pred_fallthru
          _
      $region68: #{geniepath_forward.6} parent=5 // pred_fallthru
        _
    $region6: #{geniepath_forward.6} parent=1 // loop_footer
      %s23 = sadd.s32 1, %s19
    $region7: #{geniepath_forward.6} parent=1 // loop_footer_branch
      %18 = sbr.rel target = $region3
    $region8: #{geniepath_forward.6} parent=1 // loop_exit
      _
    %458 = vsyncpa [#allocation3], 1
    %s459 = scalar_lea.sflag [#allocation3], 1
    %460 = vsyncpa %s459, 1
    %461 = vsyncpa [#allocation6], 1
    %462 = vsyncpa [#allocation9], 1
    %463 = vsyncpa [#allocation4], 1
    %s464 = scalar_lea.sflag [#allocation4], 1
    %465 = vsyncpa %s464, 1

// kernel: geniepath_forward.11
$region0: #{geniepath_forward.11}
  #allocation0 [shape = 'u32[]', space=smem, size = 0x4, offset = 0x4, fixed_abs, tag = 'smem constant byte address 0x4 - core index']
  #allocation1 [shape = 'u32[144,128]{1,0:T(1,128)}', space=vmem, size = 0x12000, scoped, tag = 'internal scratch']
  #allocation2 [shape = 'f32[1,1]{1,0:T(1,128)S(1)}', space=vmem, size = 0x200, scoped, tag = 'scoped memory for geniepath_forward.11']
  %s0 = inlined_call_operand.vmem [shape: f32[16,128], index: 0, kind: input, shape index: {}]
  %s1 = inlined_call_operand.vmem [shape: bf16[128,1], index: 1, kind: input, shape index: {}]
  %s2 = inlined_call_operand.<no memory space> [shape: f32[1,1], index: 2, kind: input, shape index: {}]
  %s3 = inlined_call_operand.vmem [shape: f32[16,1], index: 3, kind: output, shape index: {}]
  %s4 = sld [smem:[#allocation0]]
  $region22: #{geniepath_forward.11} parent=0
    _
  %s6 = ssub.s32 1, %s4
  %s7 = scalar_select 0, %s6, %s4
  %v8 = vstv %s2
  %9 = vst [vmem:[#allocation2] sm:$0x1] %v8
  // Predicated region
  $region2: #{geniepath_forward.11} parent=0 // pred_check
    _
  $region3: #{geniepath_forward.11} parent=0 // pred_check_branch
    %11 = sbr.rel (0) target = $region5
  $region4: #{geniepath_forward.11} parent=0 // pred_region
    _
  $region5: #{geniepath_forward.11} parent=0 // pred_fallthru
    _
  // Predicated region
  $region6: #{geniepath_forward.11} parent=0 // pred_check
    _
  $region7: #{geniepath_forward.11} parent=0 // pred_check_branch
    %13 = sbr.rel (0) target = $region9
  $region8: #{geniepath_forward.11} parent=0 // pred_region
    _
  $region9: #{geniepath_forward.11} parent=0 // pred_fallthru
    _
  // Predicated region
  $region10: #{geniepath_forward.11} parent=0 // pred_check
    _
  $region11: #{geniepath_forward.11} parent=0 // pred_check_branch
    %15 = sbr.rel (0) target = $region13
  $region12: #{geniepath_forward.11} parent=0 // pred_region
    _
  $region13: #{geniepath_forward.11} parent=0 // pred_fallthru
    _
  %v17 = vld [vmem:[%s0] sm:$0xff]
  %v18 = vld [vmem:[%s0 + $0x8] sm:$0xff]
  %v19 = vpack.c.bf16 %v18, %v17
  %v20 = vld [vmem:[%s1] sm:$0xf]
  %v21 = vld [vmem:[%s1 + $0x4] sm:$0xf]
  %v22 = vld [vmem:[%s1 + $0x8] sm:$0xf]
  %v23 = vld [vmem:[%s1 + $0xc] sm:$0xf]
  %v24 = vld [vmem:[%s1 + $0x10] sm:$0xf]
  %v25 = vld [vmem:[%s1 + $0x14] sm:$0xf]
  %v26 = vld [vmem:[%s1 + $0x18] sm:$0xf]
  %v27 = vld [vmem:[%s1 + $0x1c] sm:$0xf]
  %v28 = vld [vmem:[%s1 + $0x20] sm:$0xf]
  %v29 = vld [vmem:[%s1 + $0x24] sm:$0xf]
  %v30 = vld [vmem:[%s1 + $0x28] sm:$0xf]
  %v31 = vld [vmem:[%s1 + $0x2c] sm:$0xf]
  %v32 = vld [vmem:[%s1 + $0x30] sm:$0xf]
  %v33 = vld [vmem:[%s1 + $0x34] sm:$0xf]
  %v34 = vld [vmem:[%s1 + $0x38] sm:$0xf]
  %v35 = vld [vmem:[%s1 + $0x3c] sm:$0xf]
  %v36 = vld [vmem:[#allocation2] sm:$0x1]
  %v38 = vlaneseq
  %v39 = vshrl.u32 %v38, 7
  %v40 = vsub.s32 0, %v39
  %v41 = vrot.slane %v36, %v40
  %v59 = vunpack.c.l.b16 %v20
  %v60 = vunpack.c.l.b16 %v21
  %v61 = vunpack.c.l.b16 %v22
  %v62 = vunpack.c.l.b16 %v23
  %v63 = vunpack.c.l.b16 %v24
  %v64 = vunpack.c.l.b16 %v25
  %v65 = vunpack.c.l.b16 %v26
  %v66 = vunpack.c.l.b16 %v27
  %v67 = vunpack.c.l.b16 %v28
  %v68 = vunpack.c.l.b16 %v29
  %v69 = vunpack.c.l.b16 %v30
  %v70 = vunpack.c.l.b16 %v31
  %v71 = vunpack.c.l.b16 %v32
  %v72 = vunpack.c.l.b16 %v33
  %v73 = vunpack.c.l.b16 %v34
  %v74 = vunpack.c.l.b16 %v35
  %v75 = vpack.c.b16 %v60, %v59
  %v76 = vpack.c.b16 %v62, %v61
  %v77 = vpack.c.b16 %v64, %v63
  %v78 = vpack.c.b16 %v66, %v65
  %v79 = vpack.c.b16 %v68, %v67
  %v80 = vpack.c.b16 %v70, %v69
  %v81 = vpack.c.b16 %v72, %v71
  %v82 = vpack.c.b16 %v74, %v73
  %91 = vmatprep.subr.bf16.mxu0 0
  %92 = vmatpush1.bf16.msra.mxu0 %v75
  %93 = vmatprep.subr.bf16.mxu0 0
  %94 = vmatpush1.bf16.msra.mxu0 %v76
  %95 = vmatprep.subr.bf16.mxu0 0
  %96 = vmatpush1.bf16.msra.mxu0 %v77
  %97 = vmatprep.subr.bf16.mxu0 0
  %98 = vmatpush1.bf16.msra.mxu0 %v78
  %99 = vmatprep.subr.bf16.mxu0 0
  %100 = vmatpush1.bf16.msra.mxu0 %v79
  %101 = vmatprep.subr.bf16.mxu0 0
  %102 = vmatpush1.bf16.msra.mxu0 %v80
  %103 = vmatprep.subr.bf16.mxu0 0
  %104 = vmatpush1.bf16.msra.mxu0 %v81
  %105 = vmatprep.subr.bf16.mxu0 0
  %106 = vmatpush1.bf16.msra.mxu0 %v82
  %107 = vmatprep.subr.bf16.mxu0 0
  %108 = vmatpush1.bf16.msra.mxu0 0
  %109 = vmatprep.subr.bf16.mxu0 0
  %110 = vmatpush1.bf16.msra.mxu0 0
  %111 = vmatprep.subr.bf16.mxu0 0
  %112 = vmatpush1.bf16.msra.mxu0 0
  %113 = vmatprep.subr.bf16.mxu0 0
  %114 = vmatpush1.bf16.msra.mxu0 0
  %115 = vmatprep.subr.bf16.mxu0 0
  %116 = vmatpush1.bf16.msra.mxu0 0
  %117 = vmatprep.subr.bf16.mxu0 0
  %118 = vmatpush1.bf16.msra.mxu0 0
  %119 = vmatprep.subr.bf16.mxu0 0
  %120 = vmatpush1.bf16.msra.mxu0 0
  %121 = vmatprep.subr.bf16.mxu0 0
  %122 = vmatpush1.bf16.msra.mxu0 0
  %123 = vmatprep.mubr.bf16.mxu0 0
  %124 = vmatmul.mubr.bf16.gmra.mrb[0].mxu0 %v19
  %v125 = vpop.f32.mrb[0].mxu0
  %v126 = vadd.f32 %v41, %v125
  %v127 = vpop.f32.mrb[0].mxu0
  %v128 = vpop.f32.mrb[0].mxu0
  %v129 = vadd.f32 %v41, %v128
  %v130 = vpop.f32.mrb[0].mxu0
  %131 = vdwg.mxu0
  %v132 = vxor.u32 %v126, 2147483648
  %v133 = vxor.u32 %v129, 2147483648
  %v134 = vmul.f32 %v132, 1.442695
  %v135 = vpow.pop %v134
  %v136 = vmul.f32 %v133, 1.442695
  %v137 = vpow.pop %v136
  %v138 = vadd.f32 %v135, 1.0
  %v139 = vadd.f32 %v137, 1.0
  %v140 = vrcp.pop %v138
  %v141 = vmul.f32 1.0, %v140
  %v142 = vrcp.pop %v139
  %v143 = vmul.f32 1.0, %v142
  %vm144 = vcmask 7168
  %145 = vst.msk [vmem:[%s3] sm:$0xff] %vm144, %v141
  %146 = vst.msk [vmem:[%s3 + $0x8] sm:$0xff] %vm144, %v143
  // Predicated region
  $region14: #{geniepath_forward.11} parent=0 // pred_check
    _
  $region15: #{geniepath_forward.11} parent=0 // pred_check_branch
    %148 = sbr.rel (0) target = $region17
  $region16: #{geniepath_forward.11} parent=0 // pred_region
    _
  $region17: #{geniepath_forward.11} parent=0 // pred_fallthru
    _
  // Predicated region
  $region18: #{geniepath_forward.11} parent=0 // pred_check
    _
  $region19: #{geniepath_forward.11} parent=0 // pred_check_branch
    %150 = sbr.rel (0) target = $region21
  $region20: #{geniepath_forward.11} parent=0 // pred_region
    _
  $region21: #{geniepath_forward.11} parent=0 // pred_fallthru
    _

// kernel: geniepath_forward.7
$region0: #{geniepath_forward.7}
  #allocation0 [shape = 'u32[]', space=smem, size = 0x4, offset = 0x4, fixed_abs, tag = 'smem constant byte address 0x4 - core index']
  #allocation1 [shape = 'u32[144,128]{1,0:T(1,128)}', space=vmem, size = 0x12000, scoped, tag = 'internal scratch']
  %s0 = inlined_call_operand.hbm [shape: bf16[16,128], index: 0, kind: input, shape index: {}]
  %s1 = inlined_call_operand.hbm [shape: bf16[16,16], index: 1, kind: input, shape index: {}]
  %s2 = inlined_call_operand.hbm [shape: bf16[2,128], index: 2, kind: input, shape index: {}]
  %s3 = inlined_call_operand.hbm [shape: bf16[2,128], index: 3, kind: input, shape index: {}]
  %s4 = inlined_call_operand.hbm [shape: bf16[256,128], index: 4, kind: input, shape index: {}]
  %s5 = inlined_call_operand.hbm [shape: f32[1,128], index: 5, kind: input, shape index: {}]
  %s6 = inlined_call_operand.hbm [shape: bf16[16,128], index: 6, kind: output, shape index: {}]
  %s7 = sld [smem:[#allocation0]]
  $region81: #{geniepath_forward.7} parent=0
    _
  %s9 = ssub.s32 1, %s7
  %s10 = scalar_select 0, %s9, %s7
  $region1: #{geniepath_forward.7} parent=0
    #allocation2 [shape = 'u8[4096]{0}', space=vmem, size = 0x1000, scoped, tag = 'input window, operand 0, single buffered']
    #allocation3 [shape = 's32[2]{0}', space=sflag, size = 0x8, scoped, tag = 'scoped memory for geniepath_forward.7']
    #allocation4 [shape = 's32[2]{0}', space=sflag, size = 0x8, scoped, tag = 'scoped memory for geniepath_forward.7']
    #allocation5 [shape = 'u8[4096]{0}', space=vmem, size = 0x1000, scoped, tag = 'input window, operand 1']
    #allocation6 [shape = 's32[2]{0}', space=sflag, size = 0x8, scoped, tag = 'scoped memory for geniepath_forward.7']
    #allocation7 [shape = 'u8[512]{0}', space=vmem, size = 0x400, scoped, tag = 'input window, operand 2, single buffered']
    #allocation8 [shape = 'u8[512]{0}', space=vmem, size = 0x400, scoped, tag = 'input window, operand 3, single buffered']
    #allocation9 [shape = 's32[1]{0}', space=sflag, size = 0x4, scoped, tag = 'scoped memory for geniepath_forward.7']
    #allocation10 [shape = 'u8[65536]{0}', space=vmem, size = 0x10000, scoped, tag = 'input window, operand 4, single buffered']
    #allocation11 [shape = 'u8[512]{0}', space=vmem, size = 0x400, scoped, tag = 'input window, operand 5, single buffered']
    #allocation12 [shape = 's32[1]{0}', space=sflag, size = 0x4, scoped, tag = 'scoped memory for geniepath_forward.7']
    #allocation13 [shape = 'u8[4096]{0}', space=vmem, size = 0x1000, scoped, tag = 'output window, operand 0']
    %11 = vsyncpa [#allocation3], 0
    %12 = vsyncpa [#allocation6], 0
    %s13 = scalar_lea.sflag [#allocation6], 1
    %14 = vsyncpa %s13, 0
    %15 = vsyncpa [#allocation9], 0
    %16 = vsyncpa [#allocation12], 0
    %17 = vsyncpa [#allocation4], 0
    %s18 = scalar_lea.sflag [#allocation4], 1
    %19 = vsyncpa %s18, 0
    loop: start=0, step=1, limit=4
    $region2: #{geniepath_forward.7} parent=1 // loop_pre_header
      _
    $region3: #{geniepath_forward.7} parent=1 // loop_header
      %s21 = sphi 0, %s25
      %p22 = scmp.ge.s32.totalorder %s21, 4
      %s29 = sphi 0, %s29
      %s31 = sphi 0, %s29
      %s32 = sphi 0, %s31
      %s46 = sphi 0, %s32
      %s52 = sphi 0, %s54
      %s55 = sphi 0, %s52
      %s56 = sphi 0, %s55
      %s72 = sphi 0, %s56
      %s76 = sphi 0, %s76
      %s78 = sphi 0, %s76
      %s79 = sphi 0, %s78
      %s93 = sphi 0, %s79
      %s97 = sphi 0, %s97
      %s99 = sphi 0, %s97
      %s100 = sphi 0, %s99
      %s114 = sphi 0, %s100
      %s118 = sphi 0, %s118
      %s120 = sphi 0, %s118
      %s121 = sphi 0, %s120
      %s135 = sphi 0, %s121
      %s139 = sphi 0, %s139
      %s141 = sphi 0, %s139
      %s142 = sphi 0, %s141
      %s156 = sphi 0, %s142
      %s162 = sphi 0, %s164
      %s165 = sphi 0, %s162
      %s166 = sphi 0, %s165
      %s182 = sphi 0, %s166
    $region4: #{geniepath_forward.7} parent=1 // loop_header_branch
      %24 = sbr.rel (%p22) target = $region8
    $region5: #{geniepath_forward.7} parent=1 // loop_body
      %s26 = ssub.s32 %s21, 1
      %s27 = ssub.s32 %s21, 2
      %s28 = sadd.s32 %s21, 1
      %s30 = sadd.s32 %s29, 1
      %p33 = scmp.eq.s32.totalorder %s21, 1
      %p34 = scmp.ne.s32.totalorder %s29, %s31
      %p35 = scmp.eq.s32.totalorder %s21, 0
      %p36 = por %p34, %p35
      %p37 = scmp.ne.s32.totalorder %s29, %s31
      %p38 = scmp.eq.s32.totalorder %s26, 1
      %p39 = por %p37, %p38
      %p40 = scmp.ne.s32.totalorder %s31, %s32
      %p41 = scmp.eq.s32.totalorder %s26, 0
      %p42 = por %p40, %p41
      %p43 = scmp.ne.s32.totalorder %s31, %s32
      %p44 = scmp.eq.s32.totalorder %s27, 1
      %p45 = por %p43, %p44
      %p47 = scmp.ne.s32.totalorder %s32, %s46
      %p48 = scmp.eq.s32.totalorder %s27, 0
      %p49 = por %p47, %p48
      %s50 = ssub.s32 %s21, %s28
      %p51 = scmp.eq.s32.totalorder %s50, 0
      %s53 = sadd.s32 %s52, 1
      %s54 = scalar_select %p51, %s52, %s53
      %p57 = pneg %p51
      %p58 = scmp.eq.s32.totalorder %s21, 1
      %p59 = por %p57, %p58
      %p60 = scmp.ne.s32.totalorder %s52, %s55
      %p61 = scmp.eq.s32.totalorder %s21, 0
      %p62 = por %p60, %p61
      %p63 = scmp.ne.s32.totalorder %s52, %s55
      %p64 = scmp.eq.s32.totalorder %s26, 1
      %p65 = por %p63, %p64
      %p66 = scmp.ne.s32.totalorder %s55, %s56
      %p67 = scmp.eq.s32.totalorder %s26, 0
      %p68 = por %p66, %p67
      %p69 = scmp.ne.s32.totalorder %s55, %s56
      %p70 = scmp.eq.s32.totalorder %s27, 1
      %p71 = por %p69, %p70
      %p73 = scmp.ne.s32.totalorder %s56, %s72
      %p74 = scmp.eq.s32.totalorder %s27, 0
      %p75 = por %p73, %p74
      %s77 = sadd.s32 %s76, 1
      %p80 = scmp.eq.s32.totalorder %s21, 1
      %p81 = scmp.ne.s32.totalorder %s76, %s78
      %p82 = scmp.eq.s32.totalorder %s21, 0
      %p83 = por %p81, %p82
      %p84 = scmp.ne.s32.totalorder %s76, %s78
      %p85 = scmp.eq.s32.totalorder %s26, 1
      %p86 = por %p84, %p85
      %p87 = scmp.ne.s32.totalorder %s78, %s79
      %p88 = scmp.eq.s32.totalorder %s26, 0
      %p89 = por %p87, %p88
      %p90 = scmp.ne.s32.totalorder %s78, %s79
      %p91 = scmp.eq.s32.totalorder %s27, 1
      %p92 = por %p90, %p91
      %p94 = scmp.ne.s32.totalorder %s79, %s93
      %p95 = scmp.eq.s32.totalorder %s27, 0
      %p96 = por %p94, %p95
      %s98 = sadd.s32 %s97, 1
      %p101 = scmp.eq.s32.totalorder %s21, 1
      %p102 = scmp.ne.s32.totalorder %s97, %s99
      %p103 = scmp.eq.s32.totalorder %s21, 0
      %p104 = por %p102, %p103
      %p105 = scmp.ne.s32.totalorder %s97, %s99
      %p106 = scmp.eq.s32.totalorder %s26, 1
      %p107 = por %p105, %p106
      %p108 = scmp.ne.s32.totalorder %s99, %s100
      %p109 = scmp.eq.s32.totalorder %s26, 0
      %p110 = por %p108, %p109
      %p111 = scmp.ne.s32.totalorder %s99, %s100
      %p112 = scmp.eq.s32.totalorder %s27, 1
      %p113 = por %p111, %p112
      %p115 = scmp.ne.s32.totalorder %s100, %s114
      %p116 = scmp.eq.s32.totalorder %s27, 0
      %p117 = por %p115, %p116
      %s119 = sadd.s32 %s118, 1
      %p122 = scmp.eq.s32.totalorder %s21, 1
      %p123 = scmp.ne.s32.totalorder %s118, %s120
      %p124 = scmp.eq.s32.totalorder %s21, 0
      %p125 = por %p123, %p124
      %p126 = scmp.ne.s32.totalorder %s118, %s120
      %p127 = scmp.eq.s32.totalorder %s26, 1
      %p128 = por %p126, %p127
      %p129 = scmp.ne.s32.totalorder %s120, %s121
      %p130 = scmp.eq.s32.totalorder %s26, 0
      %p131 = por %p129, %p130
      %p132 = scmp.ne.s32.totalorder %s120, %s121
      %p133 = scmp.eq.s32.totalorder %s27, 1
      %p134 = por %p132, %p133
      %p136 = scmp.ne.s32.totalorder %s121, %s135
      %p137 = scmp.eq.s32.totalorder %s27, 0
      %p138 = por %p136, %p137
      %s140 = sadd.s32 %s139, 1
      %p143 = scmp.eq.s32.totalorder %s21, 1
      %p144 = scmp.ne.s32.totalorder %s139, %s141
      %p145 = scmp.eq.s32.totalorder %s21, 0
      %p146 = por %p144, %p145
      %p147 = scmp.ne.s32.totalorder %s139, %s141
      %p148 = scmp.eq.s32.totalorder %s26, 1
      %p149 = por %p147, %p148
      %p150 = scmp.ne.s32.totalorder %s141, %s142
      %p151 = scmp.eq.s32.totalorder %s26, 0
      %p152 = por %p150, %p151
      %p153 = scmp.ne.s32.totalorder %s141, %s142
      %p154 = scmp.eq.s32.totalorder %s27, 1
      %p155 = por %p153, %p154
      %p157 = scmp.ne.s32.totalorder %s142, %s156
      %p158 = scmp.eq.s32.totalorder %s27, 0
      %p159 = por %p157, %p158
      %s160 = ssub.s32 %s21, %s28
      %p161 = scmp.eq.s32.totalorder %s160, 0
      %s163 = sadd.s32 %s162, 1
      %s164 = scalar_select %p161, %s162, %s163
      %p167 = pneg %p161
      %p168 = scmp.eq.s32.totalorder %s21, 1
      %p169 = por %p167, %p168
      %p170 = scmp.ne.s32.totalorder %s162, %s165
      %p171 = scmp.eq.s32.totalorder %s21, 0
      %p172 = por %p170, %p171
      %p173 = scmp.ne.s32.totalorder %s162, %s165
      %p174 = scmp.eq.s32.totalorder %s26, 1
      %p175 = por %p173, %p174
      %p176 = scmp.ne.s32.totalorder %s165, %s166
      %p177 = scmp.eq.s32.totalorder %s26, 0
      %p178 = por %p176, %p177
      %p179 = scmp.ne.s32.totalorder %s165, %s166
      %p180 = scmp.eq.s32.totalorder %s27, 1
      %p181 = por %p179, %p180
      %p183 = scmp.ne.s32.totalorder %s166, %s182
      %p184 = scmp.eq.s32.totalorder %s27, 0
      %p185 = por %p183, %p184
      %p186 = scmp.le.s32.totalorder 1, %s21
      %p187 = scmp.lt.s32.totalorder %s21, 3
      %p188 = pnand %p186, %p187
      %p189 = pneg %p188
      // Predicated region
      $region9: #{geniepath_forward.7} parent=5 // pred_check
        _
      $region10: #{geniepath_forward.7} parent=5 // pred_check_branch
        %191 = sbr.rel (%p188) target = $region12
      $region11: #{geniepath_forward.7} parent=5 // pred_region
        %s192 = ssub.s32 %s21, 1
        // Predicated region
        $region13: #{geniepath_forward.7} parent=11 // pred_check
          %p193 = pneg %p42
        $region14: #{geniepath_forward.7} parent=11 // pred_check_branch
          %195 = sbr.rel (%p193) target = $region16
        $region15: #{geniepath_forward.7} parent=11 // pred_region
          %s197 = ssub.s32 128, 128
          %198 = vsyncadd [#allocation3], %s197
          %s199 = sshll.u32 [#allocation2], 4
          %s200 = int_to_ptr.vmem [resolvable:$true] %s199
          %205 = dma.hbm_to_vmem [thread:$0]  %s0, 128, %s200, [#allocation3], 64, 64, 4
        $region16: #{geniepath_forward.7} parent=11 // pred_fallthru
          _
        // Predicated region
        $region17: #{geniepath_forward.7} parent=11 // pred_check
          %p206 = pneg %p89
        $region18: #{geniepath_forward.7} parent=11 // pred_check_branch
          %208 = sbr.rel (%p206) target = $region20
        $region19: #{geniepath_forward.7} parent=11 // pred_region
          %s210 = ssub.s32 16, 16
          %211 = vsyncadd [#allocation6], %s210
          %s213 = sshll.u32 [#allocation7], 4
          %s214 = int_to_ptr.vmem [resolvable:$true] %s213
          %216 = dma.hbm_to_vmem [thread:$0]  %s2, 16, %s214, [#allocation6]
        $region20: #{geniepath_forward.7} parent=11 // pred_fallthru
          _
        // Predicated region
        $region21: #{geniepath_forward.7} parent=11 // pred_check
          %p217 = pneg %p110
        $region22: #{geniepath_forward.7} parent=11 // pred_check_branch
          %219 = sbr.rel (%p217) target = $region24
        $region23: #{geniepath_forward.7} parent=11 // pred_region
          %s221 = ssub.s32 16, 16
          %222 = vsyncadd [#allocation9], %s221
          %s224 = sshll.u32 [#allocation8], 4
          %s225 = int_to_ptr.vmem [resolvable:$true] %s224
          %227 = dma.hbm_to_vmem [thread:$0]  %s3, 16, %s225, [#allocation9]
        $region24: #{geniepath_forward.7} parent=11 // pred_fallthru
          _
        // Predicated region
        $region25: #{geniepath_forward.7} parent=11 // pred_check
          %p228 = pneg %p131
        $region26: #{geniepath_forward.7} parent=11 // pred_check_branch
          %230 = sbr.rel (%p228) target = $region28
        $region27: #{geniepath_forward.7} parent=11 // pred_region
          %s232 = ssub.s32 2048, 2048
          %233 = vsyncadd [#allocation9], %s232
          %s234 = sshll.u32 [#allocation10], 4
          %s235 = int_to_ptr.vmem [resolvable:$true] %s234
          %240 = dma.hbm_to_vmem [thread:$0]  %s4, 2048, %s235, [#allocation9], 64, 64, 4
        $region28: #{geniepath_forward.7} parent=11 // pred_fallthru
          _
        // Predicated region
        $region29: #{geniepath_forward.7} parent=11 // pred_check
          %p241 = pneg %p152
        $region30: #{geniepath_forward.7} parent=11 // pred_check_branch
          %243 = sbr.rel (%p241) target = $region32
        $region31: #{geniepath_forward.7} parent=11 // pred_region
          %s245 = ssub.s32 16, 16
          %246 = vsyncadd [#allocation12], %s245
          %s248 = sshll.u32 [#allocation11], 4
          %s249 = int_to_ptr.vmem [resolvable:$true] %s248
          %251 = dma.hbm_to_vmem [thread:$0]  %s5, 16, %s249, [#allocation12]
        $region32: #{geniepath_forward.7} parent=11 // pred_fallthru
          _
      $region12: #{geniepath_forward.7} parent=5 // pred_fallthru
        _
      %p252 = scmp.lt.s32.totalorder %s21, 2
      // Predicated region
      $region33: #{geniepath_forward.7} parent=5 // pred_check
        %p253 = pneg %p252
      $region34: #{geniepath_forward.7} parent=5 // pred_check_branch
        %255 = sbr.rel (%p253) target = $region36
      $region35: #{geniepath_forward.7} parent=5 // pred_region
        // Predicated region
        $region37: #{geniepath_forward.7} parent=35 // pred_check
          %p256 = pneg %p62
        $region38: #{geniepath_forward.7} parent=35 // pred_check_branch
          %258 = sbr.rel (%p256) target = $region40
        $region39: #{geniepath_forward.7} parent=35 // pred_region
          %s259 = sand.u32 %s21, 1
          %s260 = scalar_lea.sflag [#allocation6], %s259
          %s261 = sand.u32 %s52, 1
          %s262 = smul.addr %s261, 4
          %s263 = scalar_lea.vmem [#allocation5], %s262
          %s265 = ssub.s32 64, 64
          %266 = vsyncadd %s260, %s265
          %s267 = smul.addr %s21, 64
          %s268 = scalar_lea.hbm %s1, %s267
          %s270 = sshll.u32 %s263, 4
          %s271 = int_to_ptr.vmem [resolvable:$true] %s270
          %273 = dma.hbm_to_vmem [thread:$0]  %s268, 64, %s271, %s260
        $region40: #{geniepath_forward.7} parent=35 // pred_fallthru
          _
      $region36: #{geniepath_forward.7} parent=5 // pred_fallthru
        _
      %p274 = scmp.le.s32.totalorder 1, %s21
      %p275 = scmp.lt.s32.totalorder %s21, 3
      %p276 = pnand %p274, %p275
      %p277 = pneg %p276
      // Predicated region
      $region41: #{geniepath_forward.7} parent=5 // pred_check
        _
      $region42: #{geniepath_forward.7} parent=5 // pred_check_branch
        %279 = sbr.rel (%p276) target = $region44
      $region43: #{geniepath_forward.7} parent=5 // pred_region
        %s280 = ssub.s32 %s21, 1
        // Predicated region
        $region45: #{geniepath_forward.7} parent=43 // pred_check
          %p281 = pneg %p42
        $region46: #{geniepath_forward.7} parent=43 // pred_check_branch
          %283 = sbr.rel (%p281) target = $region48
        $region47: #{geniepath_forward.7} parent=43 // pred_region
          %284 = dma.done [#allocation3], 128
        $region48: #{geniepath_forward.7} parent=43 // pred_fallthru
          _
        %s285 = sand.u32 %s26, 1
        %s286 = scalar_lea.sflag [#allocation6], %s285
        %s287 = sand.u32 %s55, 1
        %s288 = smul.addr %s287, 4
        %s289 = scalar_lea.vmem [#allocation5], %s288
        // Predicated region
        $region49: #{geniepath_forward.7} parent=43 // pred_check
          %p290 = pneg %p68
        $region50: #{geniepath_forward.7} parent=43 // pred_check_branch
          %292 = sbr.rel (%p290) target = $region52
        $region51: #{geniepath_forward.7} parent=43 // pred_region
          %293 = dma.done %s286, 64
        $region52: #{geniepath_forward.7} parent=43 // pred_fallthru
          _
        // Predicated region
        $region53: #{geniepath_forward.7} parent=43 // pred_check
          %p294 = pneg %p89
        $region54: #{geniepath_forward.7} parent=43 // pred_check_branch
          %296 = sbr.rel (%p294) target = $region56
        $region55: #{geniepath_forward.7} parent=43 // pred_region
          %297 = dma.done [#allocation6], 16
        $region56: #{geniepath_forward.7} parent=43 // pred_fallthru
          _
        // Predicated region
        $region57: #{geniepath_forward.7} parent=43 // pred_check
          %p298 = pneg %p110
        $region58: #{geniepath_forward.7} parent=43 // pred_check_branch
          %300 = sbr.rel (%p298) target = $region60
        $region59: #{geniepath_forward.7} parent=43 // pred_region
          %301 = dma.done [#allocation9], 16
        $region60: #{geniepath_forward.7} parent=43 // pred_fallthru
          _
        // Predicated region
        $region61: #{geniepath_forward.7} parent=43 // pred_check
          %p302 = pneg %p131
        $region62: #{geniepath_forward.7} parent=43 // pred_check_branch
          %304 = sbr.rel (%p302) target = $region64
        $region63: #{geniepath_forward.7} parent=43 // pred_region
          %305 = dma.done [#allocation9], 2048
        $region64: #{geniepath_forward.7} parent=43 // pred_fallthru
          _
        // Predicated region
        $region65: #{geniepath_forward.7} parent=43 // pred_check
          %p306 = pneg %p152
        $region66: #{geniepath_forward.7} parent=43 // pred_check_branch
          %308 = sbr.rel (%p306) target = $region68
        $region67: #{geniepath_forward.7} parent=43 // pred_region
          %309 = dma.done [#allocation12], 16
        $region68: #{geniepath_forward.7} parent=43 // pred_fallthru
          _
        %p310 = pneg %p42
        %p311 = pneg %p39
        %s312 = sand.u32 %s26, 1
        %s313 = scalar_lea.sflag [#allocation6], %s312
        %s314 = sand.u32 %s55, 1
        %s315 = smul.addr %s314, 4
        %s316 = scalar_lea.vmem [#allocation5], %s315
        %p317 = pneg %p68
        %p318 = pneg %p65
        %p319 = pneg %p89
        %p320 = pneg %p86
        %p321 = pneg %p110
        %p322 = pneg %p107
        %p323 = pneg %p131
        %p324 = pneg %p128
        %p325 = pneg %p152
        %p326 = pneg %p149
        %p327 = pneg %p178
        %p328 = pneg %p175
        %s329 = sand.u32 %s165, 1
        %s330 = scalar_lea.sflag [#allocation4], %s329
        %s331 = sand.u32 %s165, 1
        %s332 = smul.addr %s331, 4
        %s333 = scalar_lea.vmem [#allocation13], %s332
        %s338 = smul.u32 %s26, 8
        %v339 = vld [vmem:[#allocation2] sm:$0xf]
        %v340 = vld [vmem:[#allocation2 + $0x4] sm:$0xf]
        %s341 = sshra.s32 %s338, 3
        %s342 = sand.u32 %s338, 7
        %s343 = smul.addr %s341, 4
        %s344 = scalar_lea.vmem [#allocation2], %s343
        %v345 = vld [vmem:[%s344] sm:$0xf]
        %v346 = vld [vmem:[%s289] sm:$0xf]
        %vm347 = vcmp.gt.bf16.partialorder %v346, 1056980736
        %v348 = vld [vmem:[#allocation7] sm:$0x1]
        %v351 = vunpack.c.l.b16 %v339
        %v352 = vunpack.c.l.b16 %v340
        %v353 = vpack.c.b16 %v352, %v351
        %355 = vmatprep.subr.bf16.mxu0 0
        %356 = vmatpush1.bf16.xpose.msra.mxu0 %v353
        %357 = vmatprep.subr.bf16.mxu0 0
        %358 = vmatpush1.bf16.xpose.msra.mxu0 0
        %359 = vmatprep.subr.bf16.mxu0 0
        %360 = vmatpush1.bf16.xpose.msra.mxu0 0
        %361 = vmatprep.subr.bf16.mxu0 0
        %362 = vmatpush1.bf16.xpose.msra.mxu0 0
        %363 = vmatprep.subr.bf16.mxu0 0
        %364 = vmatpush1.bf16.xpose.msra.mxu0 0
        %365 = vmatprep.subr.bf16.mxu0 0
        %366 = vmatpush1.bf16.xpose.msra.mxu0 0
        %367 = vmatprep.subr.bf16.mxu0 0
        %368 = vmatpush1.bf16.xpose.msra.mxu0 0
        %369 = vmatprep.subr.bf16.mxu0 0
        %370 = vmatpush1.bf16.xpose.msra.mxu0 0
        %371 = vmatprep.subr.bf16.mxu0 0
        %372 = vmatpush1.bf16.xpose.msra.mxu0 0
        %373 = vmatprep.subr.bf16.mxu0 0
        %374 = vmatpush1.bf16.xpose.msra.mxu0 0
        %375 = vmatprep.subr.bf16.mxu0 0
        %376 = vmatpush1.bf16.xpose.msra.mxu0 0
        %377 = vmatprep.subr.bf16.mxu0 0
        %378 = vmatpush1.bf16.xpose.msra.mxu0 0
        %379 = vmatprep.subr.bf16.mxu0 0
        %380 = vmatpush1.bf16.xpose.msra.mxu0 0
        %381 = vmatprep.subr.bf16.mxu0 0
        %382 = vmatpush1.bf16.xpose.msra.mxu0 0
        %383 = vmatprep.subr.bf16.mxu0 0
        %384 = vmatpush1.bf16.xpose.msra.mxu0 0
        %385 = vmatprep.subr.bf16.mxu0 0
        %386 = vmatpush1.bf16.xpose.msra.mxu0 0
        %387 = vmatprep.mubr.bf16.mxu0 0
        %388 = vmatmul.mubr.bf16.gmra.mrb[0].mxu0 %v348
        %v389 = vpop.f32.mrb[0].mxu0
        %v390 = vadd.f32 0.0, %v389
        %v391 = vpop.f32.mrb[0].mxu0
        %v392 = vpop.f32.mrb[0].mxu0
        %v393 = vpop.f32.mrb[0].mxu0
        %394 = vdwg.mxu0
        %v395 = vld [vmem:[#allocation8] sm:$0x1]
        %396 = vmatprep.subr.bf16.mxu0 0
        %397 = vmatpush1.bf16.xpose.msra.mxu0 %v395
        %398 = vmatprep.subr.bf16.mxu0 0
        %399 = vmatpush1.bf16.xpose.msra.mxu0 0
        %400 = vmatprep.subr.bf16.mxu0 0
        %401 = vmatpush1.bf16.xpose.msra.mxu0 0
        %402 = vmatprep.subr.bf16.mxu0 0
        %403 = vmatpush1.bf16.xpose.msra.mxu0 0
        %404 = vmatprep.subr.bf16.mxu0 0
        %405 = vmatpush1.bf16.xpose.msra.mxu0 0
        %406 = vmatprep.subr.bf16.mxu0 0
        %407 = vmatpush1.bf16.xpose.msra.mxu0 0
        %408 = vmatprep.subr.bf16.mxu0 0
        %409 = vmatpush1.bf16.xpose.msra.mxu0 0
        %410 = vmatprep.subr.bf16.mxu0 0
        %411 = vmatpush1.bf16.xpose.msra.mxu0 0
        %412 = vmatprep.subr.bf16.mxu0 0
        %413 = vmatpush1.bf16.xpose.msra.mxu0 0
        %414 = vmatprep.subr.bf16.mxu0 0
        %415 = vmatpush1.bf16.xpose.msra.mxu0 0
        %416 = vmatprep.subr.bf16.mxu0 0
        %417 = vmatpush1.bf16.xpose.msra.mxu0 0
        %418 = vmatprep.subr.bf16.mxu0 0
        %419 = vmatpush1.bf16.xpose.msra.mxu0 0
        %420 = vmatprep.subr.bf16.mxu0 0
        %421 = vmatpush1.bf16.xpose.msra.mxu0 0
        %422 = vmatprep.subr.bf16.mxu0 0
        %423 = vmatpush1.bf16.xpose.msra.mxu0 0
        %424 = vmatprep.subr.bf16.mxu0 0
        %425 = vmatpush1.bf16.xpose.msra.mxu0 0
        %426 = vmatprep.subr.bf16.mxu0 0
        %427 = vmatpush1.bf16.xpose.msra.mxu0 0
        %428 = vmatprep.mubr.bf16.mxu0 0
        %429 = vmatmul.mubr.bf16.gmra.mrb[0].mxu0 %v345
        %v430 = vpop.f32.mrb[0].mxu0
        %v431 = vadd.f32 0.0, %v430
        %v432 = vpop.f32.mrb[0].mxu0
        %v433 = vpop.f32.mrb[0].mxu0
        %v434 = vpop.f32.mrb[0].mxu0
        %435 = vdwg.mxu0
        %437 = vset.pattern.permute.xlu0 0
        %438 = vperm.xlu0 %437, %v431
        %v439 = vpop.permute.xlu0 %438
        %v441 = vlaneseq
        %v442 = vshrl.u32 %v441, 7
        %v443 = vsub.s32 0, %v442
        %v444 = vrot.slane %v390, %v443
        %v445 = vadd.f32 %v439, %v444
        %vm446 = vcmp.gt.f32.partialorder %v445, 0.0
        %v447 = vmul.f32 %v445, 0.2
        %v448 = vsel %vm446, %v445, %v447
        %v449 = vsel %vm347, 65537, 0
        %v450 = vunpack.c.l.b16 %v449
        %vm451 = vcmp.ne.s32.totalorder %v450, 0
        %v452 = vsel %vm451, %v448, -1e+30
        %vm453 = vcmask 130048
        %v454 = vsel %vm453, %v452, -inf
        %455 = vmax.xlane.f32.xlu0 %v454
        %v456 = vpop.xlane.xlu0 %455
        %v457 = vsub.f32 %v452, %v456
        %v458 = vmul.f32 %v457, 1.442695
        %v459 = vpow.pop %v458
        %v460 = vsel %vm451, %v459, 0.0
        %v461 = vsel %vm453, %v460, 0.0
        %462 = vadd.xlane.f32.xlu0 %v461
        %v463 = vpop.xlane.xlu0 %462
        %v464 = vmax.f32 %v463, 1e-30
        %v465 = vpack.c.bf16 %v460, %v460
        %v467 = vsel %vm453, %v465, 0
        %469 = vmatprep.subr.bf16.mxu0 0
        %470 = vmatpush1.bf16.msra.mxu0 %v353
        %471 = vmatprep.subr.bf16.mxu0 0
        %472 = vmatpush1.bf16.msra.mxu0 0
        %473 = vmatprep.subr.bf16.mxu0 0
        %474 = vmatpush1.bf16.msra.mxu0 0
        %475 = vmatprep.subr.bf16.mxu0 0
        %476 = vmatpush1.bf16.msra.mxu0 0
        %477 = vmatprep.subr.bf16.mxu0 0
        %478 = vmatpush1.bf16.msra.mxu0 0
        %479 = vmatprep.subr.bf16.mxu0 0
        %480 = vmatpush1.bf16.msra.mxu0 0
        %481 = vmatprep.subr.bf16.mxu0 0
        %482 = vmatpush1.bf16.msra.mxu0 0
        %483 = vmatprep.subr.bf16.mxu0 0
        %484 = vmatpush1.bf16.msra.mxu0 0
        %485 = vmatprep.subr.bf16.mxu0 0
        %486 = vmatpush1.bf16.msra.mxu0 0
        %487 = vmatprep.subr.bf16.mxu0 0
        %488 = vmatpush1.bf16.msra.mxu0 0
        %489 = vmatprep.subr.bf16.mxu0 0
        %490 = vmatpush1.bf16.msra.mxu0 0
        %491 = vmatprep.subr.bf16.mxu0 0
        %492 = vmatpush1.bf16.msra.mxu0 0
        %493 = vmatprep.subr.bf16.mxu0 0
        %494 = vmatpush1.bf16.msra.mxu0 0
        %495 = vmatprep.subr.bf16.mxu0 0
        %496 = vmatpush1.bf16.msra.mxu0 0
        %497 = vmatprep.subr.bf16.mxu0 0
        %498 = vmatpush1.bf16.msra.mxu0 0
        %499 = vmatprep.subr.bf16.mxu0 0
        %500 = vmatpush1.bf16.msra.mxu0 0
        %501 = vmatprep.mubr.bf16.mxu0 0
        %502 = vmatmul.mubr.bf16.gmra.mrb[0].mxu0 %v467
        %v503 = vpop.f32.mrb[0].mxu0
        %v504 = vadd.f32 0.0, %v503
        %v505 = vpop.f32.mrb[0].mxu0
        %v506 = vpop.f32.mrb[0].mxu0
        %v507 = vpop.f32.mrb[0].mxu0
        %508 = vdwg.mxu0
        %v509 = vrcp.pop %v464
        %v510 = vmul.f32 %v504, %v509
        %v511 = vpack.c.bf16 %v510, %v510
        %512 = vset.pattern.permute.xlu0 1
        %513 = vperm.xlu0 %512, %v431
        %v514 = vpop.permute.xlu0 %513
        %v516 = vlaneseq
        %v517 = vshrl.u32 %v516, 7
        %v518 = vsub.s32 1, %v517
        %v519 = vrot.slane %v390, %v518
        %v520 = vadd.f32 %v514, %v519
        %vm521 = vcmp.gt.f32.partialorder %v520, 0.0
        %v522 = vmul.f32 %v520, 0.2
        %v523 = vsel %vm521, %v520, %v522
        %v524 = vsel %vm451, %v523, -1e+30
        %v525 = vsel %vm453, %v524, -inf
        %526 = vmax.xlane.f32.xlu0 %v525
        %v527 = vpop.xlane.xlu0 %526
        %v528 = vsub.f32 %v524, %v527
        %v529 = vmul.f32 %v528, 1.442695
        %v530 = vpow.pop %v529
        %v531 = vsel %vm451, %v530, 0.0
        %v532 = vsel %vm453, %v531, 0.0
        %533 = vadd.xlane.f32.xlu0 %v532
        %v534 = vpop.xlane.xlu0 %533
        %v535 = vmax.f32 %v534, 1e-30
        %v536 = vpack.c.bf16 %v531, %v531
        %v538 = vsel %vm453, %v536, 0
        %540 = vmatprep.subr.bf16.mxu0 0
        %541 = vmatpush1.bf16.msra.mxu0 %v353
        %542 = vmatprep.subr.bf16.mxu0 0
        %543 = vmatpush1.bf16.msra.mxu0 0
        %544 = vmatprep.subr.bf16.mxu0 0
        %545 = vmatpush1.bf16.msra.mxu0 0
        %546 = vmatprep.subr.bf16.mxu0 0
        %547 = vmatpush1.bf16.msra.mxu0 0
        %548 = vmatprep.subr.bf16.mxu0 0
        %549 = vmatpush1.bf16.msra.mxu0 0
        %550 = vmatprep.subr.bf16.mxu0 0
        %551 = vmatpush1.bf16.msra.mxu0 0
        %552 = vmatprep.subr.bf16.mxu0 0
        %553 = vmatpush1.bf16.msra.mxu0 0
        %554 = vmatprep.subr.bf16.mxu0 0
        %555 = vmatpush1.bf16.msra.mxu0 0
        %556 = vmatprep.subr.bf16.mxu0 0
        %557 = vmatpush1.bf16.msra.mxu0 0
        %558 = vmatprep.subr.bf16.mxu0 0
        %559 = vmatpush1.bf16.msra.mxu0 0
        %560 = vmatprep.subr.bf16.mxu0 0
        %561 = vmatpush1.bf16.msra.mxu0 0
        %562 = vmatprep.subr.bf16.mxu0 0
        %563 = vmatpush1.bf16.msra.mxu0 0
        %564 = vmatprep.subr.bf16.mxu0 0
        %565 = vmatpush1.bf16.msra.mxu0 0
        %566 = vmatprep.subr.bf16.mxu0 0
        %567 = vmatpush1.bf16.msra.mxu0 0
        %568 = vmatprep.subr.bf16.mxu0 0
        %569 = vmatpush1.bf16.msra.mxu0 0
        %570 = vmatprep.subr.bf16.mxu0 0
        %571 = vmatpush1.bf16.msra.mxu0 0
        %572 = vmatprep.mubr.bf16.mxu0 0
        %573 = vmatmul.mubr.bf16.gmra.mrb[0].mxu0 %v538
        %v574 = vpop.f32.mrb[0].mxu0
        %v575 = vadd.f32 0.0, %v574
        %v576 = vpop.f32.mrb[0].mxu0
        %v577 = vpop.f32.mrb[0].mxu0
        %v578 = vpop.f32.mrb[0].mxu0
        %579 = vdwg.mxu0
        %v580 = vrcp.pop %v535
        %v581 = vmul.f32 %v575, %v580
        %v582 = vpack.c.bf16 %v581, %v581
        %v583 = vld [vmem:[#allocation10] sm:$0xf]
        %v584 = vld [vmem:[#allocation10 + $0x4] sm:$0xf]
        %v585 = vld [vmem:[#allocation10 + $0x8] sm:$0xf]
        %v586 = vld [vmem:[#allocation10 + $0xc] sm:$0xf]
        %v587 = vld [vmem:[#allocation10 + $0x10] sm:$0xf]
        %v588 = vld [vmem:[#allocation10 + $0x14] sm:$0xf]
        %v589 = vld [vmem:[#allocation10 + $0x18] sm:$0xf]
        %v590 = vld [vmem:[#allocation10 + $0x1c] sm:$0xf]
        %v591 = vld [vmem:[#allocation10 + $0x20] sm:$0xf]
        %v592 = vld [vmem:[#allocation10 + $0x24] sm:$0xf]
        %v593 = vld [vmem:[#allocation10 + $0x28] sm:$0xf]
        %v594 = vld [vmem:[#allocation10 + $0x2c] sm:$0xf]
        %v595 = vld [vmem:[#allocation10 + $0x30] sm:$0xf]
        %v596 = vld [vmem:[#allocation10 + $0x34] sm:$0xf]
        %v597 = vld [vmem:[#allocation10 + $0x38] sm:$0xf]
        %v598 = vld [vmem:[#allocation10 + $0x3c] sm:$0xf]
        %v599 = vld [vmem:[#allocation10 + $0x40] sm:$0xf]
        %v600 = vld [vmem:[#allocation10 + $0x44] sm:$0xf]
        %v601 = vld [vmem:[#allocation10 + $0x48] sm:$0xf]
        %v602 = vld [vmem:[#allocation10 + $0x4c] sm:$0xf]
        %v603 = vld [vmem:[#allocation10 + $0x50] sm:$0xf]
        %v604 = vld [vmem:[#allocation10 + $0x54] sm:$0xf]
        %v605 = vld [vmem:[#allocation10 + $0x58] sm:$0xf]
        %v606 = vld [vmem:[#allocation10 + $0x5c] sm:$0xf]
        %v607 = vld [vmem:[#allocation10 + $0x60] sm:$0xf]
        %v608 = vld [vmem:[#allocation10 + $0x64] sm:$0xf]
        %v609 = vld [vmem:[#allocation10 + $0x68] sm:$0xf]
        %v610 = vld [vmem:[#allocation10 + $0x6c] sm:$0xf]
        %v611 = vld [vmem:[#allocation10 + $0x70] sm:$0xf]
        %v612 = vld [vmem:[#allocation10 + $0x74] sm:$0xf]
        %v613 = vld [vmem:[#allocation10 + $0x78] sm:$0xf]
        %v614 = vld [vmem:[#allocation10 + $0x7c] sm:$0xf]
        %v647 = vunpack.c.l.b16 %v583
        %v648 = vunpack.c.l.b16 %v584
        %v649 = vunpack.c.l.b16 %v585
        %v650 = vunpack.c.l.b16 %v586
        %v651 = vunpack.c.l.b16 %v587
        %v652 = vunpack.c.l.b16 %v588
        %v653 = vunpack.c.l.b16 %v589
        %v654 = vunpack.c.l.b16 %v590
        %v655 = vunpack.c.l.b16 %v591
        %v656 = vunpack.c.l.b16 %v592
        %v657 = vunpack.c.l.b16 %v593
        %v658 = vunpack.c.l.b16 %v594
        %v659 = vunpack.c.l.b16 %v595
        %v660 = vunpack.c.l.b16 %v596
        %v661 = vunpack.c.l.b16 %v597
        %v662 = vunpack.c.l.b16 %v598
        %v663 = vunpack.c.l.b16 %v599
        %v664 = vunpack.c.l.b16 %v600
        %v665 = vunpack.c.l.b16 %v601
        %v666 = vunpack.c.l.b16 %v602
        %v667 = vunpack.c.l.b16 %v603
        %v668 = vunpack.c.l.b16 %v604
        %v669 = vunpack.c.l.b16 %v605
        %v670 = vunpack.c.l.b16 %v606
        %v671 = vunpack.c.l.b16 %v607
        %v672 = vunpack.c.l.b16 %v608
        %v673 = vunpack.c.l.b16 %v609
        %v674 = vunpack.c.l.b16 %v610
        %v675 = vunpack.c.l.b16 %v611
        %v676 = vunpack.c.l.b16 %v612
        %v677 = vunpack.c.l.b16 %v613
        %v678 = vunpack.c.l.b16 %v614
        %v679 = vpack.c.b16 %v648, %v647
        %v680 = vpack.c.b16 %v650, %v649
        %v681 = vpack.c.b16 %v652, %v651
        %v682 = vpack.c.b16 %v654, %v653
        %v683 = vpack.c.b16 %v656, %v655
        %v684 = vpack.c.b16 %v658, %v657
        %v685 = vpack.c.b16 %v660, %v659
        %v686 = vpack.c.b16 %v662, %v661
        %v687 = vpack.c.b16 %v664, %v663
        %v688 = vpack.c.b16 %v666, %v665
        %v689 = vpack.c.b16 %v668, %v667
        %v690 = vpack.c.b16 %v670, %v669
        %v691 = vpack.c.b16 %v672, %v671
        %v692 = vpack.c.b16 %v674, %v673
        %v693 = vpack.c.b16 %v676, %v675
        %v694 = vpack.c.b16 %v678, %v677
        %711 = vmatprep.subr.bf16.mxu0 0
        %712 = vmatpush1.bf16.msra.mxu0 %v679
        %713 = vmatprep.subr.bf16.mxu0 0
        %714 = vmatpush1.bf16.msra.mxu0 %v680
        %715 = vmatprep.subr.bf16.mxu0 0
        %716 = vmatpush1.bf16.msra.mxu0 %v681
        %717 = vmatprep.subr.bf16.mxu0 0
        %718 = vmatpush1.bf16.msra.mxu0 %v682
        %719 = vmatprep.subr.bf16.mxu0 0
        %720 = vmatpush1.bf16.msra.mxu0 %v683
        %721 = vmatprep.subr.bf16.mxu0 0
        %722 = vmatpush1.bf16.msra.mxu0 %v684
        %723 = vmatprep.subr.bf16.mxu0 0
        %724 = vmatpush1.bf16.msra.mxu0 %v685
        %725 = vmatprep.subr.bf16.mxu0 0
        %726 = vmatpush1.bf16.msra.mxu0 %v686
        %727 = vmatprep.subr.bf16.mxu0 0
        %728 = vmatpush1.bf16.msra.mxu0 %v687
        %729 = vmatprep.subr.bf16.mxu0 0
        %730 = vmatpush1.bf16.msra.mxu0 %v688
        %731 = vmatprep.subr.bf16.mxu0 0
        %732 = vmatpush1.bf16.msra.mxu0 %v689
        %733 = vmatprep.subr.bf16.mxu0 0
        %734 = vmatpush1.bf16.msra.mxu0 %v690
        %735 = vmatprep.subr.bf16.mxu0 0
        %736 = vmatpush1.bf16.msra.mxu0 %v691
        %737 = vmatprep.subr.bf16.mxu0 0
        %738 = vmatpush1.bf16.msra.mxu0 %v692
        %739 = vmatprep.subr.bf16.mxu0 0
        %740 = vmatpush1.bf16.msra.mxu0 %v693
        %741 = vmatprep.subr.bf16.mxu0 0
        %742 = vmatpush1.bf16.msra.mxu0 %v694
        %743 = vmatprep.mubr.bf16.mxu0 %v582
        %744 = vmatmul.mubr.bf16.gmra.mrb[0].mxu0 %v511
        %v745 = vpop.f32.mrb[0].mxu0
        %v746 = vadd.f32 0.0, %v745
        %v747 = vpop.f32.mrb[0].mxu0
        %v748 = vpop.f32.mrb[0].mxu0
        %v749 = vpop.f32.mrb[0].mxu0
        %750 = vdwg.mxu0
        %v751 = vmul.f32 %v746, 0.5
        %v752 = vld [vmem:[#allocation11] sm:$0x1]
        %v754 = vlaneseq
        %v755 = vshrl.u32 %v754, 7
        %v756 = vsub.s32 0, %v755
        %v757 = vrot.slane %v752, %v756
        %v759 = vadd.f32 %v751, %v757
        %v760 = vpack.c.bf16 %v759, %v759
        %761 = vst [vmem:[%s333] sm:$0xf] %v760
        %s762 = sand.u32 %s165, 1
        %s763 = scalar_lea.sflag [#allocation4], %s762
        %s764 = sand.u32 %s165, 1
        %s765 = smul.addr %s764, 4
        %s766 = scalar_lea.vmem [#allocation13], %s765
        // Predicated region
        $region69: #{geniepath_forward.7} parent=43 // pred_check
          %p767 = pneg %p175
        $region70: #{geniepath_forward.7} parent=43 // pred_check_branch
          %769 = sbr.rel (%p767) target = $region72
        $region71: #{geniepath_forward.7} parent=43 // pred_region
          %s771 = ssub.s32 64, 64
          %772 = vsyncadd %s763, %s771
          %s773 = smul.addr %s26, 64
          %s774 = scalar_lea.hbm %s6, %s773
          %s776 = sshll.u32 %s766, 4
          %s777 = int_to_ptr.vmem [resolvable:$true] %s776
          %779 = dma.vmem_to_hbm [thread:$0]  %s777, 64, %s774, %s763
        $region72: #{geniepath_forward.7} parent=43 // pred_fallthru
          _
      $region44: #{geniepath_forward.7} parent=5 // pred_fallthru
        _
      %p780 = scmp.le.s32.totalorder 2, %s21
      // Predicated region
      $region73: #{geniepath_forward.7} parent=5 // pred_check
        %p781 = pneg %p780
      $region74: #{geniepath_forward.7} parent=5 // pred_check_branch
        %783 = sbr.rel (%p781) target = $region76
      $region75: #{geniepath_forward.7} parent=5 // pred_region
        %s784 = ssub.s32 %s21, 2
        // Predicated region
        $region77: #{geniepath_forward.7} parent=75 // pred_check
          %p785 = pneg %p181
        $region78: #{geniepath_forward.7} parent=75 // pred_check_branch
          %787 = sbr.rel (%p785) target = $region80
        $region79: #{geniepath_forward.7} parent=75 // pred_region
          %s788 = sand.u32 %s166, 1
          %s789 = scalar_lea.sflag [#allocation4], %s788
          %s790 = sand.u32 %s166, 1
          %s791 = smul.addr %s790, 4
          %s792 = scalar_lea.vmem [#allocation13], %s791
          %793 = dma.done %s789, 64
        $region80: #{geniepath_forward.7} parent=75 // pred_fallthru
          _
      $region76: #{geniepath_forward.7} parent=5 // pred_fallthru
        _
    $region6: #{geniepath_forward.7} parent=1 // loop_footer
      %s25 = sadd.s32 1, %s21
    $region7: #{geniepath_forward.7} parent=1 // loop_footer_branch
      %20 = sbr.rel target = $region3
    $region8: #{geniepath_forward.7} parent=1 // loop_exit
      _
    %794 = vsyncpa [#allocation3], 1
    %s795 = scalar_lea.sflag [#allocation3], 1
    %796 = vsyncpa %s795, 1
    %797 = vsyncpa [#allocation6], 1
    %s798 = scalar_lea.sflag [#allocation6], 1
    %799 = vsyncpa %s798, 1
    %800 = vsyncpa [#allocation9], 1
    %801 = vsyncpa [#allocation12], 1
    %802 = vsyncpa [#allocation4], 1
    %s803 = scalar_lea.sflag [#allocation4], 1
    %804 = vsyncpa %s803, 1

// kernel: geniepath_forward.8
$region0: #{geniepath_forward.8}
  #allocation0 [shape = 'u32[]', space=smem, size = 0x4, offset = 0x4, fixed_abs, tag = 'smem constant byte address 0x4 - core index']
  #allocation1 [shape = 'u32[144,128]{1,0:T(1,128)}', space=vmem, size = 0x12000, scoped, tag = 'internal scratch']
  %s0 = inlined_call_operand.hbm [shape: bf16[16,128], index: 0, kind: input, shape index: {}]
  %s1 = inlined_call_operand.hbm [shape: bf16[16,16], index: 1, kind: input, shape index: {}]
  %s2 = inlined_call_operand.hbm [shape: bf16[2,128], index: 2, kind: input, shape index: {}]
  %s3 = inlined_call_operand.hbm [shape: bf16[2,128], index: 3, kind: input, shape index: {}]
  %s4 = inlined_call_operand.hbm [shape: bf16[256,128], index: 4, kind: input, shape index: {}]
  %s5 = inlined_call_operand.hbm [shape: f32[1,128], index: 5, kind: input, shape index: {}]
  %s6 = inlined_call_operand.hbm [shape: f32[16,128], index: 6, kind: input, shape index: {}, may-alias: {6,7}]
  %s7 = inlined_call_operand.hbm [shape: f32[16,128], index: 7, kind: input, shape index: {}, may-alias: {6,7}]
  %s8 = inlined_call_operand.hbm [shape: bf16[256,512], index: 8, kind: input, shape index: {}]
  %s9 = inlined_call_operand.hbm [shape: f32[1,512], index: 9, kind: input, shape index: {}]
  %s10 = inlined_call_operand.hbm [shape: f32[16,128], index: 10, kind: output, shape index: {0}]
  %s11 = inlined_call_operand.hbm [shape: f32[16,128], index: 11, kind: output, shape index: {1}]
  %12 = xla_tuple %s10, %s11
  %s13 = sld [smem:[#allocation0]]
  $region121: #{geniepath_forward.8} parent=0
    _
  %s15 = ssub.s32 1, %s13
  %s16 = scalar_select 0, %s15, %s13
  $region1: #{geniepath_forward.8} parent=0
    #allocation2 [shape = 'u8[4096]{0}', space=vmem, size = 0x1000, scoped, tag = 'input window, operand 0, single buffered']
    #allocation3 [shape = 's32[2]{0}', space=sflag, size = 0x8, scoped, tag = 'scoped memory for geniepath_forward.8']
    #allocation4 [shape = 's32[2]{0}', space=sflag, size = 0x8, scoped, tag = 'scoped memory for geniepath_forward.8']
    #allocation5 [shape = 'u8[4096]{0}', space=vmem, size = 0x1000, scoped, tag = 'input window, operand 1']
    #allocation6 [shape = 's32[2]{0}', space=sflag, size = 0x8, scoped, tag = 'scoped memory for geniepath_forward.8']
    #allocation7 [shape = 'u8[512]{0}', space=vmem, size = 0x400, scoped, tag = 'input window, operand 2, single buffered']
    #allocation8 [shape = 'u8[512]{0}', space=vmem, size = 0x400, scoped, tag = 'input window, operand 3, single buffered']
    #allocation9 [shape = 's32[1]{0}', space=sflag, size = 0x4, scoped, tag = 'scoped memory for geniepath_forward.8']
    #allocation10 [shape = 'u8[65536]{0}', space=vmem, size = 0x10000, scoped, tag = 'input window, operand 4, single buffered']
    #allocation11 [shape = 'u8[512]{0}', space=vmem, size = 0x400, scoped, tag = 'input window, operand 5, single buffered']
    #allocation12 [shape = 's32[1]{0}', space=sflag, size = 0x4, scoped, tag = 'scoped memory for geniepath_forward.8']
    #allocation13 [shape = 'u8[8192]{0}', space=vmem, size = 0x2000, scoped, tag = 'input window, operand 6']
    #allocation14 [shape = 'u8[8192]{0}', space=vmem, size = 0x2000, scoped, tag = 'input window, operand 7']
    #allocation15 [shape = 'u8[262144]{0}', space=vmem, size = 0x40000, scoped, tag = 'input window, operand 8, single buffered']
    #allocation16 [shape = 'u8[2048]{0}', space=vmem, size = 0x800, scoped, tag = 'input window, operand 9, single buffered']
    #allocation17 [shape = 'u8[8192]{0}', space=vmem, size = 0x2000, scoped, tag = 'output window, operand 0']
    #allocation18 [shape = 'u8[8192]{0}', space=vmem, size = 0x2000, scoped, tag = 'output window, operand 1']
    #allocation19 [shape = 's32[2]{0}', space=sflag, size = 0x8, scoped, tag = 'scoped memory for geniepath_forward.8']
    %17 = vsyncpa [#allocation3], 0
    %18 = vsyncpa [#allocation6], 0
    %s19 = scalar_lea.sflag [#allocation6], 1
    %20 = vsyncpa %s19, 0
    %21 = vsyncpa [#allocation9], 0
    %22 = vsyncpa [#allocation12], 0
    %23 = vsyncpa [#allocation4], 0
    %s24 = scalar_lea.sflag [#allocation4], 1
    %25 = vsyncpa %s24, 0
    %26 = vsyncpa [#allocation19], 0
    %s27 = scalar_lea.sflag [#allocation19], 1
    %28 = vsyncpa %s27, 0
    loop: start=0, step=1, limit=4
    $region2: #{geniepath_forward.8} parent=1 // loop_pre_header
      _
    $region3: #{geniepath_forward.8} parent=1 // loop_header
      %s30 = sphi 0, %s34
      %p31 = scmp.ge.s32.totalorder %s30, 4
      %s38 = sphi 0, %s38
      %s40 = sphi 0, %s38
      %s41 = sphi 0, %s40
      %s55 = sphi 0, %s41
      %s61 = sphi 0, %s63
      %s64 = sphi 0, %s61
      %s65 = sphi 0, %s64
      %s81 = sphi 0, %s65
      %s85 = sphi 0, %s85
      %s87 = sphi 0, %s85
      %s88 = sphi 0, %s87
      %s102 = sphi 0, %s88
      %s106 = sphi 0, %s106
      %s108 = sphi 0, %s106
      %s109 = sphi 0, %s108
      %s123 = sphi 0, %s109
      %s127 = sphi 0, %s127
      %s129 = sphi 0, %s127
      %s130 = sphi 0, %s129
      %s144 = sphi 0, %s130
      %s148 = sphi 0, %s148
      %s150 = sphi 0, %s148
      %s151 = sphi 0, %s150
      %s165 = sphi 0, %s151
      %s171 = sphi 0, %s173
      %s174 = sphi 0, %s171
      %s175 = sphi 0, %s174
      %s191 = sphi 0, %s175
      %s197 = sphi 0, %s199
      %s200 = sphi 0, %s197
      %s201 = sphi 0, %s200
      %s217 = sphi 0, %s201
      %s221 = sphi 0, %s221
      %s223 = sphi 0, %s221
      %s224 = sphi 0, %s223
      %s238 = sphi 0, %s224
      %s242 = sphi 0, %s242
      %s244 = sphi 0, %s242
      %s245 = sphi 0, %s244
      %s259 = sphi 0, %s245
      %s265 = sphi 0, %s267
      %s268 = sphi 0, %s265
      %s269 = sphi 0, %s268
      %s285 = sphi 0, %s269
      %s291 = sphi 0, %s293
      %s294 = sphi 0, %s291
      %s295 = sphi 0, %s294
      %s311 = sphi 0, %s295
    $region4: #{geniepath_forward.8} parent=1 // loop_header_branch
      %33 = sbr.rel (%p31) target = $region8
    $region5: #{geniepath_forward.8} parent=1 // loop_body
      %s35 = ssub.s32 %s30, 1
      %s36 = ssub.s32 %s30, 2
      %s37 = sadd.s32 %s30, 1
      %s39 = sadd.s32 %s38, 1
      %p42 = scmp.eq.s32.totalorder %s30, 1
      %p43 = scmp.ne.s32.totalorder %s38, %s40
      %p44 = scmp.eq.s32.totalorder %s30, 0
      %p45 = por %p43, %p44
      %p46 = scmp.ne.s32.totalorder %s38, %s40
      %p47 = scmp.eq.s32.totalorder %s35, 1
      %p48 = por %p46, %p47
      %p49 = scmp.ne.s32.totalorder %s40, %s41
      %p50 = scmp.eq.s32.totalorder %s35, 0
      %p51 = por %p49, %p50
      %p52 = scmp.ne.s32.totalorder %s40, %s41
      %p53 = scmp.eq.s32.totalorder %s36, 1
      %p54 = por %p52, %p53
      %p56 = scmp.ne.s32.totalorder %s41, %s55
      %p57 = scmp.eq.s32.totalorder %s36, 0
      %p58 = por %p56, %p57
      %s59 = ssub.s32 %s30, %s37
      %p60 = scmp.eq.s32.totalorder %s59, 0
      %s62 = sadd.s32 %s61, 1
      %s63 = scalar_select %p60, %s61, %s62
      %p66 = pneg %p60
      %p67 = scmp.eq.s32.totalorder %s30, 1
      %p68 = por %p66, %p67
      %p69 = scmp.ne.s32.totalorder %s61, %s64
      %p70 = scmp.eq.s32.totalorder %s30, 0
      %p71 = por %p69, %p70
      %p72 = scmp.ne.s32.totalorder %s61, %s64
      %p73 = scmp.eq.s32.totalorder %s35, 1
      %p74 = por %p72, %p73
      %p75 = scmp.ne.s32.totalorder %s64, %s65
      %p76 = scmp.eq.s32.totalorder %s35, 0
      %p77 = por %p75, %p76
      %p78 = scmp.ne.s32.totalorder %s64, %s65
      %p79 = scmp.eq.s32.totalorder %s36, 1
      %p80 = por %p78, %p79
      %p82 = scmp.ne.s32.totalorder %s65, %s81
      %p83 = scmp.eq.s32.totalorder %s36, 0
      %p84 = por %p82, %p83
      %s86 = sadd.s32 %s85, 1
      %p89 = scmp.eq.s32.totalorder %s30, 1
      %p90 = scmp.ne.s32.totalorder %s85, %s87
      %p91 = scmp.eq.s32.totalorder %s30, 0
      %p92 = por %p90, %p91
      %p93 = scmp.ne.s32.totalorder %s85, %s87
      %p94 = scmp.eq.s32.totalorder %s35, 1
      %p95 = por %p93, %p94
      %p96 = scmp.ne.s32.totalorder %s87, %s88
      %p97 = scmp.eq.s32.totalorder %s35, 0
      %p98 = por %p96, %p97
      %p99 = scmp.ne.s32.totalorder %s87, %s88
      %p100 = scmp.eq.s32.totalorder %s36, 1
      %p101 = por %p99, %p100
      %p103 = scmp.ne.s32.totalorder %s88, %s102
      %p104 = scmp.eq.s32.totalorder %s36, 0
      %p105 = por %p103, %p104
      %s107 = sadd.s32 %s106, 1
      %p110 = scmp.eq.s32.totalorder %s30, 1
      %p111 = scmp.ne.s32.totalorder %s106, %s108
      %p112 = scmp.eq.s32.totalorder %s30, 0
      %p113 = por %p111, %p112
      %p114 = scmp.ne.s32.totalorder %s106, %s108
      %p115 = scmp.eq.s32.totalorder %s35, 1
      %p116 = por %p114, %p115
      %p117 = scmp.ne.s32.totalorder %s108, %s109
      %p118 = scmp.eq.s32.totalorder %s35, 0
      %p119 = por %p117, %p118
      %p120 = scmp.ne.s32.totalorder %s108, %s109
      %p121 = scmp.eq.s32.totalorder %s36, 1
      %p122 = por %p120, %p121
      %p124 = scmp.ne.s32.totalorder %s109, %s123
      %p125 = scmp.eq.s32.totalorder %s36, 0
      %p126 = por %p124, %p125
      %s128 = sadd.s32 %s127, 1
      %p131 = scmp.eq.s32.totalorder %s30, 1
      %p132 = scmp.ne.s32.totalorder %s127, %s129
      %p133 = scmp.eq.s32.totalorder %s30, 0
      %p134 = por %p132, %p133
      %p135 = scmp.ne.s32.totalorder %s127, %s129
      %p136 = scmp.eq.s32.totalorder %s35, 1
      %p137 = por %p135, %p136
      %p138 = scmp.ne.s32.totalorder %s129, %s130
      %p139 = scmp.eq.s32.totalorder %s35, 0
      %p140 = por %p138, %p139
      %p141 = scmp.ne.s32.totalorder %s129, %s130
      %p142 = scmp.eq.s32.totalorder %s36, 1
      %p143 = por %p141, %p142
      %p145 = scmp.ne.s32.totalorder %s130, %s144
      %p146 = scmp.eq.s32.totalorder %s36, 0
      %p147 = por %p145, %p146
      %s149 = sadd.s32 %s148, 1
      %p152 = scmp.eq.s32.totalorder %s30, 1
      %p153 = scmp.ne.s32.totalorder %s148, %s150
      %p154 = scmp.eq.s32.totalorder %s30, 0
      %p155 = por %p153, %p154
      %p156 = scmp.ne.s32.totalorder %s148, %s150
      %p157 = scmp.eq.s32.totalorder %s35, 1
      %p158 = por %p156, %p157
      %p159 = scmp.ne.s32.totalorder %s150, %s151
      %p160 = scmp.eq.s32.totalorder %s35, 0
      %p161 = por %p159, %p160
      %p162 = scmp.ne.s32.totalorder %s150, %s151
      %p163 = scmp.eq.s32.totalorder %s36, 1
      %p164 = por %p162, %p163
      %p166 = scmp.ne.s32.totalorder %s151, %s165
      %p167 = scmp.eq.s32.totalorder %s36, 0
      %p168 = por %p166, %p167
      %s169 = ssub.s32 %s30, %s37
      %p170 = scmp.eq.s32.totalorder %s169, 0
      %s172 = sadd.s32 %s171, 1
      %s173 = scalar_select %p170, %s171, %s172
      %p176 = pneg %p170
      %p177 = scmp.eq.s32.totalorder %s30, 1
      %p178 = por %p176, %p177
      %p179 = scmp.ne.s32.totalorder %s171, %s174
      %p180 = scmp.eq.s32.totalorder %s30, 0
      %p181 = por %p179, %p180
      %p182 = scmp.ne.s32.totalorder %s171, %s174
      %p183 = scmp.eq.s32.totalorder %s35, 1
      %p184 = por %p182, %p183
      %p185 = scmp.ne.s32.totalorder %s174, %s175
      %p186 = scmp.eq.s32.totalorder %s35, 0
      %p187 = por %p185, %p186
      %p188 = scmp.ne.s32.totalorder %s174, %s175
      %p189 = scmp.eq.s32.totalorder %s36, 1
      %p190 = por %p188, %p189
      %p192 = scmp.ne.s32.totalorder %s175, %s191
      %p193 = scmp.eq.s32.totalorder %s36, 0
      %p194 = por %p192, %p193
      %s195 = ssub.s32 %s30, %s37
      %p196 = scmp.eq.s32.totalorder %s195, 0
      %s198 = sadd.s32 %s197, 1
      %s199 = scalar_select %p196, %s197, %s198
      %p202 = pneg %p196
      %p203 = scmp.eq.s32.totalorder %s30, 1
      %p204 = por %p202, %p203
      %p205 = scmp.ne.s32.totalorder %s197, %s200
      %p206 = scmp.eq.s32.totalorder %s30, 0
      %p207 = por %p205, %p206
      %p208 = scmp.ne.s32.totalorder %s197, %s200
      %p209 = scmp.eq.s32.totalorder %s35, 1
      %p210 = por %p208, %p209
      %p211 = scmp.ne.s32.totalorder %s200, %s201
      %p212 = scmp.eq.s32.totalorder %s35, 0
      %p213 = por %p211, %p212
      %p214 = scmp.ne.s32.totalorder %s200, %s201
      %p215 = scmp.eq.s32.totalorder %s36, 1
      %p216 = por %p214, %p215
      %p218 = scmp.ne.s32.totalorder %s201, %s217
      %p219 = scmp.eq.s32.totalorder %s36, 0
      %p220 = por %p218, %p219
      %s222 = sadd.s32 %s221, 1
      %p225 = scmp.eq.s32.totalorder %s30, 1
      %p226 = scmp.ne.s32.totalorder %s221, %s223
      %p227 = scmp.eq.s32.totalorder %s30, 0
      %p228 = por %p226, %p227
      %p229 = scmp.ne.s32.totalorder %s221, %s223
      %p230 = scmp.eq.s32.totalorder %s35, 1
      %p231 = por %p229, %p230
      %p232 = scmp.ne.s32.totalorder %s223, %s224
      %p233 = scmp.eq.s32.totalorder %s35, 0
      %p234 = por %p232, %p233
      %p235 = scmp.ne.s32.totalorder %s223, %s224
      %p236 = scmp.eq.s32.totalorder %s36, 1
      %p237 = por %p235, %p236
      %p239 = scmp.ne.s32.totalorder %s224, %s238
      %p240 = scmp.eq.s32.totalorder %s36, 0
      %p241 = por %p239, %p240
      %s243 = sadd.s32 %s242, 1
      %p246 = scmp.eq.s32.totalorder %s30, 1
      %p247 = scmp.ne.s32.totalorder %s242, %s244
      %p248 = scmp.eq.s32.totalorder %s30, 0
      %p249 = por %p247, %p248
      %p250 = scmp.ne.s32.totalorder %s242, %s244
      %p251 = scmp.eq.s32.totalorder %s35, 1
      %p252 = por %p250, %p251
      %p253 = scmp.ne.s32.totalorder %s244, %s245
      %p254 = scmp.eq.s32.totalorder %s35, 0
      %p255 = por %p253, %p254
      %p256 = scmp.ne.s32.totalorder %s244, %s245
      %p257 = scmp.eq.s32.totalorder %s36, 1
      %p258 = por %p256, %p257
      %p260 = scmp.ne.s32.totalorder %s245, %s259
      %p261 = scmp.eq.s32.totalorder %s36, 0
      %p262 = por %p260, %p261
      %s263 = ssub.s32 %s30, %s37
      %p264 = scmp.eq.s32.totalorder %s263, 0
      %s266 = sadd.s32 %s265, 1
      %s267 = scalar_select %p264, %s265, %s266
      %p270 = pneg %p264
      %p271 = scmp.eq.s32.totalorder %s30, 1
      %p272 = por %p270, %p271
      %p273 = scmp.ne.s32.totalorder %s265, %s268
      %p274 = scmp.eq.s32.totalorder %s30, 0
      %p275 = por %p273, %p274
      %p276 = scmp.ne.s32.totalorder %s265, %s268
      %p277 = scmp.eq.s32.totalorder %s35, 1
      %p278 = por %p276, %p277
      %p279 = scmp.ne.s32.totalorder %s268, %s269
      %p280 = scmp.eq.s32.totalorder %s35, 0
      %p281 = por %p279, %p280
      %p282 = scmp.ne.s32.totalorder %s268, %s269
      %p283 = scmp.eq.s32.totalorder %s36, 1
      %p284 = por %p282, %p283
      %p286 = scmp.ne.s32.totalorder %s269, %s285
      %p287 = scmp.eq.s32.totalorder %s36, 0
      %p288 = por %p286, %p287
      %s289 = ssub.s32 %s30, %s37
      %p290 = scmp.eq.s32.totalorder %s289, 0
      %s292 = sadd.s32 %s291, 1
      %s293 = scalar_select %p290, %s291, %s292
      %p296 = pneg %p290
      %p297 = scmp.eq.s32.totalorder %s30, 1
      %p298 = por %p296, %p297
      %p299 = scmp.ne.s32.totalorder %s291, %s294
      %p300 = scmp.eq.s32.totalorder %s30, 0
      %p301 = por %p299, %p300
      %p302 = scmp.ne.s32.totalorder %s291, %s294
      %p303 = scmp.eq.s32.totalorder %s35, 1
      %p304 = por %p302, %p303
      %p305 = scmp.ne.s32.totalorder %s294, %s295
      %p306 = scmp.eq.s32.totalorder %s35, 0
      %p307 = por %p305, %p306
      %p308 = scmp.ne.s32.totalorder %s294, %s295
      %p309 = scmp.eq.s32.totalorder %s36, 1
      %p310 = por %p308, %p309
      %p312 = scmp.ne.s32.totalorder %s295, %s311
      %p313 = scmp.eq.s32.totalorder %s36, 0
      %p314 = por %p312, %p313
      %p315 = scmp.le.s32.totalorder 1, %s30
      %p316 = scmp.lt.s32.totalorder %s30, 3
      %p317 = pnand %p315, %p316
      %p318 = pneg %p317
      // Predicated region
      $region9: #{geniepath_forward.8} parent=5 // pred_check
        _
      $region10: #{geniepath_forward.8} parent=5 // pred_check_branch
        %320 = sbr.rel (%p317) target = $region12
      $region11: #{geniepath_forward.8} parent=5 // pred_region
        %s321 = ssub.s32 %s30, 1
        // Predicated region
        $region13: #{geniepath_forward.8} parent=11 // pred_check
          %p322 = pneg %p51
        $region14: #{geniepath_forward.8} parent=11 // pred_check_branch
          %324 = sbr.rel (%p322) target = $region16
        $region15: #{geniepath_forward.8} parent=11 // pred_region
          %s326 = ssub.s32 128, 128
          %327 = vsyncadd [#allocation3], %s326
          %s328 = sshll.u32 [#allocation2], 4
          %s329 = int_to_ptr.vmem [resolvable:$true] %s328
          %334 = dma.hbm_to_vmem [thread:$0]  %s0, 128, %s329, [#allocation3], 64, 64, 4
        $region16: #{geniepath_forward.8} parent=11 // pred_fallthru
          _
        // Predicated region
        $region17: #{geniepath_forward.8} parent=11 // pred_check
          %p335 = pneg %p98
        $region18: #{geniepath_forward.8} parent=11 // pred_check_branch
          %337 = sbr.rel (%p335) target = $region20
        $region19: #{geniepath_forward.8} parent=11 // pred_region
          %s339 = ssub.s32 16, 16
          %340 = vsyncadd [#allocation6], %s339
          %s342 = sshll.u32 [#allocation7], 4
          %s343 = int_to_ptr.vmem [resolvable:$true] %s342
          %345 = dma.hbm_to_vmem [thread:$0]  %s2, 16, %s343, [#allocation6]
        $region20: #{geniepath_forward.8} parent=11 // pred_fallthru
          _
        // Predicated region
        $region21: #{geniepath_forward.8} parent=11 // pred_check
          %p346 = pneg %p119
        $region22: #{geniepath_forward.8} parent=11 // pred_check_branch
          %348 = sbr.rel (%p346) target = $region24
        $region23: #{geniepath_forward.8} parent=11 // pred_region
          %s350 = ssub.s32 16, 16
          %351 = vsyncadd [#allocation9], %s350
          %s353 = sshll.u32 [#allocation8], 4
          %s354 = int_to_ptr.vmem [resolvable:$true] %s353
          %356 = dma.hbm_to_vmem [thread:$0]  %s3, 16, %s354, [#allocation9]
        $region24: #{geniepath_forward.8} parent=11 // pred_fallthru
          _
        // Predicated region
        $region25: #{geniepath_forward.8} parent=11 // pred_check
          %p357 = pneg %p140
        $region26: #{geniepath_forward.8} parent=11 // pred_check_branch
          %359 = sbr.rel (%p357) target = $region28
        $region27: #{geniepath_forward.8} parent=11 // pred_region
          %s361 = ssub.s32 2048, 2048
          %362 = vsyncadd [#allocation9], %s361
          %s363 = sshll.u32 [#allocation10], 4
          %s364 = int_to_ptr.vmem [resolvable:$true] %s363
          %369 = dma.hbm_to_vmem [thread:$0]  %s4, 2048, %s364, [#allocation9], 64, 64, 4
        $region28: #{geniepath_forward.8} parent=11 // pred_fallthru
          _
        // Predicated region
        $region29: #{geniepath_forward.8} parent=11 // pred_check
          %p370 = pneg %p161
        $region30: #{geniepath_forward.8} parent=11 // pred_check_branch
          %372 = sbr.rel (%p370) target = $region32
        $region31: #{geniepath_forward.8} parent=11 // pred_region
          %s374 = ssub.s32 16, 16
          %375 = vsyncadd [#allocation12], %s374
          %s377 = sshll.u32 [#allocation11], 4
          %s378 = int_to_ptr.vmem [resolvable:$true] %s377
          %380 = dma.hbm_to_vmem [thread:$0]  %s5, 16, %s378, [#allocation12]
        $region32: #{geniepath_forward.8} parent=11 // pred_fallthru
          _
        // Predicated region
        $region33: #{geniepath_forward.8} parent=11 // pred_check
          %p381 = pneg %p234
        $region34: #{geniepath_forward.8} parent=11 // pred_check_branch
          %383 = sbr.rel (%p381) target = $region36
        $region35: #{geniepath_forward.8} parent=11 // pred_region
          %s385 = ssub.s32 8192, 8192
          %386 = vsyncadd [#allocation9], %s385
          %s387 = sshll.u32 [#allocation15], 4
          %s388 = int_to_ptr.vmem [resolvable:$true] %s387
          %393 = dma.hbm_to_vmem [thread:$0]  %s8, 8192, %s388, [#allocation9], 256, 256, 16
        $region36: #{geniepath_forward.8} parent=11 // pred_fallthru
          _
        // Predicated region
        $region37: #{geniepath_forward.8} parent=11 // pred_check
          %p394 = pneg %p255
        $region38: #{geniepath_forward.8} parent=11 // pred_check_branch
          %396 = sbr.rel (%p394) target = $region40
        $region39: #{geniepath_forward.8} parent=11 // pred_region
          %s398 = ssub.s32 64, 64
          %399 = vsyncadd [#allocation12], %s398
          %s401 = sshll.u32 [#allocation16], 4
          %s402 = int_to_ptr.vmem [resolvable:$true] %s401
          %404 = dma.hbm_to_vmem [thread:$0]  %s9, 64, %s402, [#allocation12]
        $region40: #{geniepath_forward.8} parent=11 // pred_fallthru
          _
      $region12: #{geniepath_forward.8} parent=5 // pred_fallthru
        _
      %p405 = scmp.lt.s32.totalorder %s30, 2
      // Predicated region
      $region41: #{geniepath_forward.8} parent=5 // pred_check
        %p406 = pneg %p405
      $region42: #{geniepath_forward.8} parent=5 // pred_check_branch
        %408 = sbr.rel (%p406) target = $region44
      $region43: #{geniepath_forward.8} parent=5 // pred_region
        // Predicated region
        $region45: #{geniepath_forward.8} parent=43 // pred_check
          %p409 = pneg %p71
        $region46: #{geniepath_forward.8} parent=43 // pred_check_branch
          %411 = sbr.rel (%p409) target = $region48
        $region47: #{geniepath_forward.8} parent=43 // pred_region
          %s412 = sand.u32 %s30, 1
          %s413 = scalar_lea.sflag [#allocation6], %s412
          %s414 = sand.u32 %s61, 1
          %s415 = smul.addr %s414, 4
          %s416 = scalar_lea.vmem [#allocation5], %s415
          %s418 = ssub.s32 64, 64
          %419 = vsyncadd %s413, %s418
          %s420 = smul.addr %s30, 64
          %s421 = scalar_lea.hbm %s1, %s420
          %s423 = sshll.u32 %s416, 4
          %s424 = int_to_ptr.vmem [resolvable:$true] %s423
          %426 = dma.hbm_to_vmem [thread:$0]  %s421, 64, %s424, %s413
        $region48: #{geniepath_forward.8} parent=43 // pred_fallthru
          _
        // Predicated region
        $region49: #{geniepath_forward.8} parent=43 // pred_check
          %p427 = pneg %p181
        $region50: #{geniepath_forward.8} parent=43 // pred_check_branch
          %429 = sbr.rel (%p427) target = $region52
        $region51: #{geniepath_forward.8} parent=43 // pred_region
          %s430 = sand.u32 %s30, 1
          %s431 = scalar_lea.sflag [#allocation3], %s430
          %s432 = sand.u32 %s171, 1
          %s433 = smul.addr %s432, 8
          %s434 = scalar_lea.vmem [#allocation13], %s433
          %s436 = ssub.s32 128, 128
          %437 = vsyncadd %s431, %s436
          %s438 = smul.addr %s30, 128
          %s439 = scalar_lea.hbm %s6, %s438
          %s441 = sshll.u32 %s434, 4
          %s442 = int_to_ptr.vmem [resolvable:$true] %s441
          %444 = dma.hbm_to_vmem [thread:$0]  %s439, 128, %s442, %s431
        $region52: #{geniepath_forward.8} parent=43 // pred_fallthru
          _
        // Predicated region
        $region53: #{geniepath_forward.8} parent=43 // pred_check
          %p445 = pneg %p207
        $region54: #{geniepath_forward.8} parent=43 // pred_check_branch
          %447 = sbr.rel (%p445) target = $region56
        $region55: #{geniepath_forward.8} parent=43 // pred_region
          %s448 = sand.u32 %s30, 1
          %s449 = scalar_lea.sflag [#allocation6], %s448
          %s450 = sand.u32 %s197, 1
          %s451 = smul.addr %s450, 8
          %s452 = scalar_lea.vmem [#allocation14], %s451
          %s454 = ssub.s32 128, 128
          %455 = vsyncadd %s449, %s454
          %s456 = smul.addr %s30, 128
          %s457 = scalar_lea.hbm %s7, %s456
          %s459 = sshll.u32 %s452, 4
          %s460 = int_to_ptr.vmem [resolvable:$true] %s459
          %462 = dma.hbm_to_vmem [thread:$0]  %s457, 128, %s460, %s449
        $region56: #{geniepath_forward.8} parent=43 // pred_fallthru
          _
      $region44: #{geniepath_forward.8} parent=5 // pred_fallthru
        _
      %p463 = scmp.le.s32.totalorder 1, %s30
      %p464 = scmp.lt.s32.totalorder %s30, 3
      %p465 = pnand %p463, %p464
      %p466 = pneg %p465
      // Predicated region
      $region57: #{geniepath_forward.8} parent=5 // pred_check
        _
      $region58: #{geniepath_forward.8} parent=5 // pred_check_branch
        %468 = sbr.rel (%p465) target = $region60
      $region59: #{geniepath_forward.8} parent=5 // pred_region
        %s469 = ssub.s32 %s30, 1
        // Predicated region
        $region61: #{geniepath_forward.8} parent=59 // pred_check
          %p470 = pneg %p51
        $region62: #{geniepath_forward.8} parent=59 // pred_check_branch
          %472 = sbr.rel (%p470) target = $region64
        $region63: #{geniepath_forward.8} parent=59 // pred_region
          %473 = dma.done [#allocation3], 128
        $region64: #{geniepath_forward.8} parent=59 // pred_fallthru
          _
        %s474 = sand.u32 %s35, 1
        %s475 = scalar_lea.sflag [#allocation6], %s474
        %s476 = sand.u32 %s64, 1
        %s477 = smul.addr %s476, 4
        %s478 = scalar_lea.vmem [#allocation5], %s477
        // Predicated region
        $region65: #{geniepath_forward.8} parent=59 // pred_check
          %p479 = pneg %p77
        $region66: #{geniepath_forward.8} parent=59 // pred_check_branch
          %481 = sbr.rel (%p479) target = $region68
        $region67: #{geniepath_forward.8} parent=59 // pred_region
          %482 = dma.done %s475, 64
        $region68: #{geniepath_forward.8} parent=59 // pred_fallthru
          _
        // Predicated region
        $region69: #{geniepath_forward.8} parent=59 // pred_check
          %p483 = pneg %p98
        $region70: #{geniepath_forward.8} parent=59 // pred_check_branch
          %485 = sbr.rel (%p483) target = $region72
        $region71: #{geniepath_forward.8} parent=59 // pred_region
          %486 = dma.done [#allocation6], 16
        $region72: #{geniepath_forward.8} parent=59 // pred_fallthru
          _
        // Predicated region
        $region73: #{geniepath_forward.8} parent=59 // pred_check
          %p487 = pneg %p119
        $region74: #{geniepath_forward.8} parent=59 // pred_check_branch
          %489 = sbr.rel (%p487) target = $region76
        $region75: #{geniepath_forward.8} parent=59 // pred_region
          %490 = dma.done [#allocation9], 16
        $region76: #{geniepath_forward.8} parent=59 // pred_fallthru
          _
        // Predicated region
        $region77: #{geniepath_forward.8} parent=59 // pred_check
          %p491 = pneg %p140
        $region78: #{geniepath_forward.8} parent=59 // pred_check_branch
          %493 = sbr.rel (%p491) target = $region80
        $region79: #{geniepath_forward.8} parent=59 // pred_region
          %494 = dma.done [#allocation9], 2048
        $region80: #{geniepath_forward.8} parent=59 // pred_fallthru
          _
        // Predicated region
        $region81: #{geniepath_forward.8} parent=59 // pred_check
          %p495 = pneg %p161
        $region82: #{geniepath_forward.8} parent=59 // pred_check_branch
          %497 = sbr.rel (%p495) target = $region84
        $region83: #{geniepath_forward.8} parent=59 // pred_region
          %498 = dma.done [#allocation12], 16
        $region84: #{geniepath_forward.8} parent=59 // pred_fallthru
          _
        %s499 = sand.u32 %s35, 1
        %s500 = scalar_lea.sflag [#allocation3], %s499
        %s501 = sand.u32 %s174, 1
        %s502 = smul.addr %s501, 8
        %s503 = scalar_lea.vmem [#allocation13], %s502
        // Predicated region
        $region85: #{geniepath_forward.8} parent=59 // pred_check
          %p504 = pneg %p187
        $region86: #{geniepath_forward.8} parent=59 // pred_check_branch
          %506 = sbr.rel (%p504) target = $region88
        $region87: #{geniepath_forward.8} parent=59 // pred_region
          %507 = dma.done %s500, 128
        $region88: #{geniepath_forward.8} parent=59 // pred_fallthru
          _
        %s508 = sand.u32 %s35, 1
        %s509 = scalar_lea.sflag [#allocation6], %s508
        %s510 = sand.u32 %s200, 1
        %s511 = smul.addr %s510, 8
        %s512 = scalar_lea.vmem [#allocation14], %s511
        // Predicated region
        $region89: #{geniepath_forward.8} parent=59 // pred_check
          %p513 = pneg %p213
        $region90: #{geniepath_forward.8} parent=59 // pred_check_branch
          %515 = sbr.rel (%p513) target = $region92
        $region91: #{geniepath_forward.8} parent=59 // pred_region
          %516 = dma.done %s509, 128
        $region92: #{geniepath_forward.8} parent=59 // pred_fallthru
          _
        // Predicated region
        $region93: #{geniepath_forward.8} parent=59 // pred_check
          %p517 = pneg %p234
        $region94: #{geniepath_forward.8} parent=59 // pred_check_branch
          %519 = sbr.rel (%p517) target = $region96
        $region95: #{geniepath_forward.8} parent=59 // pred_region
          %520 = dma.done [#allocation9], 8192
        $region96: #{geniepath_forward.8} parent=59 // pred_fallthru
          _
        // Predicated region
        $region97: #{geniepath_forward.8} parent=59 // pred_check
          %p521 = pneg %p255
        $region98: #{geniepath_forward.8} parent=59 // pred_check_branch
          %523 = sbr.rel (%p521) target = $region100
        $region99: #{geniepath_forward.8} parent=59 // pred_region
          %524 = dma.done [#allocation12], 64
        $region100: #{geniepath_forward.8} parent=59 // pred_fallthru
          _
        %p525 = pneg %p51
        %p526 = pneg %p48
        %s527 = sand.u32 %s35, 1
        %s528 = scalar_lea.sflag [#allocation6], %s527
        %s529 = sand.u32 %s64, 1
        %s530 = smul.addr %s529, 4
        %s531 = scalar_lea.vmem [#allocation5], %s530
        %p532 = pneg %p77
        %p533 = pneg %p74
        %p534 = pneg %p98
        %p535 = pneg %p95
        %p536 = pneg %p119
        %p537 = pneg %p116
        %p538 = pneg %p140
        %p539 = pneg %p137
        %p540 = pneg %p161
        %p541 = pneg %p158
        %s542 = sand.u32 %s35, 1
        %s543 = scalar_lea.sflag [#allocation3], %s542
        %s544 = sand.u32 %s174, 1
        %s545 = smul.addr %s544, 8
        %s546 = scalar_lea.vmem [#allocation13], %s545
        %p547 = pneg %p187
        %p548 = pneg %p184
        %s549 = sand.u32 %s35, 1
        %s550 = scalar_lea.sflag [#allocation6], %s549
        %s551 = sand.u32 %s200, 1
        %s552 = smul.addr %s551, 8
        %s553 = scalar_lea.vmem [#allocation14], %s552
        %p554 = pneg %p213
        %p555 = pneg %p210
        %p556 = pneg %p234
        %p557 = pneg %p231
        %p558 = pneg %p255
        %p559 = pneg %p252
        %p560 = pneg %p281
        %p561 = pneg %p278
        %s562 = sand.u32 %s268, 1
        %s563 = scalar_lea.sflag [#allocation4], %s562
        %s564 = sand.u32 %s268, 1
        %s565 = smul.addr %s564, 8
        %s566 = scalar_lea.vmem [#allocation17], %s565
        %p567 = pneg %p307
        %p568 = pneg %p304
        %s569 = sand.u32 %s294, 1
        %s570 = scalar_lea.sflag [#allocation19], %s569
        %s571 = sand.u32 %s294, 1
        %s572 = smul.addr %s571, 8
        %s573 = scalar_lea.vmem [#allocation18], %s572
        %s578 = smul.u32 %s35, 8
        %v579 = vld [vmem:[#allocation2] sm:$0xf]
        %v580 = vld [vmem:[#allocation2 + $0x4] sm:$0xf]
        %s581 = sshra.s32 %s578, 3
        %s582 = sand.u32 %s578, 7
        %s583 = smul.addr %s581, 4
        %s584 = scalar_lea.vmem [#allocation2], %s583
        %v585 = vld [vmem:[%s584] sm:$0xf]
        %v586 = vld [vmem:[%s478] sm:$0xf]
        %vm587 = vcmp.gt.bf16.partialorder %v586, 1056980736
        %v588 = vld [vmem:[#allocation7] sm:$0x1]
        %v591 = vunpack.c.l.b16 %v579
        %v592 = vunpack.c.l.b16 %v580
        %v593 = vpack.c.b16 %v592, %v591
        %595 = vmatprep.subr.bf16.mxu0 0
        %596 = vmatpush1.bf16.xpose.msra.mxu0 %v593
        %597 = vmatprep.subr.bf16.mxu0 0
        %598 = vmatpush1.bf16.xpose.msra.mxu0 0
        %599 = vmatprep.subr.bf16.mxu0 0
        %600 = vmatpush1.bf16.xpose.msra.mxu0 0
        %601 = vmatprep.subr.bf16.mxu0 0
        %602 = vmatpush1.bf16.xpose.msra.mxu0 0
        %603 = vmatprep.subr.bf16.mxu0 0
        %604 = vmatpush1.bf16.xpose.msra.mxu0 0
        %605 = vmatprep.subr.bf16.mxu0 0
        %606 = vmatpush1.bf16.xpose.msra.mxu0 0
        %607 = vmatprep.subr.bf16.mxu0 0
        %608 = vmatpush1.bf16.xpose.msra.mxu0 0
        %609 = vmatprep.subr.bf16.mxu0 0
        %610 = vmatpush1.bf16.xpose.msra.mxu0 0
        %611 = vmatprep.subr.bf16.mxu0 0
        %612 = vmatpush1.bf16.xpose.msra.mxu0 0
        %613 = vmatprep.subr.bf16.mxu0 0
        %614 = vmatpush1.bf16.xpose.msra.mxu0 0
        %615 = vmatprep.subr.bf16.mxu0 0
        %616 = vmatpush1.bf16.xpose.msra.mxu0 0
        %617 = vmatprep.subr.bf16.mxu0 0
        %618 = vmatpush1.bf16.xpose.msra.mxu0 0
        %619 = vmatprep.subr.bf16.mxu0 0
        %620 = vmatpush1.bf16.xpose.msra.mxu0 0
        %621 = vmatprep.subr.bf16.mxu0 0
        %622 = vmatpush1.bf16.xpose.msra.mxu0 0
        %623 = vmatprep.subr.bf16.mxu0 0
        %624 = vmatpush1.bf16.xpose.msra.mxu0 0
        %625 = vmatprep.subr.bf16.mxu0 0
        %626 = vmatpush1.bf16.xpose.msra.mxu0 0
        %627 = vmatprep.mubr.bf16.mxu0 0
        %628 = vmatmul.mubr.bf16.gmra.mrb[0].mxu0 %v588
        %v629 = vpop.f32.mrb[0].mxu0
        %v630 = vadd.f32 0.0, %v629
        %v631 = vpop.f32.mrb[0].mxu0
        %v632 = vpop.f32.mrb[0].mxu0
        %v633 = vpop.f32.mrb[0].mxu0
        %634 = vdwg.mxu0
        %v635 = vld [vmem:[#allocation8] sm:$0x1]
        %636 = vmatprep.subr.bf16.mxu0 0
        %637 = vmatpush1.bf16.xpose.msra.mxu0 %v635
        %638 = vmatprep.subr.bf16.mxu0 0
        %639 = vmatpush1.bf16.xpose.msra.mxu0 0
        %640 = vmatprep.subr.bf16.mxu0 0
        %641 = vmatpush1.bf16.xpose.msra.mxu0 0
        %642 = vmatprep.subr.bf16.mxu0 0
        %643 = vmatpush1.bf16.xpose.msra.mxu0 0
        %644 = vmatprep.subr.bf16.mxu0 0
        %645 = vmatpush1.bf16.xpose.msra.mxu0 0
        %646 = vmatprep.subr.bf16.mxu0 0
        %647 = vmatpush1.bf16.xpose.msra.mxu0 0
        %648 = vmatprep.subr.bf16.mxu0 0
        %649 = vmatpush1.bf16.xpose.msra.mxu0 0
        %650 = vmatprep.subr.bf16.mxu0 0
        %651 = vmatpush1.bf16.xpose.msra.mxu0 0
        %652 = vmatprep.subr.bf16.mxu0 0
        %653 = vmatpush1.bf16.xpose.msra.mxu0 0
        %654 = vmatprep.subr.bf16.mxu0 0
        %655 = vmatpush1.bf16.xpose.msra.mxu0 0
        %656 = vmatprep.subr.bf16.mxu0 0
        %657 = vmatpush1.bf16.xpose.msra.mxu0 0
        %658 = vmatprep.subr.bf16.mxu0 0
        %659 = vmatpush1.bf16.xpose.msra.mxu0 0
        %660 = vmatprep.subr.bf16.mxu0 0
        %661 = vmatpush1.bf16.xpose.msra.mxu0 0
        %662 = vmatprep.subr.bf16.mxu0 0
        %663 = vmatpush1.bf16.xpose.msra.mxu0 0
        %664 = vmatprep.subr.bf16.mxu0 0
        %665 = vmatpush1.bf16.xpose.msra.mxu0 0
        %666 = vmatprep.subr.bf16.mxu0 0
        %667 = vmatpush1.bf16.xpose.msra.mxu0 0
        %668 = vmatprep.mubr.bf16.mxu0 0
        %669 = vmatmul.mubr.bf16.gmra.mrb[0].mxu0 %v585
        %v670 = vpop.f32.mrb[0].mxu0
        %v671 = vadd.f32 0.0, %v670
        %v672 = vpop.f32.mrb[0].mxu0
        %v673 = vpop.f32.mrb[0].mxu0
        %v674 = vpop.f32.mrb[0].mxu0
        %675 = vdwg.mxu0
        %677 = vset.pattern.permute.xlu0 0
        %678 = vperm.xlu0 %677, %v671
        %v679 = vpop.permute.xlu0 %678
        %v681 = vlaneseq
        %v682 = vshrl.u32 %v681, 7
        %v683 = vsub.s32 0, %v682
        %v684 = vrot.slane %v630, %v683
        %v685 = vadd.f32 %v679, %v684
        %vm686 = vcmp.gt.f32.partialorder %v685, 0.0
        %v687 = vmul.f32 %v685, 0.2
        %v688 = vsel %vm686, %v685, %v687
        %v689 = vsel %vm587, 65537, 0
        %v690 = vunpack.c.l.b16 %v689
        %vm691 = vcmp.ne.s32.totalorder %v690, 0
        %v692 = vsel %vm691, %v688, -1e+30
        %vm693 = vcmask 130048
        %v694 = vsel %vm693, %v692, -inf
        %695 = vmax.xlane.f32.xlu0 %v694
        %v696 = vpop.xlane.xlu0 %695
        %v697 = vsub.f32 %v692, %v696
        %v698 = vmul.f32 %v697, 1.442695
        %v699 = vpow.pop %v698
        %v700 = vsel %vm691, %v699, 0.0
        %v701 = vsel %vm693, %v700, 0.0
        %702 = vadd.xlane.f32.xlu0 %v701
        %v703 = vpop.xlane.xlu0 %702
        %v704 = vmax.f32 %v703, 1e-30
        %v705 = vpack.c.bf16 %v700, %v700
        %v707 = vsel %vm693, %v705, 0
        %709 = vmatprep.subr.bf16.mxu0 0
        %710 = vmatpush1.bf16.msra.mxu0 %v593
        %711 = vmatprep.subr.bf16.mxu0 0
        %712 = vmatpush1.bf16.msra.mxu0 0
        %713 = vmatprep.subr.bf16.mxu0 0
        %714 = vmatpush1.bf16.msra.mxu0 0
        %715 = vmatprep.subr.bf16.mxu0 0
        %716 = vmatpush1.bf16.msra.mxu0 0
        %717 = vmatprep.subr.bf16.mxu0 0
        %718 = vmatpush1.bf16.msra.mxu0 0
        %719 = vmatprep.subr.bf16.mxu0 0
        %720 = vmatpush1.bf16.msra.mxu0 0
        %721 = vmatprep.subr.bf16.mxu0 0
        %722 = vmatpush1.bf16.msra.mxu0 0
        %723 = vmatprep.subr.bf16.mxu0 0
        %724 = vmatpush1.bf16.msra.mxu0 0
        %725 = vmatprep.subr.bf16.mxu0 0
        %726 = vmatpush1.bf16.msra.mxu0 0
        %727 = vmatprep.subr.bf16.mxu0 0
        %728 = vmatpush1.bf16.msra.mxu0 0
        %729 = vmatprep.subr.bf16.mxu0 0
        %730 = vmatpush1.bf16.msra.mxu0 0
        %731 = vmatprep.subr.bf16.mxu0 0
        %732 = vmatpush1.bf16.msra.mxu0 0
        %733 = vmatprep.subr.bf16.mxu0 0
        %734 = vmatpush1.bf16.msra.mxu0 0
        %735 = vmatprep.subr.bf16.mxu0 0
        %736 = vmatpush1.bf16.msra.mxu0 0
        %737 = vmatprep.subr.bf16.mxu0 0
        %738 = vmatpush1.bf16.msra.mxu0 0
        %739 = vmatprep.subr.bf16.mxu0 0
        %740 = vmatpush1.bf16.msra.mxu0 0
        %741 = vmatprep.mubr.bf16.mxu0 0
        %742 = vmatmul.mubr.bf16.gmra.mrb[0].mxu0 %v707
        %v743 = vpop.f32.mrb[0].mxu0
        %v744 = vadd.f32 0.0, %v743
        %v745 = vpop.f32.mrb[0].mxu0
        %v746 = vpop.f32.mrb[0].mxu0
        %v747 = vpop.f32.mrb[0].mxu0
        %748 = vdwg.mxu0
        %v749 = vrcp.pop %v704
        %v750 = vmul.f32 %v744, %v749
        %v751 = vpack.c.bf16 %v750, %v750
        %752 = vset.pattern.permute.xlu0 1
        %753 = vperm.xlu0 %752, %v671
        %v754 = vpop.permute.xlu0 %753
        %v756 = vlaneseq
        %v757 = vshrl.u32 %v756, 7
        %v758 = vsub.s32 1, %v757
        %v759 = vrot.slane %v630, %v758
        %v760 = vadd.f32 %v754, %v759
        %vm761 = vcmp.gt.f32.partialorder %v760, 0.0
        %v762 = vmul.f32 %v760, 0.2
        %v763 = vsel %vm761, %v760, %v762
        %v764 = vsel %vm691, %v763, -1e+30
        %v765 = vsel %vm693, %v764, -inf
        %766 = vmax.xlane.f32.xlu0 %v765
        %v767 = vpop.xlane.xlu0 %766
        %v768 = vsub.f32 %v764, %v767
        %v769 = vmul.f32 %v768, 1.442695
        %v770 = vpow.pop %v769
        %v771 = vsel %vm691, %v770, 0.0
        %v772 = vsel %vm693, %v771, 0.0
        %773 = vadd.xlane.f32.xlu0 %v772
        %v774 = vpop.xlane.xlu0 %773
        %v775 = vmax.f32 %v774, 1e-30
        %v776 = vpack.c.bf16 %v771, %v771
        %v778 = vsel %vm693, %v776, 0
        %780 = vmatprep.subr.bf16.mxu0 0
        %781 = vmatpush1.bf16.msra.mxu0 %v593
        %782 = vmatprep.subr.bf16.mxu0 0
        %783 = vmatpush1.bf16.msra.mxu0 0
        %784 = vmatprep.subr.bf16.mxu0 0
        %785 = vmatpush1.bf16.msra.mxu0 0
        %786 = vmatprep.subr.bf16.mxu0 0
        %787 = vmatpush1.bf16.msra.mxu0 0
        %788 = vmatprep.subr.bf16.mxu0 0
        %789 = vmatpush1.bf16.msra.mxu0 0
        %790 = vmatprep.subr.bf16.mxu0 0
        %791 = vmatpush1.bf16.msra.mxu0 0
        %792 = vmatprep.subr.bf16.mxu0 0
        %793 = vmatpush1.bf16.msra.mxu0 0
        %794 = vmatprep.subr.bf16.mxu0 0
        %795 = vmatpush1.bf16.msra.mxu0 0
        %796 = vmatprep.subr.bf16.mxu0 0
        %797 = vmatpush1.bf16.msra.mxu0 0
        %798 = vmatprep.subr.bf16.mxu0 0
        %799 = vmatpush1.bf16.msra.mxu0 0
        %800 = vmatprep.subr.bf16.mxu0 0
        %801 = vmatpush1.bf16.msra.mxu0 0
        %802 = vmatprep.subr.bf16.mxu0 0
        %803 = vmatpush1.bf16.msra.mxu0 0
        %804 = vmatprep.subr.bf16.mxu0 0
        %805 = vmatpush1.bf16.msra.mxu0 0
        %806 = vmatprep.subr.bf16.mxu0 0
        %807 = vmatpush1.bf16.msra.mxu0 0
        %808 = vmatprep.subr.bf16.mxu0 0
        %809 = vmatpush1.bf16.msra.mxu0 0
        %810 = vmatprep.subr.bf16.mxu0 0
        %811 = vmatpush1.bf16.msra.mxu0 0
        %812 = vmatprep.mubr.bf16.mxu0 0
        %813 = vmatmul.mubr.bf16.gmra.mrb[0].mxu0 %v778
        %v814 = vpop.f32.mrb[0].mxu0
        %v815 = vadd.f32 0.0, %v814
        %v816 = vpop.f32.mrb[0].mxu0
        %v817 = vpop.f32.mrb[0].mxu0
        %v818 = vpop.f32.mrb[0].mxu0
        %819 = vdwg.mxu0
        %v820 = vrcp.pop %v775
        %v821 = vmul.f32 %v815, %v820
        %v822 = vpack.c.bf16 %v821, %v821
        %v823 = vld [vmem:[#allocation10] sm:$0xf]
        %v824 = vld [vmem:[#allocation10 + $0x4] sm:$0xf]
        %v825 = vld [vmem:[#allocation10 + $0x8] sm:$0xf]
        %v826 = vld [vmem:[#allocation10 + $0xc] sm:$0xf]
        %v827 = vld [vmem:[#allocation10 + $0x10] sm:$0xf]
        %v828 = vld [vmem:[#allocation10 + $0x14] sm:$0xf]
        %v829 = vld [vmem:[#allocation10 + $0x18] sm:$0xf]
        %v830 = vld [vmem:[#allocation10 + $0x1c] sm:$0xf]
        %v831 = vld [vmem:[#allocation10 + $0x20] sm:$0xf]
        %v832 = vld [vmem:[#allocation10 + $0x24] sm:$0xf]
        %v833 = vld [vmem:[#allocation10 + $0x28] sm:$0xf]
        %v834 = vld [vmem:[#allocation10 + $0x2c] sm:$0xf]
        %v835 = vld [vmem:[#allocation10 + $0x30] sm:$0xf]
        %v836 = vld [vmem:[#allocation10 + $0x34] sm:$0xf]
        %v837 = vld [vmem:[#allocation10 + $0x38] sm:$0xf]
        %v838 = vld [vmem:[#allocation10 + $0x3c] sm:$0xf]
        %v839 = vld [vmem:[#allocation10 + $0x40] sm:$0xf]
        %v840 = vld [vmem:[#allocation10 + $0x44] sm:$0xf]
        %v841 = vld [vmem:[#allocation10 + $0x48] sm:$0xf]
        %v842 = vld [vmem:[#allocation10 + $0x4c] sm:$0xf]
        %v843 = vld [vmem:[#allocation10 + $0x50] sm:$0xf]
        %v844 = vld [vmem:[#allocation10 + $0x54] sm:$0xf]
        %v845 = vld [vmem:[#allocation10 + $0x58] sm:$0xf]
        %v846 = vld [vmem:[#allocation10 + $0x5c] sm:$0xf]
        %v847 = vld [vmem:[#allocation10 + $0x60] sm:$0xf]
        %v848 = vld [vmem:[#allocation10 + $0x64] sm:$0xf]
        %v849 = vld [vmem:[#allocation10 + $0x68] sm:$0xf]
        %v850 = vld [vmem:[#allocation10 + $0x6c] sm:$0xf]
        %v851 = vld [vmem:[#allocation10 + $0x70] sm:$0xf]
        %v852 = vld [vmem:[#allocation10 + $0x74] sm:$0xf]
        %v853 = vld [vmem:[#allocation10 + $0x78] sm:$0xf]
        %v854 = vld [vmem:[#allocation10 + $0x7c] sm:$0xf]
        %v887 = vunpack.c.l.b16 %v823
        %v888 = vunpack.c.l.b16 %v824
        %v889 = vunpack.c.l.b16 %v825
        %v890 = vunpack.c.l.b16 %v826
        %v891 = vunpack.c.l.b16 %v827
        %v892 = vunpack.c.l.b16 %v828
        %v893 = vunpack.c.l.b16 %v829
        %v894 = vunpack.c.l.b16 %v830
        %v895 = vunpack.c.l.b16 %v831
        %v896 = vunpack.c.l.b16 %v832
        %v897 = vunpack.c.l.b16 %v833
        %v898 = vunpack.c.l.b16 %v834
        %v899 = vunpack.c.l.b16 %v835
        %v900 = vunpack.c.l.b16 %v836
        %v901 = vunpack.c.l.b16 %v837
        %v902 = vunpack.c.l.b16 %v838
        %v903 = vunpack.c.l.b16 %v839
        %v904 = vunpack.c.l.b16 %v840
        %v905 = vunpack.c.l.b16 %v841
        %v906 = vunpack.c.l.b16 %v842
        %v907 = vunpack.c.l.b16 %v843
        %v908 = vunpack.c.l.b16 %v844
        %v909 = vunpack.c.l.b16 %v845
        %v910 = vunpack.c.l.b16 %v846
        %v911 = vunpack.c.l.b16 %v847
        %v912 = vunpack.c.l.b16 %v848
        %v913 = vunpack.c.l.b16 %v849
        %v914 = vunpack.c.l.b16 %v850
        %v915 = vunpack.c.l.b16 %v851
        %v916 = vunpack.c.l.b16 %v852
        %v917 = vunpack.c.l.b16 %v853
        %v918 = vunpack.c.l.b16 %v854
        %v919 = vpack.c.b16 %v888, %v887
        %v920 = vpack.c.b16 %v890, %v889
        %v921 = vpack.c.b16 %v892, %v891
        %v922 = vpack.c.b16 %v894, %v893
        %v923 = vpack.c.b16 %v896, %v895
        %v924 = vpack.c.b16 %v898, %v897
        %v925 = vpack.c.b16 %v900, %v899
        %v926 = vpack.c.b16 %v902, %v901
        %v927 = vpack.c.b16 %v904, %v903
        %v928 = vpack.c.b16 %v906, %v905
        %v929 = vpack.c.b16 %v908, %v907
        %v930 = vpack.c.b16 %v910, %v909
        %v931 = vpack.c.b16 %v912, %v911
        %v932 = vpack.c.b16 %v914, %v913
        %v933 = vpack.c.b16 %v916, %v915
        %v934 = vpack.c.b16 %v918, %v917
        %951 = vmatprep.subr.bf16.mxu0 0
        %952 = vmatpush1.bf16.msra.mxu0 %v919
        %953 = vmatprep.subr.bf16.mxu0 0
        %954 = vmatpush1.bf16.msra.mxu0 %v920
        %955 = vmatprep.subr.bf16.mxu0 0
        %956 = vmatpush1.bf16.msra.mxu0 %v921
        %957 = vmatprep.subr.bf16.mxu0 0
        %958 = vmatpush1.bf16.msra.mxu0 %v922
        %959 = vmatprep.subr.bf16.mxu0 0
        %960 = vmatpush1.bf16.msra.mxu0 %v923
        %961 = vmatprep.subr.bf16.mxu0 0
        %962 = vmatpush1.bf16.msra.mxu0 %v924
        %963 = vmatprep.subr.bf16.mxu0 0
        %964 = vmatpush1.bf16.msra.mxu0 %v925
        %965 = vmatprep.subr.bf16.mxu0 0
        %966 = vmatpush1.bf16.msra.mxu0 %v926
        %967 = vmatprep.subr.bf16.mxu0 0
        %968 = vmatpush1.bf16.msra.mxu0 %v927
        %969 = vmatprep.subr.bf16.mxu0 0
        %970 = vmatpush1.bf16.msra.mxu0 %v928
        %971 = vmatprep.subr.bf16.mxu0 0
        %972 = vmatpush1.bf16.msra.mxu0 %v929
        %973 = vmatprep.subr.bf16.mxu0 0
        %974 = vmatpush1.bf16.msra.mxu0 %v930
        %975 = vmatprep.subr.bf16.mxu0 0
        %976 = vmatpush1.bf16.msra.mxu0 %v931
        %977 = vmatprep.subr.bf16.mxu0 0
        %978 = vmatpush1.bf16.msra.mxu0 %v932
        %979 = vmatprep.subr.bf16.mxu0 0
        %980 = vmatpush1.bf16.msra.mxu0 %v933
        %981 = vmatprep.subr.bf16.mxu0 0
        %982 = vmatpush1.bf16.msra.mxu0 %v934
        %983 = vmatprep.mubr.bf16.mxu0 %v822
        %984 = vmatmul.mubr.bf16.gmra.mrb[0].mxu0 %v751
        %v985 = vpop.f32.mrb[0].mxu0
        %v986 = vadd.f32 0.0, %v985
        %v987 = vpop.f32.mrb[0].mxu0
        %v988 = vpop.f32.mrb[0].mxu0
        %v989 = vpop.f32.mrb[0].mxu0
        %990 = vdwg.mxu0
        %v991 = vmul.f32 %v986, 0.5
        %v992 = vld [vmem:[#allocation11] sm:$0x1]
        %v994 = vlaneseq
        %v995 = vshrl.u32 %v994, 7
        %v996 = vsub.s32 0, %v995
        %v997 = vrot.slane %v992, %v996
        %v999 = vadd.f32 %v991, %v997
        %v1000 = vpack.c.bf16 %v999, %v999
        %v1001 = vld [vmem:[%s503] sm:$0xff]
        %v1002 = vpack.c.bf16 %v1001, %v1001
        %v1003 = vld [vmem:[#allocation15] sm:$0xff]
        %v1004 = vld [vmem:[#allocation15 + $0x8] sm:$0xff]
        %v1005 = vld [vmem:[#allocation15 + $0x10] sm:$0xff]
        %v1006 = vld [vmem:[#allocation15 + $0x18] sm:$0xff]
        %v1007 = vld [vmem:[#allocation15 + $0x20] sm:$0xff]
        %v1008 = vld [vmem:[#allocation15 + $0x28] sm:$0xff]
        %v1009 = vld [vmem:[#allocation15 + $0x30] sm:$0xff]
        %v1010 = vld [vmem:[#allocation15 + $0x38] sm:$0xff]
        %v1011 = vld [vmem:[#allocation15 + $0x40] sm:$0xff]
        %v1012 = vld [vmem:[#allocation15 + $0x48] sm:$0xff]
        %v1013 = vld [vmem:[#allocation15 + $0x50] sm:$0xff]
        %v1014 = vld [vmem:[#allocation15 + $0x58] sm:$0xff]
        %v1015 = vld [vmem:[#allocation15 + $0x60] sm:$0xff]
        %v1016 = vld [vmem:[#allocation15 + $0x68] sm:$0xff]
        %v1017 = vld [vmem:[#allocation15 + $0x70] sm:$0xff]
        %v1018 = vld [vmem:[#allocation15 + $0x78] sm:$0xff]
        %v1019 = vld [vmem:[#allocation15 + $0x80] sm:$0xff]
        %v1020 = vld [vmem:[#allocation15 + $0x88] sm:$0xff]
        %v1021 = vld [vmem:[#allocation15 + $0x90] sm:$0xff]
        %v1022 = vld [vmem:[#allocation15 + $0x98] sm:$0xff]
        %v1023 = vld [vmem:[#allocation15 + $0xa0] sm:$0xff]
        %v1024 = vld [vmem:[#allocation15 + $0xa8] sm:$0xff]
        %v1025 = vld [vmem:[#allocation15 + $0xb0] sm:$0xff]
        %v1026 = vld [vmem:[#allocation15 + $0xb8] sm:$0xff]
        %v1027 = vld [vmem:[#allocation15 + $0xc0] sm:$0xff]
        %v1028 = vld [vmem:[#allocation15 + $0xc8] sm:$0xff]
        %v1029 = vld [vmem:[#allocation15 + $0xd0] sm:$0xff]
        %v1030 = vld [vmem:[#allocation15 + $0xd8] sm:$0xff]
        %v1031 = vld [vmem:[#allocation15 + $0xe0] sm:$0xff]
        %v1032 = vld [vmem:[#allocation15 + $0xe8] sm:$0xff]
        %v1033 = vld [vmem:[#allocation15 + $0xf0] sm:$0xff]
        %v1034 = vld [vmem:[#allocation15 + $0xf8] sm:$0xff]
        %v1035 = vld [vmem:[#allocation15 + $0x100] sm:$0xff]
        %v1036 = vld [vmem:[#allocation15 + $0x108] sm:$0xff]
        %v1037 = vld [vmem:[#allocation15 + $0x110] sm:$0xff]
        %v1038 = vld [vmem:[#allocation15 + $0x118] sm:$0xff]
        %v1039 = vld [vmem:[#allocation15 + $0x120] sm:$0xff]
        %v1040 = vld [vmem:[#allocation15 + $0x128] sm:$0xff]
        %v1041 = vld [vmem:[#allocation15 + $0x130] sm:$0xff]
        %v1042 = vld [vmem:[#allocation15 + $0x138] sm:$0xff]
        %v1043 = vld [vmem:[#allocation15 + $0x140] sm:$0xff]
        %v1044 = vld [vmem:[#allocation15 + $0x148] sm:$0xff]
        %v1045 = vld [vmem:[#allocation15 + $0x150] sm:$0xff]
        %v1046 = vld [vmem:[#allocation15 + $0x158] sm:$0xff]
        %v1047 = vld [vmem:[#allocation15 + $0x160] sm:$0xff]
        %v1048 = vld [vmem:[#allocation15 + $0x168] sm:$0xff]
        %v1049 = vld [vmem:[#allocation15 + $0x170] sm:$0xff]
        %v1050 = vld [vmem:[#allocation15 + $0x178] sm:$0xff]
        %v1051 = vld [vmem:[#allocation15 + $0x180] sm:$0xff]
        %v1052 = vld [vmem:[#allocation15 + $0x188] sm:$0xff]
        %v1053 = vld [vmem:[#allocation15 + $0x190] sm:$0xff]
        %v1054 = vld [vmem:[#allocation15 + $0x198] sm:$0xff]
        %v1055 = vld [vmem:[#allocation15 + $0x1a0] sm:$0xff]
        %v1056 = vld [vmem:[#allocation15 + $0x1a8] sm:$0xff]
        %v1057 = vld [vmem:[#allocation15 + $0x1b0] sm:$0xff]
        %v1058 = vld [vmem:[#allocation15 + $0x1b8] sm:$0xff]
        %v1059 = vld [vmem:[#allocation15 + $0x1c0] sm:$0xff]
        %v1060 = vld [vmem:[#allocation15 + $0x1c8] sm:$0xff]
        %v1061 = vld [vmem:[#allocation15 + $0x1d0] sm:$0xff]
        %v1062 = vld [vmem:[#allocation15 + $0x1d8] sm:$0xff]
        %v1063 = vld [vmem:[#allocation15 + $0x1e0] sm:$0xff]
        %v1064 = vld [vmem:[#allocation15 + $0x1e8] sm:$0xff]
        %v1065 = vld [vmem:[#allocation15 + $0x1f0] sm:$0xff]
        %v1066 = vld [vmem:[#allocation15 + $0x1f8] sm:$0xff]
        %v1067 = vld [vmem:[#allocation16] sm:$0xf]
        %v1069 = vlaneseq
        %v1070 = vshrl.u32 %v1069, 7
        %v1071 = vsub.s32 0, %v1070
        %v1072 = vrot.slane %v1067, %v1071
        %v1073 = vlaneseq
        %v1074 = vshrl.u32 %v1073, 7
        %v1075 = vsub.s32 1, %v1074
        %v1076 = vrot.slane %v1067, %v1075
        %v1077 = vlaneseq
        %v1078 = vshrl.u32 %v1077, 7
        %v1079 = vsub.s32 2, %v1078
        %v1080 = vrot.slane %v1067, %v1079
        %v1081 = vlaneseq
        %v1082 = vshrl.u32 %v1081, 7
        %v1083 = vsub.s32 3, %v1082
        %v1084 = vrot.slane %v1067, %v1083
        %v1153 = vunpack.c.l.b16 %v1003
        %v1154 = vunpack.c.h.b16 %v1003
        %v1155 = vunpack.c.l.b16 %v1004
        %v1156 = vunpack.c.h.b16 %v1004
        %v1157 = vunpack.c.l.b16 %v1005
        %v1158 = vunpack.c.h.b16 %v1005
        %v1159 = vunpack.c.l.b16 %v1006
        %v1160 = vunpack.c.h.b16 %v1006
        %v1161 = vunpack.c.l.b16 %v1007
        %v1162 = vunpack.c.h.b16 %v1007
        %v1163 = vunpack.c.l.b16 %v1008
        %v1164 = vunpack.c.h.b16 %v1008
        %v1165 = vunpack.c.l.b16 %v1009
        %v1166 = vunpack.c.h.b16 %v1009
        %v1167 = vunpack.c.l.b16 %v1010
        %v1168 = vunpack.c.h.b16 %v1010
        %v1169 = vunpack.c.l.b16 %v1011
        %v1170 = vunpack.c.h.b16 %v1011
        %v1171 = vunpack.c.l.b16 %v1012
        %v1172 = vunpack.c.h.b16 %v1012
        %v1173 = vunpack.c.l.b16 %v1013
        %v1174 = vunpack.c.h.b16 %v1013
        %v1175 = vunpack.c.l.b16 %v1014
        %v1176 = vunpack.c.h.b16 %v1014
        %v1177 = vunpack.c.l.b16 %v1015
        %v1178 = vunpack.c.h.b16 %v1015
        %v1179 = vunpack.c.l.b16 %v1016
        %v1180 = vunpack.c.h.b16 %v1016
        %v1181 = vunpack.c.l.b16 %v1017
        %v1182 = vunpack.c.h.b16 %v1017
        %v1183 = vunpack.c.l.b16 %v1018
        %v1184 = vunpack.c.h.b16 %v1018
        %v1185 = vunpack.c.l.b16 %v1019
        %v1186 = vunpack.c.h.b16 %v1019
        %v1187 = vunpack.c.l.b16 %v1020
        %v1188 = vunpack.c.h.b16 %v1020
        %v1189 = vunpack.c.l.b16 %v1021
        %v1190 = vunpack.c.h.b16 %v1021
        %v1191 = vunpack.c.l.b16 %v1022
        %v1192 = vunpack.c.h.b16 %v1022
        %v1193 = vunpack.c.l.b16 %v1023
        %v1194 = vunpack.c.h.b16 %v1023
        %v1195 = vunpack.c.l.b16 %v1024
        %v1196 = vunpack.c.h.b16 %v1024
        %v1197 = vunpack.c.l.b16 %v1025
        %v1198 = vunpack.c.h.b16 %v1025
        %v1199 = vunpack.c.l.b16 %v1026
        %v1200 = vunpack.c.h.b16 %v1026
        %v1201 = vunpack.c.l.b16 %v1027
        %v1202 = vunpack.c.h.b16 %v1027
        %v1203 = vunpack.c.l.b16 %v1028
        %v1204 = vunpack.c.h.b16 %v1028
        %v1205 = vunpack.c.l.b16 %v1029
        %v1206 = vunpack.c.h.b16 %v1029
        %v1207 = vunpack.c.l.b16 %v1030
        %v1208 = vunpack.c.h.b16 %v1030
        %v1209 = vunpack.c.l.b16 %v1031
        %v1210 = vunpack.c.h.b16 %v1031
        %v1211 = vunpack.c.l.b16 %v1032
        %v1212 = vunpack.c.h.b16 %v1032
        %v1213 = vunpack.c.l.b16 %v1033
        %v1214 = vunpack.c.h.b16 %v1033
        %v1215 = vunpack.c.l.b16 %v1034
        %v1216 = vunpack.c.h.b16 %v1034
        %v1217 = vunpack.c.l.b16 %v1035
        %v1218 = vunpack.c.h.b16 %v1035
        %v1219 = vunpack.c.l.b16 %v1036
        %v1220 = vunpack.c.h.b16 %v1036
        %v1221 = vunpack.c.l.b16 %v1037
        %v1222 = vunpack.c.h.b16 %v1037
        %v1223 = vunpack.c.l.b16 %v1038
        %v1224 = vunpack.c.h.b16 %v1038
        %v1225 = vunpack.c.l.b16 %v1039
        %v1226 = vunpack.c.h.b16 %v1039
        %v1227 = vunpack.c.l.b16 %v1040
        %v1228 = vunpack.c.h.b16 %v1040
        %v1229 = vunpack.c.l.b16 %v1041
        %v1230 = vunpack.c.h.b16 %v1041
        %v1231 = vunpack.c.l.b16 %v1042
        %v1232 = vunpack.c.h.b16 %v1042
        %v1233 = vunpack.c.l.b16 %v1043
        %v1234 = vunpack.c.h.b16 %v1043
        %v1235 = vunpack.c.l.b16 %v1044
        %v1236 = vunpack.c.h.b16 %v1044
        %v1237 = vunpack.c.l.b16 %v1045
        %v1238 = vunpack.c.h.b16 %v1045
        %v1239 = vunpack.c.l.b16 %v1046
        %v1240 = vunpack.c.h.b16 %v1046
        %v1241 = vunpack.c.l.b16 %v1047
        %v1242 = vunpack.c.h.b16 %v1047
        %v1243 = vunpack.c.l.b16 %v1048
        %v1244 = vunpack.c.h.b16 %v1048
        %v1245 = vunpack.c.l.b16 %v1049
        %v1246 = vunpack.c.h.b16 %v1049
        %v1247 = vunpack.c.l.b16 %v1050
        %v1248 = vunpack.c.h.b16 %v1050
        %v1249 = vunpack.c.l.b16 %v1051
        %v1250 = vunpack.c.h.b16 %v1051
        %v1251 = vunpack.c.l.b16 %v1052
        %v1252 = vunpack.c.h.b16 %v1052
        %v1253 = vunpack.c.l.b16 %v1053
        %v1254 = vunpack.c.h.b16 %v1053
        %v1255 = vunpack.c.l.b16 %v1054
        %v1256 = vunpack.c.h.b16 %v1054
        %v1257 = vunpack.c.l.b16 %v1055
        %v1258 = vunpack.c.h.b16 %v1055
        %v1259 = vunpack.c.l.b16 %v1056
        %v1260 = vunpack.c.h.b16 %v1056
        %v1261 = vunpack.c.l.b16 %v1057
        %v1262 = vunpack.c.h.b16 %v1057
        %v1263 = vunpack.c.l.b16 %v1058
        %v1264 = vunpack.c.h.b16 %v1058
        %v1265 = vunpack.c.l.b16 %v1059
        %v1266 = vunpack.c.h.b16 %v1059
        %v1267 = vunpack.c.l.b16 %v1060
        %v1268 = vunpack.c.h.b16 %v1060
        %v1269 = vunpack.c.l.b16 %v1061
        %v1270 = vunpack.c.h.b16 %v1061
        %v1271 = vunpack.c.l.b16 %v1062
        %v1272 = vunpack.c.h.b16 %v1062
        %v1273 = vunpack.c.l.b16 %v1063
        %v1274 = vunpack.c.h.b16 %v1063
        %v1275 = vunpack.c.l.b16 %v1064
        %v1276 = vunpack.c.h.b16 %v1064
        %v1277 = vunpack.c.l.b16 %v1065
        %v1278 = vunpack.c.h.b16 %v1065
        %v1279 = vunpack.c.l.b16 %v1066
        %v1280 = vunpack.c.h.b16 %v1066
        %v1281 = vpack.c.b16 %v1157, %v1153
        %v1282 = vpack.c.b16 %v1158, %v1154
        %v1283 = vpack.c.b16 %v1159, %v1155
        %v1284 = vpack.c.b16 %v1160, %v1156
        %v1285 = vpack.c.b16 %v1165, %v1161
        %v1286 = vpack.c.b16 %v1166, %v1162
        %v1287 = vpack.c.b16 %v1167, %v1163
        %v1288 = vpack.c.b16 %v1168, %v1164
        %v1289 = vpack.c.b16 %v1173, %v1169
        %v1290 = vpack.c.b16 %v1174, %v1170
        %v1291 = vpack.c.b16 %v1175, %v1171
        %v1292 = vpack.c.b16 %v1176, %v1172
        %v1293 = vpack.c.b16 %v1181, %v1177
        %v1294 = vpack.c.b16 %v1182, %v1178
        %v1295 = vpack.c.b16 %v1183, %v1179
        %v1296 = vpack.c.b16 %v1184, %v1180
        %v1297 = vpack.c.b16 %v1189, %v1185
        %v1298 = vpack.c.b16 %v1190, %v1186
        %v1299 = vpack.c.b16 %v1191, %v1187
        %v1300 = vpack.c.b16 %v1192, %v1188
        %v1301 = vpack.c.b16 %v1197, %v1193
        %v1302 = vpack.c.b16 %v1198, %v1194
        %v1303 = vpack.c.b16 %v1199, %v1195
        %v1304 = vpack.c.b16 %v1200, %v1196
        %v1305 = vpack.c.b16 %v1205, %v1201
        %v1306 = vpack.c.b16 %v1206, %v1202
        %v1307 = vpack.c.b16 %v1207, %v1203
        %v1308 = vpack.c.b16 %v1208, %v1204
        %v1309 = vpack.c.b16 %v1213, %v1209
        %v1310 = vpack.c.b16 %v1214, %v1210
        %v1311 = vpack.c.b16 %v1215, %v1211
        %v1312 = vpack.c.b16 %v1216, %v1212
        %v1313 = vpack.c.b16 %v1221, %v1217
        %v1314 = vpack.c.b16 %v1222, %v1218
        %v1315 = vpack.c.b16 %v1223, %v1219
        %v1316 = vpack.c.b16 %v1224, %v1220
        %v1317 = vpack.c.b16 %v1229, %v1225
        %v1318 = vpack.c.b16 %v1230, %v1226
        %v1319 = vpack.c.b16 %v1231, %v1227
        %v1320 = vpack.c.b16 %v1232, %v1228
        %v1321 = vpack.c.b16 %v1237, %v1233
        %v1322 = vpack.c.b16 %v1238, %v1234
        %v1323 = vpack.c.b16 %v1239, %v1235
        %v1324 = vpack.c.b16 %v1240, %v1236
        %v1325 = vpack.c.b16 %v1245, %v1241
        %v1326 = vpack.c.b16 %v1246, %v1242
        %v1327 = vpack.c.b16 %v1247, %v1243
        %v1328 = vpack.c.b16 %v1248, %v1244
        %v1329 = vpack.c.b16 %v1253, %v1249
        %v1330 = vpack.c.b16 %v1254, %v1250
        %v1331 = vpack.c.b16 %v1255, %v1251
        %v1332 = vpack.c.b16 %v1256, %v1252
        %v1333 = vpack.c.b16 %v1261, %v1257
        %v1334 = vpack.c.b16 %v1262, %v1258
        %v1335 = vpack.c.b16 %v1263, %v1259
        %v1336 = vpack.c.b16 %v1264, %v1260
        %v1337 = vpack.c.b16 %v1269, %v1265
        %v1338 = vpack.c.b16 %v1270, %v1266
        %v1339 = vpack.c.b16 %v1271, %v1267
        %v1340 = vpack.c.b16 %v1272, %v1268
        %v1341 = vpack.c.b16 %v1277, %v1273
        %v1342 = vpack.c.b16 %v1278, %v1274
        %v1343 = vpack.c.b16 %v1279, %v1275
        %v1344 = vpack.c.b16 %v1280, %v1276
        %1409 = vmatprep.subr.bf16.mxu0 %v1282
        %1410 = vmatpush1.bf16.msra.mxu0 %v1281
        %1411 = vmatprep.subr.bf16.mxu0 %v1286
        %1412 = vmatpush1.bf16.msra.mxu0 %v1285
        %1413 = vmatprep.subr.bf16.mxu0 %v1290
        %1414 = vmatpush1.bf16.msra.mxu0 %v1289
        %1415 = vmatprep.subr.bf16.mxu0 %v1294
        %1416 = vmatpush1.bf16.msra.mxu0 %v1293
        %1417 = vmatprep.subr.bf16.mxu0 %v1298
        %1418 = vmatpush1.bf16.msra.mxu0 %v1297
        %1419 = vmatprep.subr.bf16.mxu0 %v1302
        %1420 = vmatpush1.bf16.msra.mxu0 %v1301
        %1421 = vmatprep.subr.bf16.mxu0 %v1306
        %1422 = vmatpush1.bf16.msra.mxu0 %v1305
        %1423 = vmatprep.subr.bf16.mxu0 %v1310
        %1424 = vmatpush1.bf16.msra.mxu0 %v1309
        %1425 = vmatprep.subr.bf16.mxu0 %v1314
        %1426 = vmatpush1.bf16.msra.mxu0 %v1313
        %1427 = vmatprep.subr.bf16.mxu0 %v1318
        %1428 = vmatpush1.bf16.msra.mxu0 %v1317
        %1429 = vmatprep.subr.bf16.mxu0 %v1322
        %1430 = vmatpush1.bf16.msra.mxu0 %v1321
        %1431 = vmatprep.subr.bf16.mxu0 %v1326
        %1432 = vmatpush1.bf16.msra.mxu0 %v1325
        %1433 = vmatprep.subr.bf16.mxu0 %v1330
        %1434 = vmatpush1.bf16.msra.mxu0 %v1329
        %1435 = vmatprep.subr.bf16.mxu0 %v1334
        %1436 = vmatpush1.bf16.msra.mxu0 %v1333
        %1437 = vmatprep.subr.bf16.mxu0 %v1338
        %1438 = vmatpush1.bf16.msra.mxu0 %v1337
        %1439 = vmatprep.subr.bf16.mxu0 %v1342
        %1440 = vmatpush1.bf16.msra.mxu0 %v1341
        %1441 = vmatprep.mubr.bf16.mxu0 %v1002
        %1442 = vmatmul.mubr.bf16.gmra.mrb[0].mxu0 %v1000
        %v1443 = vpop.f32.mrb[0].mxu0
        %v1444 = vadd.f32 %v1072, %v1443
        %v1445 = vpop.f32.mrb[0].mxu0
        %v1446 = vadd.f32 %v1076, %v1445
        %v1447 = vpop.f32.mrb[0].mxu0
        %v1448 = vpop.f32.mrb[0].mxu0
        %1449 = vdwg.mxu0
        %1450 = vmatprep.subr.bf16.mxu0 %v1284
        %1451 = vmatpush1.bf16.msra.mxu0 %v1283
        %1452 = vmatprep.subr.bf16.mxu0 %v1288
        %1453 = vmatpush1.bf16.msra.mxu0 %v1287
        %1454 = vmatprep.subr.bf16.mxu0 %v1292
        %1455 = vmatpush1.bf16.msra.mxu0 %v1291
        %1456 = vmatprep.subr.bf16.mxu0 %v1296
        %1457 = vmatpush1.bf16.msra.mxu0 %v1295
        %1458 = vmatprep.subr.bf16.mxu0 %v1300
        %1459 = vmatpush1.bf16.msra.mxu0 %v1299
        %1460 = vmatprep.subr.bf16.mxu0 %v1304
        %1461 = vmatpush1.bf16.msra.mxu0 %v1303
        %1462 = vmatprep.subr.bf16.mxu0 %v1308
        %1463 = vmatpush1.bf16.msra.mxu0 %v1307
        %1464 = vmatprep.subr.bf16.mxu0 %v1312
        %1465 = vmatpush1.bf16.msra.mxu0 %v1311
        %1466 = vmatprep.subr.bf16.mxu0 %v1316
        %1467 = vmatpush1.bf16.msra.mxu0 %v1315
        %1468 = vmatprep.subr.bf16.mxu0 %v1320
        %1469 = vmatpush1.bf16.msra.mxu0 %v1319
        %1470 = vmatprep.subr.bf16.mxu0 %v1324
        %1471 = vmatpush1.bf16.msra.mxu0 %v1323
        %1472 = vmatprep.subr.bf16.mxu0 %v1328
        %1473 = vmatpush1.bf16.msra.mxu0 %v1327
        %1474 = vmatprep.subr.bf16.mxu0 %v1332
        %1475 = vmatpush1.bf16.msra.mxu0 %v1331
        %1476 = vmatprep.subr.bf16.mxu0 %v1336
        %1477 = vmatpush1.bf16.msra.mxu0 %v1335
        %1478 = vmatprep.subr.bf16.mxu0 %v1340
        %1479 = vmatpush1.bf16.msra.mxu0 %v1339
        %1480 = vmatprep.subr.bf16.mxu0 %v1344
        %1481 = vmatpush1.bf16.msra.mxu0 %v1343
        %1482 = vmatprep.mubr.bf16.mxu0 %v1002
        %1483 = vmatmul.mubr.bf16.gmra.mrb[0].mxu0 %v1000
        %v1484 = vpop.f32.mrb[0].mxu0
        %v1485 = vadd.f32 %v1080, %v1484
        %v1486 = vpop.f32.mrb[0].mxu0
        %v1487 = vadd.f32 %v1084, %v1486
        %v1488 = vpop.f32.mrb[0].mxu0
        %v1489 = vpop.f32.mrb[0].mxu0
        %1490 = vdwg.mxu0
        %v1491 = vxor.u32 %v1444, 2147483648
        %v1492 = vmul.f32 %v1491, 1.442695
        %v1493 = vpow.pop %v1492
        %v1494 = vadd.f32 %v1493, 1.0
        %v1495 = vrcp.pop %v1494
        %v1496 = vmul.f32 1.0, %v1495
        %v1497 = vxor.u32 %v1446, 2147483648
        %v1498 = vmul.f32 %v1497, 1.442695
        %v1499 = vpow.pop %v1498
        %v1500 = vadd.f32 %v1499, 1.0
        %v1501 = vrcp.pop %v1500
        %v1502 = vmul.f32 1.0, %v1501
        %v1503 = vtanh.pop %v1485
        %v1504 = vxor.u32 %v1487, 2147483648
        %v1505 = vmul.f32 %v1504, 1.442695
        %v1506 = vpow.pop %v1505
        %v1507 = vadd.f32 %v1506, 1.0
        %v1508 = vrcp.pop %v1507
        %v1509 = vmul.f32 1.0, %v1508
        %v1510 = vld [vmem:[%s512] sm:$0xff]
        %v1511 = vmul.f32 %v1502, %v1510
        %v1512 = vmul.f32 %v1496, %v1503
        %v1513 = vadd.f32 %v1511, %v1512
        %1514 = vst [vmem:[%s573] sm:$0xff] %v1513
        %v1515 = vtanh.pop %v1513
        %v1516 = vmul.f32 %v1509, %v1515
        %1517 = vst [vmem:[%s566] sm:$0xff] %v1516
        %s1518 = sand.u32 %s268, 1
        %s1519 = scalar_lea.sflag [#allocation4], %s1518
        %s1520 = sand.u32 %s268, 1
        %s1521 = smul.addr %s1520, 8
        %s1522 = scalar_lea.vmem [#allocation17], %s1521
        %s1523 = sand.u32 %s294, 1
        %s1524 = scalar_lea.sflag [#allocation19], %s1523
        %s1525 = sand.u32 %s294, 1
        %s1526 = smul.addr %s1525, 8
        %s1527 = scalar_lea.vmem [#allocation18], %s1526
        // Predicated region
        $region101: #{geniepath_forward.8} parent=59 // pred_check
          %p1528 = pneg %p278
        $region102: #{geniepath_forward.8} parent=59 // pred_check_branch
          %1530 = sbr.rel (%p1528) target = $region104
        $region103: #{geniepath_forward.8} parent=59 // pred_region
          %s1532 = ssub.s32 128, 128
          %1533 = vsyncadd %s1519, %s1532
          %s1534 = smul.addr %s35, 128
          %s1535 = scalar_lea.hbm %s10, %s1534
          %s1537 = sshll.u32 %s1522, 4
          %s1538 = int_to_ptr.vmem [resolvable:$true] %s1537
          %1540 = dma.vmem_to_hbm [thread:$0]  %s1538, 128, %s1535, %s1519
        $region104: #{geniepath_forward.8} parent=59 // pred_fallthru
          _
        // Predicated region
        $region105: #{geniepath_forward.8} parent=59 // pred_check
          %p1541 = pneg %p304
        $region106: #{geniepath_forward.8} parent=59 // pred_check_branch
          %1543 = sbr.rel (%p1541) target = $region108
        $region107: #{geniepath_forward.8} parent=59 // pred_region
          %s1545 = ssub.s32 128, 128
          %1546 = vsyncadd %s1524, %s1545
          %s1547 = smul.addr %s35, 128
          %s1548 = scalar_lea.hbm %s11, %s1547
          %s1550 = sshll.u32 %s1527, 4
          %s1551 = int_to_ptr.vmem [resolvable:$true] %s1550
          %1553 = dma.vmem_to_hbm [thread:$0]  %s1551, 128, %s1548, %s1524
        $region108: #{geniepath_forward.8} parent=59 // pred_fallthru
          _
      $region60: #{geniepath_forward.8} parent=5 // pred_fallthru
        _
      %p1554 = scmp.le.s32.totalorder 2, %s30
      // Predicated region
      $region109: #{geniepath_forward.8} parent=5 // pred_check
        %p1555 = pneg %p1554
      $region110: #{geniepath_forward.8} parent=5 // pred_check_branch
        %1557 = sbr.rel (%p1555) target = $region112
      $region111: #{geniepath_forward.8} parent=5 // pred_region
        %s1558 = ssub.s32 %s30, 2
        // Predicated region
        $region113: #{geniepath_forward.8} parent=111 // pred_check
          %p1559 = pneg %p284
        $region114: #{geniepath_forward.8} parent=111 // pred_check_branch
          %1561 = sbr.rel (%p1559) target = $region116
        $region115: #{geniepath_forward.8} parent=111 // pred_region
          %s1562 = sand.u32 %s269, 1
          %s1563 = scalar_lea.sflag [#allocation4], %s1562
          %s1564 = sand.u32 %s269, 1
          %s1565 = smul.addr %s1564, 8
          %s1566 = scalar_lea.vmem [#allocation17], %s1565
          %1567 = dma.done %s1563, 128
        $region116: #{geniepath_forward.8} parent=111 // pred_fallthru
          _
        // Predicated region
        $region117: #{geniepath_forward.8} parent=111 // pred_check
          %p1568 = pneg %p310
        $region118: #{geniepath_forward.8} parent=111 // pred_check_branch
          %1570 = sbr.rel (%p1568) target = $region120
        $region119: #{geniepath_forward.8} parent=111 // pred_region
          %s1571 = sand.u32 %s295, 1
          %s1572 = scalar_lea.sflag [#allocation19], %s1571
          %s1573 = sand.u32 %s295, 1
          %s1574 = smul.addr %s1573, 8
          %s1575 = scalar_lea.vmem [#allocation18], %s1574
          %1576 = dma.done %s1572, 128
        $region120: #{geniepath_forward.8} parent=111 // pred_fallthru
          _
      $region112: #{geniepath_forward.8} parent=5 // pred_fallthru
        _
    $region6: #{geniepath_forward.8} parent=1 // loop_footer
      %s34 = sadd.s32 1, %s30
    $region7: #{geniepath_forward.8} parent=1 // loop_footer_branch
      %29 = sbr.rel target = $region3
    $region8: #{geniepath_forward.8} parent=1 // loop_exit
      _
    %1577 = vsyncpa [#allocation3], 1
    %s1578 = scalar_lea.sflag [#allocation3], 1
    %1579 = vsyncpa %s1578, 1
    %1580 = vsyncpa [#allocation6], 1
    %s1581 = scalar_lea.sflag [#allocation6], 1
    %1582 = vsyncpa %s1581, 1
    %1583 = vsyncpa [#allocation9], 1
    %1584 = vsyncpa [#allocation12], 1
    %1585 = vsyncpa [#allocation4], 1
    %s1586 = scalar_lea.sflag [#allocation4], 1
    %1587 = vsyncpa %s1586, 1
    %1588 = vsyncpa [#allocation19], 1
    %s1589 = scalar_lea.sflag [#allocation19], 1
    %1590 = vsyncpa %s1589, 1

</llo_original>
